<compile_context>
chip_gen: v7x
topology: tpu7x:2x2x1
jax: 0.10.0
libtpu: 0.0.40
codegen_flags: <defaults>
</compile_context>

<pallas_src>
import jax
import jax.numpy as jnp
from jax.experimental import pallas as pl
from jax.experimental.pallas import tpu as pltpu


def resnet_block_kernel(xq_ref, w1_ref, s1_ref, b1_ref,
                        w2_ref, s2_ref, b2_ref, out_ref):
    _, H, W, C = out_ref.shape
    Wp = xq_ref.shape[2]          # padded width (multiple of 8, >= W + 3)
    M = H * Wp                    # flattened spatial rows of a conv output

    def shift_rows_up(a, k):
        # result[m] = a[m + k]; the k wrapped rows land only in padding
        # columns (u >= Wp - 2 >= W + 1) which are masked / never extracted.
        return jnp.concatenate([a[k:], a[:k]], axis=0)

    def conv3x3(src_flat, w_ref):
        # src_flat: ((H+2)*Wp, C) f32, spatially flattened, zero padded.
        # Returns (M, C) f32 where row h*Wp + u holds the conv output whose
        # 3x3 taps are src rows h..h+2, columns u..u+2.
        t = jnp.concatenate(
            [src_flat[0:M].astype(jnp.bfloat16),                 # dy = 0
             src_flat[Wp:Wp + M].astype(jnp.bfloat16),           # dy = 1
             src_flat[2 * Wp:2 * Wp + M].astype(jnp.bfloat16)],  # dy = 2
            axis=-1)                                             # (M, 3C) bf16
        r = jnp.dot(t, w_ref[...],                               # K = N = 3C
                    preferred_element_type=jnp.float32)          # (M, 3C) f32
        return (r[:, 0:C]
                + shift_rows_up(r[:, C:2 * C], 1)
                + shift_rows_up(r[:, 2 * C:3 * C], 2))

    xq = xq_ref[0]                            # (H+2, Wp, C) f32: x occupies
    xq_flat = xq.reshape((H + 2) * Wp, C)     # rows [1, H+1), cols [2, W+2)

    # ---- conv1 + bn1 (folded) + relu ----
    a1 = conv3x3(xq_flat, w1_ref)             # valid outputs at cols [1, W+1)
    h1 = jnp.maximum(a1 * s1_ref[...] + b1_ref[...], 0.0)

    # Zero everything outside columns [1, W+1): this *is* conv2's left/right
    # zero border, so no padded scratch / memset / halo store is needed.
    col = jax.lax.broadcasted_iota(jnp.int32, (H, Wp, C), 1)
    keep = jnp.logical_and(col >= 1, col <= W)
    h1 = jnp.where(keep, h1.reshape(H, Wp, C), 0.0).reshape(M, C)

    # ---- conv2 + bn2 (folded) ----
    zrow = jnp.zeros((Wp, C), jnp.float32)                 # top/bottom border
    h1q = jnp.concatenate([zrow, h1, zrow], axis=0)        # aligned row concat
    a2 = conv3x3(h1q, w2_ref)                 # valid outputs at cols [0, W)
    y = a2.reshape(H, Wp, C)[:, 0:W, :] * s2_ref[...] + b2_ref[...]

    # ---- residual add (exact f32, from the single x input) + relu ----
    ident = xq[1:H + 1, 2:W + 2, :]
    out_ref[...] = jnp.maximum(y + ident, 0.0).reshape(1, H, W, C)


def _round_up(n, m):
    return ((n + m - 1) // m) * m


def resnet_block_forward(x, params, eps=1e-5):
    """x: [B, Cin, H, W] float32 (NCHW).  Identity-shortcut ResnetBlock
    (stride=1, in_planes == planes).  Returns [B, planes, H, W] float32."""
    w1, g1, be1, m1, v1, w2, g2, be2, m2, v2 = params
    planes, in_planes = w1.shape[0], w1.shape[1]
    assert in_planes == planes, "only the identity-shortcut case is implemented"
    B, Cin, H, W = x.shape
    assert Cin == in_planes

    C = _round_up(planes, 128)          # lane-dense channels
    Wp = _round_up(W + 3, 8)            # padded width: left pad 2, right >= 1

    # NCHW -> NHWC, pad channels, pad spatially (rows 1/1, cols 2/Wp-W-2).
    x_nhwc = jnp.transpose(x, (0, 2, 3, 1)).astype(jnp.float32)
    x_c = jnp.pad(x_nhwc, ((0, 0), (0, 0), (0, 0), (0, C - Cin)))
    xq = jnp.pad(x_c, ((0, 0), (1, 1), (2, Wp - W - 2), (0, 0)))

    def prep_w(w):
        # torch (Cout, Cin, 3, 3) -> (3C, 3C): rows = (dy, cin), cols = (dx, cout)
        wt = jnp.transpose(w, (2, 1, 3, 0))                  # (dy, ci, dx, co)
        wt = jnp.pad(wt, ((0, 0), (0, C - in_planes), (0, 0), (0, C - planes)))
        return wt.reshape(3 * C, 3 * C).astype(jnp.bfloat16)

    def prep_bn(gamma, beta, mean, var):     # fold eval-mode BN into scale/bias
        scale = gamma / jnp.sqrt(var + eps)
        bias = beta - mean * scale
        scale = jnp.pad(scale, (0, C - planes)).reshape(1, C).astype(jnp.float32)
        bias = jnp.pad(bias, (0, C - planes)).reshape(1, C).astype(jnp.float32)
        return scale, bias

    w1c, w2c = prep_w(w1), prep_w(w2)
    s1, b1 = prep_bn(g1, be1, m1, v1)
    s2, b2 = prep_bn(g2, be2, m2, v2)

    # Cost / VMEM accounting.
    flops = 2 * 2 * B * (H * Wp) * (3 * C) * (3 * C)         # two fused convs
    bytes_accessed = int(xq.size * 4 + (w1c.size + w2c.size) * 2
                         + (s1.size + b1.size + s2.size + b2.size) * 4
                         + B * H * W * C * 4)
    block_bytes = 2 * ((H + 2) * Wp * C * 4 + H * W * C * 4)  # dbl-buffered io
    block_bytes += 2 * 2 * (3 * C) * (3 * C) * 2              # dbl-buffered weights
    temp_bytes = 14 * H * Wp * C * 4                          # in-kernel temporaries
    vmem_limit = int(min(48 * 2 ** 20,
                         max(32 * 2 ** 20, 2 * (block_bytes + temp_bytes))))

    out = pl.pallas_call(
        resnet_block_kernel,
        out_shape=jax.ShapeDtypeStruct((B, H, W, C), jnp.float32),
        grid=(B,),
        in_specs=[
            pl.BlockSpec((1, H + 2, Wp, C), lambda b: (b, 0, 0, 0)),
            pl.BlockSpec((3 * C, 3 * C), lambda b: (0, 0)),   # constant-index,
            pl.BlockSpec((1, C), lambda b: (0, 0)),           # stays VMEM-resident
            pl.BlockSpec((1, C), lambda b: (0, 0)),
            pl.BlockSpec((3 * C, 3 * C), lambda b: (0, 0)),
            pl.BlockSpec((1, C), lambda b: (0, 0)),
            pl.BlockSpec((1, C), lambda b: (0, 0)),
        ],
        out_specs=pl.BlockSpec((1, H, W, C), lambda b: (b, 0, 0, 0)),
        compiler_params=pltpu.CompilerParams(
            dimension_semantics=("parallel",),
            vmem_limit_bytes=vmem_limit),
        cost_estimate=pl.CostEstimate(flops=flops, transcendentals=0,
                                      bytes_accessed=bytes_accessed),
    )(xq, w1c, s1, b1, w2c, s2, b2)

    # Drop channel padding, back to NCHW.
    return jnp.transpose(out[..., :planes], (0, 3, 1, 2))


if __name__ == "__main__":
    key = jax.random.PRNGKey(0)
    ks = jax.random.split(key, 11)

    B, Cin, H, W = 2, 4, 16, 16
    planes = 4   # in_planes == planes, stride=1 -> identity shortcut

    bound1 = 1.0 / (Cin * 9) ** 0.5
    w1 = jax.random.uniform(ks[0], (planes, Cin, 3, 3), jnp.float32, -bound1, bound1)
    bound2 = 1.0 / (planes * 9) ** 0.5
    w2 = jax.random.uniform(ks[1], (planes, planes, 3, 3), jnp.float32, -bound2, bound2)
    g1 = jax.random.uniform(ks[2], (planes,), jnp.float32, 0.5, 1.5)
    be1 = 0.1 * jax.random.normal(ks[3], (planes,), jnp.float32)
    m1 = 0.1 * jax.random.normal(ks[4], (planes,), jnp.float32)
    v1 = jax.random.uniform(ks[5], (planes,), jnp.float32, 0.5, 1.5)
    g2 = jax.random.uniform(ks[6], (planes,), jnp.float32, 0.5, 1.5)
    be2 = 0.1 * jax.random.normal(ks[7], (planes,), jnp.float32)
    m2 = 0.1 * jax.random.normal(ks[8], (planes,), jnp.float32)
    v2 = jax.random.uniform(ks[9], (planes,), jnp.float32, 0.5, 1.5)
    params = (w1, g1, be1, m1, v1, w2, g2, be2, m2, v2)

    x = jax.random.normal(ks[10], (B, Cin, H, W), jnp.float32)

    y = resnet_block_forward(x, params)
    jax.block_until_ready(y)

    # Pure-JAX reference (eval-mode BN), mirroring the kernel's bf16 cast of
    # conv inputs/weights (f32 accumulation), so only op-ordering differs.
    def ref_forward(x, params, eps=1e-5):
        w1, g1, be1, m1, v1, w2, g2, be2, m2, v2 = params
        bf = lambda a: a.astype(jnp.bfloat16).astype(jnp.float32)

        def conv(z, w):
            return jax.lax.conv_general_dilated(
                bf(z), bf(jnp.transpose(w, (2, 3, 1, 0))),
                window_strides=(1, 1), padding="SAME",
                dimension_numbers=("NHWC", "HWIO", "NHWC"),
                preferred_element_type=jnp.float32)

        def bn(z, g, b, m, v):
            return (z - m) / jnp.sqrt(v + eps) * g + b

        xh = jnp.transpose(x, (0, 2, 3, 1))
        h = jnp.maximum(bn(conv(xh, w1), g1, be1, m1, v1), 0.0)
        h = bn(conv(h, w2), g2, be2, m2, v2)
        out = jnp.maximum(h + xh, 0.0)
        return jnp.transpose(out, (0, 3, 1, 2))

    y_ref = ref_forward(x, params)
    assert y.shape == (B, planes, H, W)
    max_err = float(jnp.max(jnp.abs(y - y_ref)))
    assert jnp.allclose(y, y_ref, atol=2e-2, rtol=2e-2), max_err

    print("KERNEL_OK")
</pallas_src>

<mosaic_0001>
module attributes {stable_mosaic.version = 11 : i64} {
  func.func @resnet_block_kernel(%arg0: i32, %arg1: memref<1x18x24x128xf32, #tpu.memory_space<vmem>>, %arg2: memref<384x384xbf16, #tpu.memory_space<vmem>>, %arg3: memref<1x128xf32, #tpu.memory_space<vmem>>, %arg4: memref<1x128xf32, #tpu.memory_space<vmem>>, %arg5: memref<384x384xbf16, #tpu.memory_space<vmem>>, %arg6: memref<1x128xf32, #tpu.memory_space<vmem>>, %arg7: memref<1x128xf32, #tpu.memory_space<vmem>>, %arg8: memref<1x16x16x128xf32, #tpu.memory_space<vmem>>) attributes {dimension_semantics = [#tpu.dimension_semantics<parallel>], iteration_bounds = array<i64: 2>, scalar_prefetch = 0 : i64, scratch_operands = 0 : i64, tpu.core_type = #tpu.core_type<tc>, window_params = [{transform_indices = @transform_0, window_bounds = array<i64: 1, 18, 24, 128>}, {pipeline_mode = #tpu.pipeline_mode<synchronous>, transform_indices = @transform_1, window_bounds = array<i64: 384, 384>}, {pipeline_mode = #tpu.pipeline_mode<synchronous>, transform_indices = @transform_2, window_bounds = array<i64: 1, 128>}, {pipeline_mode = #tpu.pipeline_mode<synchronous>, transform_indices = @transform_3, window_bounds = array<i64: 1, 128>}, {pipeline_mode = #tpu.pipeline_mode<synchronous>, transform_indices = @transform_4, window_bounds = array<i64: 384, 384>}, {pipeline_mode = #tpu.pipeline_mode<synchronous>, transform_indices = @transform_5, window_bounds = array<i64: 1, 128>}, {pipeline_mode = #tpu.pipeline_mode<synchronous>, transform_indices = @transform_6, window_bounds = array<i64: 1, 128>}, {transform_indices = @transform_7, window_bounds = array<i64: 1, 16, 16, 128>}]} {
    %c0 = arith.constant 0 : index
    %c0_0 = arith.constant 0 : index
    %c0_1 = arith.constant 0 : index
    %c0_2 = arith.constant 0 : index
    %0 = vector.load %arg1[%c0, %c0_0, %c0_1, %c0_2] : memref<1x18x24x128xf32, #tpu.memory_space<vmem>>, vector<1x18x24x128xf32>
    %1 = vector.shape_cast %0 : vector<1x18x24x128xf32> to vector<18x24x128xf32>
    %2 = vector.shape_cast %1 : vector<18x24x128xf32> to vector<432x128xf32>
    %3 = vector.extract_strided_slice %2 {offsets = [0, 0], sizes = [384, 128], strides = [1, 1]} : vector<432x128xf32> to vector<384x128xf32>
    %4 = arith.truncf %3 : vector<384x128xf32> to vector<384x128xbf16>
    %5 = vector.extract_strided_slice %2 {offsets = [24, 0], sizes = [384, 128], strides = [1, 1]} : vector<432x128xf32> to vector<384x128xf32>
    %6 = arith.truncf %5 : vector<384x128xf32> to vector<384x128xbf16>
    %7 = vector.extract_strided_slice %2 {offsets = [48, 0], sizes = [384, 128], strides = [1, 1]} : vector<432x128xf32> to vector<384x128xf32>
    %8 = arith.truncf %7 : vector<384x128xf32> to vector<384x128xbf16>
    %9 = tpu.concatenate %4, %6, %8 in 1 : vector<384x128xbf16>, vector<384x128xbf16>, vector<384x128xbf16> -> vector<384x384xbf16>
    %c0_3 = arith.constant 0 : index
    %c0_4 = arith.constant 0 : index
    %10 = vector.load %arg2[%c0_3, %c0_4] : memref<384x384xbf16, #tpu.memory_space<vmem>>, vector<384x384xbf16>
    %cst = arith.constant dense<0.000000e+00> : vector<384x384xf32>
    %11 = tpu.matmul %9, %10, %cst {dimension_numbers = #tpu.dot_dimension_numbers<[1], [0], [0], [1], [0, 0, 1, 1], [], []>} : vector<384x384xbf16>, vector<384x384xbf16>, vector<384x384xf32> -> vector<384x384xf32>
    %12 = vector.extract_strided_slice %11 {offsets = [0, 0], sizes = [384, 128], strides = [1, 1]} : vector<384x384xf32> to vector<384x128xf32>
    %13 = vector.extract_strided_slice %11 {offsets = [0, 128], sizes = [384, 128], strides = [1, 1]} : vector<384x384xf32> to vector<384x128xf32>
    %14 = vector.extract_strided_slice %13 {offsets = [1, 0], sizes = [383, 128], strides = [1, 1]} : vector<384x128xf32> to vector<383x128xf32>
    %15 = vector.extract_strided_slice %13 {offsets = [0, 0], sizes = [1, 128], strides = [1, 1]} : vector<384x128xf32> to vector<1x128xf32>
    %16 = tpu.concatenate %14, %15 in 0 : vector<383x128xf32>, vector<1x128xf32> -> vector<384x128xf32>
    %17 = arith.addf %12, %16 : vector<384x128xf32>
    %18 = vector.extract_strided_slice %11 {offsets = [0, 256], sizes = [384, 128], strides = [1, 1]} : vector<384x384xf32> to vector<384x128xf32>
    %19 = vector.extract_strided_slice %18 {offsets = [2, 0], sizes = [382, 128], strides = [1, 1]} : vector<384x128xf32> to vector<382x128xf32>
    %20 = vector.extract_strided_slice %18 {offsets = [0, 0], sizes = [2, 128], strides = [1, 1]} : vector<384x128xf32> to vector<2x128xf32>
    %21 = tpu.concatenate %19, %20 in 0 : vector<382x128xf32>, vector<2x128xf32> -> vector<384x128xf32>
    %22 = arith.addf %17, %21 : vector<384x128xf32>
    %c0_5 = arith.constant 0 : index
    %c0_6 = arith.constant 0 : index
    %23 = vector.load %arg3[%c0_5, %c0_6] : memref<1x128xf32, #tpu.memory_space<vmem>>, vector<1x128xf32>
    %24 = vector.broadcast %23 : vector<1x128xf32> to vector<384x128xf32>
    %25 = arith.mulf %22, %24 : vector<384x128xf32>
    %c0_7 = arith.constant 0 : index
    %c0_8 = arith.constant 0 : index
    %26 = vector.load %arg4[%c0_7, %c0_8] : memref<1x128xf32, #tpu.memory_space<vmem>>, vector<1x128xf32>
    %27 = vector.broadcast %26 : vector<1x128xf32> to vector<384x128xf32>
    %28 = arith.addf %25, %27 : vector<384x128xf32>
    %cst_9 = arith.constant 0.000000e+00 : f32
    %29 = vector.broadcast %cst_9 : f32 to vector<384x128xf32>
    %30 = arith.maximumf %28, %29 : vector<384x128xf32>
    %31 = tpu.iota {dimensions = array<i32: 1>} : vector<16x24x128xi32>
    %c1_i32 = arith.constant 1 : i32
    %32 = vector.broadcast %c1_i32 : i32 to vector<16x24x128xi32>
    %33 = arith.cmpi sge, %31, %32 : vector<16x24x128xi32>
    %c16_i32 = arith.constant 16 : i32
    %34 = vector.broadcast %c16_i32 : i32 to vector<16x24x128xi32>
    %35 = arith.cmpi sle, %31, %34 : vector<16x24x128xi32>
    %36 = arith.andi %33, %35 : vector<16x24x128xi1>
    %37 = vector.shape_cast %30 : vector<384x128xf32> to vector<16x24x128xf32>
    %cst_10 = arith.constant 0.000000e+00 : f32
    %38 = vector.broadcast %cst_10 : f32 to vector<16x24x128xf32>
    %39 = arith.select %36, %37, %38 : vector<16x24x128xi1>, vector<16x24x128xf32>
    %40 = vector.shape_cast %39 : vector<16x24x128xf32> to vector<384x128xf32>
    %cst_11 = arith.constant 0.000000e+00 : f32
    %41 = vector.broadcast %cst_11 : f32 to vector<24x128xf32>
    %42 = tpu.concatenate %41, %40, %41 in 0 : vector<24x128xf32>, vector<384x128xf32>, vector<24x128xf32> -> vector<432x128xf32>
    %43 = vector.extract_strided_slice %42 {offsets = [0, 0], sizes = [384, 128], strides = [1, 1]} : vector<432x128xf32> to vector<384x128xf32>
    %44 = arith.truncf %43 : vector<384x128xf32> to vector<384x128xbf16>
    %45 = vector.extract_strided_slice %42 {offsets = [24, 0], sizes = [384, 128], strides = [1, 1]} : vector<432x128xf32> to vector<384x128xf32>
    %46 = arith.truncf %45 : vector<384x128xf32> to vector<384x128xbf16>
    %47 = vector.extract_strided_slice %42 {offsets = [48, 0], sizes = [384, 128], strides = [1, 1]} : vector<432x128xf32> to vector<384x128xf32>
    %48 = arith.truncf %47 : vector<384x128xf32> to vector<384x128xbf16>
    %49 = tpu.concatenate %44, %46, %48 in 1 : vector<384x128xbf16>, vector<384x128xbf16>, vector<384x128xbf16> -> vector<384x384xbf16>
    %c0_12 = arith.constant 0 : index
    %c0_13 = arith.constant 0 : index
    %50 = vector.load %arg5[%c0_12, %c0_13] : memref<384x384xbf16, #tpu.memory_space<vmem>>, vector<384x384xbf16>
    %cst_14 = arith.constant dense<0.000000e+00> : vector<384x384xf32>
    %51 = tpu.matmul %49, %50, %cst_14 {dimension_numbers = #tpu.dot_dimension_numbers<[1], [0], [0], [1], [0, 0, 1, 1], [], []>} : vector<384x384xbf16>, vector<384x384xbf16>, vector<384x384xf32> -> vector<384x384xf32>
    %52 = vector.extract_strided_slice %51 {offsets = [0, 0], sizes = [384, 128], strides = [1, 1]} : vector<384x384xf32> to vector<384x128xf32>
    %53 = vector.extract_strided_slice %51 {offsets = [0, 128], sizes = [384, 128], strides = [1, 1]} : vector<384x384xf32> to vector<384x128xf32>
    %54 = vector.extract_strided_slice %53 {offsets = [1, 0], sizes = [383, 128], strides = [1, 1]} : vector<384x128xf32> to vector<383x128xf32>
    %55 = vector.extract_strided_slice %53 {offsets = [0, 0], sizes = [1, 128], strides = [1, 1]} : vector<384x128xf32> to vector<1x128xf32>
    %56 = tpu.concatenate %54, %55 in 0 : vector<383x128xf32>, vector<1x128xf32> -> vector<384x128xf32>
    %57 = arith.addf %52, %56 : vector<384x128xf32>
    %58 = vector.extract_strided_slice %51 {offsets = [0, 256], sizes = [384, 128], strides = [1, 1]} : vector<384x384xf32> to vector<384x128xf32>
    %59 = vector.extract_strided_slice %58 {offsets = [2, 0], sizes = [382, 128], strides = [1, 1]} : vector<384x128xf32> to vector<382x128xf32>
    %60 = vector.extract_strided_slice %58 {offsets = [0, 0], sizes = [2, 128], strides = [1, 1]} : vector<384x128xf32> to vector<2x128xf32>
    %61 = tpu.concatenate %59, %60 in 0 : vector<382x128xf32>, vector<2x128xf32> -> vector<384x128xf32>
    %62 = arith.addf %57, %61 : vector<384x128xf32>
    %63 = vector.shape_cast %62 : vector<384x128xf32> to vector<16x24x128xf32>
    %64 = vector.extract_strided_slice %63 {offsets = [0, 0, 0], sizes = [16, 16, 128], strides = [1, 1, 1]} : vector<16x24x128xf32> to vector<16x16x128xf32>
    %c0_15 = arith.constant 0 : index
    %c0_16 = arith.constant 0 : index
    %65 = vector.load %arg6[%c0_15, %c0_16] : memref<1x128xf32, #tpu.memory_space<vmem>>, vector<1x128xf32>
    %66 = vector.shape_cast %65 : vector<1x128xf32> to vector<1x1x128xf32>
    %67 = vector.broadcast %66 : vector<1x1x128xf32> to vector<16x16x128xf32>
    %68 = arith.mulf %64, %67 : vector<16x16x128xf32>
    %c0_17 = arith.constant 0 : index
    %c0_18 = arith.constant 0 : index
    %69 = vector.load %arg7[%c0_17, %c0_18] : memref<1x128xf32, #tpu.memory_space<vmem>>, vector<1x128xf32>
    %70 = vector.shape_cast %69 : vector<1x128xf32> to vector<1x1x128xf32>
    %71 = vector.broadcast %70 : vector<1x1x128xf32> to vector<16x16x128xf32>
    %72 = arith.addf %68, %71 : vector<16x16x128xf32>
    %73 = vector.extract_strided_slice %1 {offsets = [1, 2, 0], sizes = [16, 16, 128], strides = [1, 1, 1]} : vector<18x24x128xf32> to vector<16x16x128xf32>
    %74 = arith.addf %72, %73 : vector<16x16x128xf32>
    %cst_19 = arith.constant 0.000000e+00 : f32
    %75 = vector.broadcast %cst_19 : f32 to vector<16x16x128xf32>
    %76 = arith.maximumf %74, %75 : vector<16x16x128xf32>
    %77 = vector.shape_cast %76 : vector<16x16x128xf32> to vector<1x16x16x128xf32>
    %c0_20 = arith.constant 0 : index
    %c0_21 = arith.constant 0 : index
    %c0_22 = arith.constant 0 : index
    %c0_23 = arith.constant 0 : index
    %78 = vector.load %arg8[%c0_20, %c0_21, %c0_22, %c0_23] : memref<1x16x16x128xf32, #tpu.memory_space<vmem>>, vector<1x16x16x128xf32>
    tpu.vector_store %arg8[%c0_20, %c0_21, %c0_22, %c0_23], %77 {strides = array<i32>} : memref<1x16x16x128xf32, #tpu.memory_space<vmem>>, vector<1x16x16x128xf32>,
    return
  }
  func.func @transform_0(%arg0: i32) -> (i32, i32, i32, i32) {
    %c0_i32 = arith.constant 0 : i32
    %c0_i32_0 = arith.constant 0 : i32
    %c0_i32_1 = arith.constant 0 : i32
    %c0_i32_2 = arith.constant 0 : i32
    return %arg0, %c0_i32, %c0_i32_0, %c0_i32_1 : i32, i32, i32, i32
  }
  func.func @transform_1(%arg0: i32) -> (i32, i32) {
    %c0_i32 = arith.constant 0 : i32
    %c0_i32_0 = arith.constant 0 : i32
    %c0_i32_1 = arith.constant 0 : i32
    return %c0_i32, %c0_i32_0 : i32, i32
  }
  func.func @transform_2(%arg0: i32) -> (i32, i32) {
    %c0_i32 = arith.constant 0 : i32
    %c0_i32_0 = arith.constant 0 : i32
    %c0_i32_1 = arith.constant 0 : i32
    return %c0_i32, %c0_i32_0 : i32, i32
  }
  func.func @transform_3(%arg0: i32) -> (i32, i32) {
    %c0_i32 = arith.constant 0 : i32
    %c0_i32_0 = arith.constant 0 : i32
    %c0_i32_1 = arith.constant 0 : i32
    return %c0_i32, %c0_i32_0 : i32, i32
  }
  func.func @transform_4(%arg0: i32) -> (i32, i32) {
    %c0_i32 = arith.constant 0 : i32
    %c0_i32_0 = arith.constant 0 : i32
    %c0_i32_1 = arith.constant 0 : i32
    return %c0_i32, %c0_i32_0 : i32, i32
  }
  func.func @transform_5(%arg0: i32) -> (i32, i32) {
    %c0_i32 = arith.constant 0 : i32
    %c0_i32_0 = arith.constant 0 : i32
    %c0_i32_1 = arith.constant 0 : i32
    return %c0_i32, %c0_i32_0 : i32, i32
  }
  func.func @transform_6(%arg0: i32) -> (i32, i32) {
    %c0_i32 = arith.constant 0 : i32
    %c0_i32_0 = arith.constant 0 : i32
    %c0_i32_1 = arith.constant 0 : i32
    return %c0_i32, %c0_i32_0 : i32, i32
  }
  func.func @transform_7(%arg0: i32) -> (i32, i32, i32, i32) {
    %c0_i32 = arith.constant 0 : i32
    %c0_i32_0 = arith.constant 0 : i32
    %c0_i32_1 = arith.constant 0 : i32
    %c0_i32_2 = arith.constant 0 : i32
    return %arg0, %c0_i32, %c0_i32_0, %c0_i32_1 : i32, i32, i32, i32
  }
}

</mosaic_0001>

<llo_original>
// kernel: tpu_custom_call.1
$region0: #{tpu_custom_call.1}
  #allocation0 [shape = 'u32[]', space=smem, size = 0x4, offset = 0x4, fixed_abs, tag = 'smem constant byte address 0x4 - core index']
  #allocation1 [shape = 'u32[144,128]{1,0:T(1,128)}', space=vmem, size = 0x12000, scoped, tag = 'internal scratch']
  %s0 = inlined_call_operand.hbm [shape: f32[2,18,24,128], index: 0, kind: input, shape index: {}]
  %s1 = inlined_call_operand.hbm [shape: bf16[384,384], index: 1, kind: input, shape index: {}]
  %s2 = inlined_call_operand.vmem [shape: f32[1,128], index: 2, kind: input, shape index: {}]
  %s3 = inlined_call_operand.vmem [shape: f32[1,128], index: 3, kind: input, shape index: {}]
  %s4 = inlined_call_operand.hbm [shape: bf16[384,384], index: 4, kind: input, shape index: {}]
  %s5 = inlined_call_operand.vmem [shape: f32[1,128], index: 5, kind: input, shape index: {}]
  %s6 = inlined_call_operand.vmem [shape: f32[1,128], index: 6, kind: input, shape index: {}]
  %s7 = inlined_call_operand.hbm [shape: f32[2,16,16,128], index: 7, kind: output, shape index: {}]
  %s8 = sld [smem:[#allocation0]]
  $region73: #{tpu_custom_call.1} parent=0
    _
  %s10 = ssub.s32 1, %s8
  %s11 = scalar_select 0, %s10, %s8
  $region1: #{tpu_custom_call.1} parent=0
    #allocation2 [shape = 'u8[442368]{0}', space=vmem, size = 0x6c000, scoped, tag = 'input window, operand 0']
    #allocation3 [shape = 's32[2]{0}', space=sflag, size = 0x8, scoped, tag = 'scoped memory for tpu_custom_call.1']
    #allocation4 [shape = 's32[2]{0}', space=sflag, size = 0x8, scoped, tag = 'scoped memory for tpu_custom_call.1']
    #allocation5 [shape = 'u8[294912]{0}', space=vmem, size = 0x48000, scoped, tag = 'input window, operand 1, single buffered']
    #allocation6 [shape = 's32[1]{0}', space=sflag, size = 0x4, scoped, tag = 'scoped memory for tpu_custom_call.1']
    #allocation7 [shape = 'u8[294912]{0}', space=vmem, size = 0x48000, scoped, tag = 'input window, operand 4, single buffered']
    #allocation8 [shape = 'u8[262144]{0}', space=vmem, size = 0x40000, scoped, tag = 'output window, operand 0']
    %12 = vsyncpa [#allocation3], 0
    %s13 = scalar_lea.sflag [#allocation3], 1
    %14 = vsyncpa %s13, 0
    %15 = vsyncpa [#allocation6], 0
    %16 = vsyncpa [#allocation4], 0
    %s17 = scalar_lea.sflag [#allocation4], 1
    %18 = vsyncpa %s17, 0
    loop: start=0, step=1, limit=4
    $region2: #{tpu_custom_call.1} parent=1 // loop_pre_header
      _
    $region3: #{tpu_custom_call.1} parent=1 // loop_header
      %s20 = sphi 0, %s24
      %p21 = scmp.ge.s32.totalorder %s20, 4
      %s30 = sphi 0, %s32
      %s33 = sphi 0, %s30
      %s34 = sphi 0, %s33
      %s50 = sphi 0, %s34
      %s54 = sphi 0, %s54
      %s56 = sphi 0, %s54
      %s57 = sphi 0, %s56
      %s71 = sphi 0, %s57
      %s75 = sphi 0, %s75
      %s77 = sphi 0, %s75
      %s78 = sphi 0, %s77
      %s92 = sphi 0, %s78
      %s96 = sphi 0, %s96
      %s98 = sphi 0, %s96
      %s99 = sphi 0, %s98
      %s113 = sphi 0, %s99
      %s117 = sphi 0, %s117
      %s119 = sphi 0, %s117
      %s120 = sphi 0, %s119
      %s134 = sphi 0, %s120
      %s138 = sphi 0, %s138
      %s140 = sphi 0, %s138
      %s141 = sphi 0, %s140
      %s155 = sphi 0, %s141
      %s159 = sphi 0, %s159
      %s161 = sphi 0, %s159
      %s162 = sphi 0, %s161
      %s176 = sphi 0, %s162
      %s182 = sphi 0, %s184
      %s185 = sphi 0, %s182
      %s186 = sphi 0, %s185
      %s202 = sphi 0, %s186
    $region4: #{tpu_custom_call.1} parent=1 // loop_header_branch
      %23 = sbr.rel (%p21) target = $region8
    $region5: #{tpu_custom_call.1} parent=1 // loop_body
      %s25 = ssub.s32 %s20, 1
      %s26 = ssub.s32 %s20, 2
      %s27 = sadd.s32 %s20, 1
      %s28 = ssub.s32 %s20, %s27
      %p29 = scmp.eq.s32.totalorder %s28, 0
      %s31 = sadd.s32 %s30, 1
      %s32 = scalar_select %p29, %s30, %s31
      %p35 = pneg %p29
      %p36 = scmp.eq.s32.totalorder %s20, 1
      %p37 = por %p35, %p36
      %p38 = scmp.ne.s32.totalorder %s30, %s33
      %p39 = scmp.eq.s32.totalorder %s20, 0
      %p40 = por %p38, %p39
      %p41 = scmp.ne.s32.totalorder %s30, %s33
      %p42 = scmp.eq.s32.totalorder %s25, 1
      %p43 = por %p41, %p42
      %p44 = scmp.ne.s32.totalorder %s33, %s34
      %p45 = scmp.eq.s32.totalorder %s25, 0
      %p46 = por %p44, %p45
      %p47 = scmp.ne.s32.totalorder %s33, %s34
      %p48 = scmp.eq.s32.totalorder %s26, 1
      %p49 = por %p47, %p48
      %p51 = scmp.ne.s32.totalorder %s34, %s50
      %p52 = scmp.eq.s32.totalorder %s26, 0
      %p53 = por %p51, %p52
      %s55 = sadd.s32 %s54, 1
      %p58 = scmp.eq.s32.totalorder %s20, 1
      %p59 = scmp.ne.s32.totalorder %s54, %s56
      %p60 = scmp.eq.s32.totalorder %s20, 0
      %p61 = por %p59, %p60
      %p62 = scmp.ne.s32.totalorder %s54, %s56
      %p63 = scmp.eq.s32.totalorder %s25, 1
      %p64 = por %p62, %p63
      %p65 = scmp.ne.s32.totalorder %s56, %s57
      %p66 = scmp.eq.s32.totalorder %s25, 0
      %p67 = por %p65, %p66
      %p68 = scmp.ne.s32.totalorder %s56, %s57
      %p69 = scmp.eq.s32.totalorder %s26, 1
      %p70 = por %p68, %p69
      %p72 = scmp.ne.s32.totalorder %s57, %s71
      %p73 = scmp.eq.s32.totalorder %s26, 0
      %p74 = por %p72, %p73
      %s76 = sadd.s32 %s75, 1
      %p79 = scmp.eq.s32.totalorder %s20, 1
      %p80 = scmp.ne.s32.totalorder %s75, %s77
      %p81 = scmp.eq.s32.totalorder %s20, 0
      %p82 = por %p80, %p81
      %p83 = scmp.ne.s32.totalorder %s75, %s77
      %p84 = scmp.eq.s32.totalorder %s25, 1
      %p85 = por %p83, %p84
      %p86 = scmp.ne.s32.totalorder %s77, %s78
      %p87 = scmp.eq.s32.totalorder %s25, 0
      %p88 = por %p86, %p87
      %p89 = scmp.ne.s32.totalorder %s77, %s78
      %p90 = scmp.eq.s32.totalorder %s26, 1
      %p91 = por %p89, %p90
      %p93 = scmp.ne.s32.totalorder %s78, %s92
      %p94 = scmp.eq.s32.totalorder %s26, 0
      %p95 = por %p93, %p94
      %s97 = sadd.s32 %s96, 1
      %p100 = scmp.eq.s32.totalorder %s20, 1
      %p101 = scmp.ne.s32.totalorder %s96, %s98
      %p102 = scmp.eq.s32.totalorder %s20, 0
      %p103 = por %p101, %p102
      %p104 = scmp.ne.s32.totalorder %s96, %s98
      %p105 = scmp.eq.s32.totalorder %s25, 1
      %p106 = por %p104, %p105
      %p107 = scmp.ne.s32.totalorder %s98, %s99
      %p108 = scmp.eq.s32.totalorder %s25, 0
      %p109 = por %p107, %p108
      %p110 = scmp.ne.s32.totalorder %s98, %s99
      %p111 = scmp.eq.s32.totalorder %s26, 1
      %p112 = por %p110, %p111
      %p114 = scmp.ne.s32.totalorder %s99, %s113
      %p115 = scmp.eq.s32.totalorder %s26, 0
      %p116 = por %p114, %p115
      %s118 = sadd.s32 %s117, 1
      %p121 = scmp.eq.s32.totalorder %s20, 1
      %p122 = scmp.ne.s32.totalorder %s117, %s119
      %p123 = scmp.eq.s32.totalorder %s20, 0
      %p124 = por %p122, %p123
      %p125 = scmp.ne.s32.totalorder %s117, %s119
      %p126 = scmp.eq.s32.totalorder %s25, 1
      %p127 = por %p125, %p126
      %p128 = scmp.ne.s32.totalorder %s119, %s120
      %p129 = scmp.eq.s32.totalorder %s25, 0
      %p130 = por %p128, %p129
      %p131 = scmp.ne.s32.totalorder %s119, %s120
      %p132 = scmp.eq.s32.totalorder %s26, 1
      %p133 = por %p131, %p132
      %p135 = scmp.ne.s32.totalorder %s120, %s134
      %p136 = scmp.eq.s32.totalorder %s26, 0
      %p137 = por %p135, %p136
      %s139 = sadd.s32 %s138, 1
      %p142 = scmp.eq.s32.totalorder %s20, 1
      %p143 = scmp.ne.s32.totalorder %s138, %s140
      %p144 = scmp.eq.s32.totalorder %s20, 0
      %p145 = por %p143, %p144
      %p146 = scmp.ne.s32.totalorder %s138, %s140
      %p147 = scmp.eq.s32.totalorder %s25, 1
      %p148 = por %p146, %p147
      %p149 = scmp.ne.s32.totalorder %s140, %s141
      %p150 = scmp.eq.s32.totalorder %s25, 0
      %p151 = por %p149, %p150
      %p152 = scmp.ne.s32.totalorder %s140, %s141
      %p153 = scmp.eq.s32.totalorder %s26, 1
      %p154 = por %p152, %p153
      %p156 = scmp.ne.s32.totalorder %s141, %s155
      %p157 = scmp.eq.s32.totalorder %s26, 0
      %p158 = por %p156, %p157
      %s160 = sadd.s32 %s159, 1
      %p163 = scmp.eq.s32.totalorder %s20, 1
      %p164 = scmp.ne.s32.totalorder %s159, %s161
      %p165 = scmp.eq.s32.totalorder %s20, 0
      %p166 = por %p164, %p165
      %p167 = scmp.ne.s32.totalorder %s159, %s161
      %p168 = scmp.eq.s32.totalorder %s25, 1
      %p169 = por %p167, %p168
      %p170 = scmp.ne.s32.totalorder %s161, %s162
      %p171 = scmp.eq.s32.totalorder %s25, 0
      %p172 = por %p170, %p171
      %p173 = scmp.ne.s32.totalorder %s161, %s162
      %p174 = scmp.eq.s32.totalorder %s26, 1
      %p175 = por %p173, %p174
      %p177 = scmp.ne.s32.totalorder %s162, %s176
      %p178 = scmp.eq.s32.totalorder %s26, 0
      %p179 = por %p177, %p178
      %s180 = ssub.s32 %s20, %s27
      %p181 = scmp.eq.s32.totalorder %s180, 0
      %s183 = sadd.s32 %s182, 1
      %s184 = scalar_select %p181, %s182, %s183
      %p187 = pneg %p181
      %p188 = scmp.eq.s32.totalorder %s20, 1
      %p189 = por %p187, %p188
      %p190 = scmp.ne.s32.totalorder %s182, %s185
      %p191 = scmp.eq.s32.totalorder %s20, 0
      %p192 = por %p190, %p191
      %p193 = scmp.ne.s32.totalorder %s182, %s185
      %p194 = scmp.eq.s32.totalorder %s25, 1
      %p195 = por %p193, %p194
      %p196 = scmp.ne.s32.totalorder %s185, %s186
      %p197 = scmp.eq.s32.totalorder %s25, 0
      %p198 = por %p196, %p197
      %p199 = scmp.ne.s32.totalorder %s185, %s186
      %p200 = scmp.eq.s32.totalorder %s26, 1
      %p201 = por %p199, %p200
      %p203 = scmp.ne.s32.totalorder %s186, %s202
      %p204 = scmp.eq.s32.totalorder %s26, 0
      %p205 = por %p203, %p204
      %p206 = scmp.le.s32.totalorder 1, %s20
      %p207 = scmp.lt.s32.totalorder %s20, 3
      %p208 = pnand %p206, %p207
      %p209 = pneg %p208
      // Predicated region
      $region9: #{tpu_custom_call.1} parent=5 // pred_check
        _
      $region10: #{tpu_custom_call.1} parent=5 // pred_check_branch
        %211 = sbr.rel (%p208) target = $region12
      $region11: #{tpu_custom_call.1} parent=5 // pred_region
        %s212 = ssub.s32 %s20, 1
        // Predicated region
        $region13: #{tpu_custom_call.1} parent=11 // pred_check
          %p213 = pneg %p67
        $region14: #{tpu_custom_call.1} parent=11 // pred_check_branch
          %215 = sbr.rel (%p213) target = $region16
        $region15: #{tpu_custom_call.1} parent=11 // pred_region
          %s217 = ssub.s32 9216, 9216
          %218 = vsyncadd [#allocation6], %s217
          %s219 = sshll.u32 [#allocation5], 4
          %s220 = int_to_ptr.vmem [resolvable:$true] %s219
          %225 = dma.hbm_to_vmem [thread:$0]  %s1, 9216, %s220, [#allocation6], 192, 192, 12
        $region16: #{tpu_custom_call.1} parent=11 // pred_fallthru
          _
        // Predicated region
        $region17: #{tpu_custom_call.1} parent=11 // pred_check
          %p226 = pneg %p88
        $region18: #{tpu_custom_call.1} parent=11 // pred_check_branch
          %228 = sbr.rel (%p226) target = $region20
        $region19: #{tpu_custom_call.1} parent=11 // pred_region
          _
        $region20: #{tpu_custom_call.1} parent=11 // pred_fallthru
          _
        // Predicated region
        $region21: #{tpu_custom_call.1} parent=11 // pred_check
          %p229 = pneg %p109
        $region22: #{tpu_custom_call.1} parent=11 // pred_check_branch
          %231 = sbr.rel (%p229) target = $region24
        $region23: #{tpu_custom_call.1} parent=11 // pred_region
          _
        $region24: #{tpu_custom_call.1} parent=11 // pred_fallthru
          _
        // Predicated region
        $region25: #{tpu_custom_call.1} parent=11 // pred_check
          %p232 = pneg %p130
        $region26: #{tpu_custom_call.1} parent=11 // pred_check_branch
          %234 = sbr.rel (%p232) target = $region28
        $region27: #{tpu_custom_call.1} parent=11 // pred_region
          %s236 = ssub.s32 9216, 9216
          %237 = vsyncadd [#allocation6], %s236
          %s238 = sshll.u32 [#allocation7], 4
          %s239 = int_to_ptr.vmem [resolvable:$true] %s238
          %244 = dma.hbm_to_vmem [thread:$0]  %s4, 9216, %s239, [#allocation6], 192, 192, 12
        $region28: #{tpu_custom_call.1} parent=11 // pred_fallthru
          _
        // Predicated region
        $region29: #{tpu_custom_call.1} parent=11 // pred_check
          %p245 = pneg %p151
        $region30: #{tpu_custom_call.1} parent=11 // pred_check_branch
          %247 = sbr.rel (%p245) target = $region32
        $region31: #{tpu_custom_call.1} parent=11 // pred_region
          _
        $region32: #{tpu_custom_call.1} parent=11 // pred_fallthru
          _
        // Predicated region
        $region33: #{tpu_custom_call.1} parent=11 // pred_check
          %p248 = pneg %p172
        $region34: #{tpu_custom_call.1} parent=11 // pred_check_branch
          %250 = sbr.rel (%p248) target = $region36
        $region35: #{tpu_custom_call.1} parent=11 // pred_region
          _
        $region36: #{tpu_custom_call.1} parent=11 // pred_fallthru
          _
      $region12: #{tpu_custom_call.1} parent=5 // pred_fallthru
        _
      %p251 = scmp.lt.s32.totalorder %s20, 2
      // Predicated region
      $region37: #{tpu_custom_call.1} parent=5 // pred_check
        %p252 = pneg %p251
      $region38: #{tpu_custom_call.1} parent=5 // pred_check_branch
        %254 = sbr.rel (%p252) target = $region40
      $region39: #{tpu_custom_call.1} parent=5 // pred_region
        // Predicated region
        $region41: #{tpu_custom_call.1} parent=39 // pred_check
          %p255 = pneg %p40
        $region42: #{tpu_custom_call.1} parent=39 // pred_check_branch
          %257 = sbr.rel (%p255) target = $region44
        $region43: #{tpu_custom_call.1} parent=39 // pred_region
          %s258 = sand.u32 %s30, 1
          %s259 = scalar_lea.sflag [#allocation3], %s258
          %s260 = sand.u32 %s30, 1
          %s261 = smul.addr %s260, 432
          %s262 = scalar_lea.vmem [#allocation2], %s261
          %s264 = ssub.s32 6912, 6912
          %265 = vsyncadd %s259, %s264
          %s266 = smul.addr %s20, 54
          %s267 = smul.addr %s266, 128
          %s268 = scalar_lea.hbm %s0, %s267
          %s269 = sshll.u32 %s262, 4
          %s270 = int_to_ptr.vmem [resolvable:$true] %s269
          %275 = dma.hbm_to_vmem [thread:$0]  %s268, 6912, %s270, %s259, 128, 128, 8
        $region44: #{tpu_custom_call.1} parent=39 // pred_fallthru
          _
      $region40: #{tpu_custom_call.1} parent=5 // pred_fallthru
        _
      %p276 = scmp.le.s32.totalorder 1, %s20
      %p277 = scmp.lt.s32.totalorder %s20, 3
      %p278 = pnand %p276, %p277
      %p279 = pneg %p278
      // Predicated region
      $region45: #{tpu_custom_call.1} parent=5 // pred_check
        _
      $region46: #{tpu_custom_call.1} parent=5 // pred_check_branch
        %281 = sbr.rel (%p278) target = $region48
      $region47: #{tpu_custom_call.1} parent=5 // pred_region
        %s282 = ssub.s32 %s20, 1
        %s283 = sand.u32 %s33, 1
        %s284 = scalar_lea.sflag [#allocation3], %s283
        %s285 = sand.u32 %s33, 1
        %s286 = smul.addr %s285, 432
        %s287 = scalar_lea.vmem [#allocation2], %s286
        // Predicated region
        $region49: #{tpu_custom_call.1} parent=47 // pred_check
          %p288 = pneg %p46
        $region50: #{tpu_custom_call.1} parent=47 // pred_check_branch
          %290 = sbr.rel (%p288) target = $region52
        $region51: #{tpu_custom_call.1} parent=47 // pred_region
          %291 = dma.done %s284, 6912
        $region52: #{tpu_custom_call.1} parent=47 // pred_fallthru
          _
        // Predicated region
        $region53: #{tpu_custom_call.1} parent=47 // pred_check
          %p292 = pneg %p67
        $region54: #{tpu_custom_call.1} parent=47 // pred_check_branch
          %294 = sbr.rel (%p292) target = $region56
        $region55: #{tpu_custom_call.1} parent=47 // pred_region
          %295 = dma.done [#allocation6], 9216
        $region56: #{tpu_custom_call.1} parent=47 // pred_fallthru
          _
        // Predicated region
        $region57: #{tpu_custom_call.1} parent=47 // pred_check
          %p296 = pneg %p130
        $region58: #{tpu_custom_call.1} parent=47 // pred_check_branch
          %298 = sbr.rel (%p296) target = $region60
        $region59: #{tpu_custom_call.1} parent=47 // pred_region
          %299 = dma.done [#allocation6], 9216
        $region60: #{tpu_custom_call.1} parent=47 // pred_fallthru
          _
        %s300 = sand.u32 %s33, 1
        %s301 = scalar_lea.sflag [#allocation3], %s300
        %s302 = sand.u32 %s33, 1
        %s303 = smul.addr %s302, 432
        %s304 = scalar_lea.vmem [#allocation2], %s303
        %p305 = pneg %p46
        %p306 = pneg %p43
        %p307 = pneg %p67
        %p308 = pneg %p64
        %p309 = pneg %p88
        %p310 = pneg %p85
        %p311 = pneg %p109
        %p312 = pneg %p106
        %p313 = pneg %p130
        %p314 = pneg %p127
        %p315 = pneg %p151
        %p316 = pneg %p148
        %p317 = pneg %p172
        %p318 = pneg %p169
        %p319 = pneg %p198
        %p320 = pneg %p195
        %s321 = sand.u32 %s185, 1
        %s322 = scalar_lea.sflag [#allocation4], %s321
        %s323 = sand.u32 %s185, 1
        %s324 = smul.addr %s323, 256
        %s325 = scalar_lea.vmem [#allocation8], %s324
        %v327 = vld [vmem:[%s287] sm:$0xff]
        %v328 = vld [vmem:[%s287 + $0x8] sm:$0xff]
        %v329 = vld [vmem:[%s287 + $0x10] sm:$0xff]
        %v330 = vld [vmem:[%s287 + $0x18] sm:$0xff]
        %v331 = vld [vmem:[%s287 + $0x20] sm:$0xff]
        %v332 = vld [vmem:[%s287 + $0x28] sm:$0xff]
        %v333 = vld [vmem:[%s287 + $0x30] sm:$0xff]
        %v334 = vld [vmem:[%s287 + $0x38] sm:$0xff]
        %v335 = vld [vmem:[%s287 + $0x40] sm:$0xff]
        %v336 = vld [vmem:[%s287 + $0x48] sm:$0xff]
        %v337 = vld [vmem:[%s287 + $0x50] sm:$0xff]
        %v338 = vld [vmem:[%s287 + $0x58] sm:$0xff]
        %v339 = vld [vmem:[%s287 + $0x60] sm:$0xff]
        %v340 = vld [vmem:[%s287 + $0x68] sm:$0xff]
        %v341 = vld [vmem:[%s287 + $0x70] sm:$0xff]
        %v342 = vld [vmem:[%s287 + $0x78] sm:$0xff]
        %v343 = vld [vmem:[%s287 + $0x80] sm:$0xff]
        %v344 = vld [vmem:[%s287 + $0x88] sm:$0xff]
        %v345 = vld [vmem:[%s287 + $0x90] sm:$0xff]
        %v346 = vld [vmem:[%s287 + $0x98] sm:$0xff]
        %v347 = vld [vmem:[%s287 + $0xa0] sm:$0xff]
        %v348 = vld [vmem:[%s287 + $0xa8] sm:$0xff]
        %v349 = vld [vmem:[%s287 + $0xb0] sm:$0xff]
        %v350 = vld [vmem:[%s287 + $0xb8] sm:$0xff]
        %v351 = vld [vmem:[%s287 + $0xc0] sm:$0xff]
        %v352 = vld [vmem:[%s287 + $0xc8] sm:$0xff]
        %v353 = vld [vmem:[%s287 + $0xd0] sm:$0xff]
        %v354 = vld [vmem:[%s287 + $0xd8] sm:$0xff]
        %v355 = vld [vmem:[%s287 + $0xe0] sm:$0xff]
        %v356 = vld [vmem:[%s287 + $0xe8] sm:$0xff]
        %v357 = vld [vmem:[%s287 + $0xf0] sm:$0xff]
        %v358 = vld [vmem:[%s287 + $0xf8] sm:$0xff]
        %v359 = vld [vmem:[%s287 + $0x100] sm:$0xff]
        %v360 = vld [vmem:[%s287 + $0x108] sm:$0xff]
        %v361 = vld [vmem:[%s287 + $0x110] sm:$0xff]
        %v362 = vld [vmem:[%s287 + $0x118] sm:$0xff]
        %v363 = vld [vmem:[%s287 + $0x120] sm:$0xff]
        %v364 = vld [vmem:[%s287 + $0x128] sm:$0xff]
        %v365 = vld [vmem:[%s287 + $0x130] sm:$0xff]
        %v366 = vld [vmem:[%s287 + $0x138] sm:$0xff]
        %v367 = vld [vmem:[%s287 + $0x140] sm:$0xff]
        %v368 = vld [vmem:[%s287 + $0x148] sm:$0xff]
        %v369 = vld [vmem:[%s287 + $0x150] sm:$0xff]
        %v370 = vld [vmem:[%s287 + $0x158] sm:$0xff]
        %v371 = vld [vmem:[%s287 + $0x160] sm:$0xff]
        %v372 = vld [vmem:[%s287 + $0x168] sm:$0xff]
        %v373 = vld [vmem:[%s287 + $0x170] sm:$0xff]
        %v374 = vld [vmem:[%s287 + $0x178] sm:$0xff]
        %v375 = vld [vmem:[%s287 + $0x180] sm:$0xff]
        %v376 = vld [vmem:[%s287 + $0x188] sm:$0xff]
        %v377 = vld [vmem:[%s287 + $0x190] sm:$0xff]
        %v378 = vld [vmem:[%s287 + $0x198] sm:$0xff]
        %v379 = vld [vmem:[%s287 + $0x1a0] sm:$0xff]
        %v380 = vld [vmem:[%s287 + $0x1a8] sm:$0xff]
        %v381 = vpack.c.bf16 %v328, %v327
        %v382 = vpack.c.bf16 %v330, %v329
        %v383 = vpack.c.bf16 %v332, %v331
        %v384 = vpack.c.bf16 %v334, %v333
        %v385 = vpack.c.bf16 %v336, %v335
        %v386 = vpack.c.bf16 %v338, %v337
        %v387 = vpack.c.bf16 %v340, %v339
        %v388 = vpack.c.bf16 %v342, %v341
        %v389 = vpack.c.bf16 %v344, %v343
        %v390 = vpack.c.bf16 %v346, %v345
        %v391 = vpack.c.bf16 %v348, %v347
        %v392 = vpack.c.bf16 %v350, %v349
        %v393 = vpack.c.bf16 %v352, %v351
        %v394 = vpack.c.bf16 %v354, %v353
        %v395 = vpack.c.bf16 %v356, %v355
        %v396 = vpack.c.bf16 %v358, %v357
        %v397 = vpack.c.bf16 %v360, %v359
        %v398 = vpack.c.bf16 %v362, %v361
        %v399 = vpack.c.bf16 %v364, %v363
        %v400 = vpack.c.bf16 %v366, %v365
        %v401 = vpack.c.bf16 %v368, %v367
        %v402 = vpack.c.bf16 %v370, %v369
        %v403 = vpack.c.bf16 %v372, %v371
        %v404 = vpack.c.bf16 %v374, %v373
        %v405 = vpack.c.bf16 %v331, %v330
        %v406 = vpack.c.bf16 %v333, %v332
        %v407 = vpack.c.bf16 %v335, %v334
        %v408 = vpack.c.bf16 %v337, %v336
        %v409 = vpack.c.bf16 %v339, %v338
        %v410 = vpack.c.bf16 %v341, %v340
        %v411 = vpack.c.bf16 %v343, %v342
        %v412 = vpack.c.bf16 %v345, %v344
        %v413 = vpack.c.bf16 %v347, %v346
        %v414 = vpack.c.bf16 %v349, %v348
        %v415 = vpack.c.bf16 %v351, %v350
        %v416 = vpack.c.bf16 %v353, %v352
        %v417 = vpack.c.bf16 %v355, %v354
        %v418 = vpack.c.bf16 %v357, %v356
        %v419 = vpack.c.bf16 %v359, %v358
        %v420 = vpack.c.bf16 %v361, %v360
        %v421 = vpack.c.bf16 %v363, %v362
        %v422 = vpack.c.bf16 %v365, %v364
        %v423 = vpack.c.bf16 %v367, %v366
        %v424 = vpack.c.bf16 %v369, %v368
        %v425 = vpack.c.bf16 %v371, %v370
        %v426 = vpack.c.bf16 %v373, %v372
        %v427 = vpack.c.bf16 %v375, %v374
        %v428 = vpack.c.bf16 %v377, %v376
        %v429 = vpack.c.bf16 %v376, %v375
        %v430 = vpack.c.bf16 %v378, %v377
        %v431 = vpack.c.bf16 %v380, %v379
        %v432 = vld [vmem:[#allocation5] sm:$0xff]
        %v433 = vld [vmem:[#allocation5 + $0x8] sm:$0xf]
        %v434 = vld [vmem:[#allocation5 + $0xc] sm:$0xff]
        %v435 = vld [vmem:[#allocation5 + $0x14] sm:$0xf]
        %v436 = vld [vmem:[#allocation5 + $0x18] sm:$0xff]
        %v437 = vld [vmem:[#allocation5 + $0x20] sm:$0xf]
        %v438 = vld [vmem:[#allocation5 + $0x24] sm:$0xff]
        %v439 = vld [vmem:[#allocation5 + $0x2c] sm:$0xf]
        %v440 = vld [vmem:[#allocation5 + $0x30] sm:$0xff]
        %v441 = vld [vmem:[#allocation5 + $0x38] sm:$0xf]
        %v442 = vld [vmem:[#allocation5 + $0x3c] sm:$0xff]
        %v443 = vld [vmem:[#allocation5 + $0x44] sm:$0xf]
        %v444 = vld [vmem:[#allocation5 + $0x48] sm:$0xff]
        %v445 = vld [vmem:[#allocation5 + $0x50] sm:$0xf]
        %v446 = vld [vmem:[#allocation5 + $0x54] sm:$0xff]
        %v447 = vld [vmem:[#allocation5 + $0x5c] sm:$0xf]
        %v448 = vld [vmem:[#allocation5 + $0x60] sm:$0xff]
        %v449 = vld [vmem:[#allocation5 + $0x68] sm:$0xf]
        %v450 = vld [vmem:[#allocation5 + $0x6c] sm:$0xff]
        %v451 = vld [vmem:[#allocation5 + $0x74] sm:$0xf]
        %v452 = vld [vmem:[#allocation5 + $0x78] sm:$0xff]
        %v453 = vld [vmem:[#allocation5 + $0x80] sm:$0xf]
        %v454 = vld [vmem:[#allocation5 + $0x84] sm:$0xff]
        %v455 = vld [vmem:[#allocation5 + $0x8c] sm:$0xf]
        %v456 = vld [vmem:[#allocation5 + $0x90] sm:$0xff]
        %v457 = vld [vmem:[#allocation5 + $0x98] sm:$0xf]
        %v458 = vld [vmem:[#allocation5 + $0x9c] sm:$0xff]
        %v459 = vld [vmem:[#allocation5 + $0xa4] sm:$0xf]
        %v460 = vld [vmem:[#allocation5 + $0xa8] sm:$0xff]
        %v461 = vld [vmem:[#allocation5 + $0xb0] sm:$0xf]
        %v462 = vld [vmem:[#allocation5 + $0xb4] sm:$0xff]
        %v463 = vld [vmem:[#allocation5 + $0xbc] sm:$0xf]
        %v464 = vld [vmem:[#allocation5 + $0xc0] sm:$0xff]
        %v465 = vld [vmem:[#allocation5 + $0xc8] sm:$0xf]
        %v466 = vld [vmem:[#allocation5 + $0xcc] sm:$0xff]
        %v467 = vld [vmem:[#allocation5 + $0xd4] sm:$0xf]
        %v468 = vld [vmem:[#allocation5 + $0xd8] sm:$0xff]
        %v469 = vld [vmem:[#allocation5 + $0xe0] sm:$0xf]
        %v470 = vld [vmem:[#allocation5 + $0xe4] sm:$0xff]
        %v471 = vld [vmem:[#allocation5 + $0xec] sm:$0xf]
        %v472 = vld [vmem:[#allocation5 + $0xf0] sm:$0xff]
        %v473 = vld [vmem:[#allocation5 + $0xf8] sm:$0xf]
        %v474 = vld [vmem:[#allocation5 + $0xfc] sm:$0xff]
        %v475 = vld [vmem:[#allocation5 + $0x104] sm:$0xf]
        %v476 = vld [vmem:[#allocation5 + $0x108] sm:$0xff]
        %v477 = vld [vmem:[#allocation5 + $0x110] sm:$0xf]
        %v478 = vld [vmem:[#allocation5 + $0x114] sm:$0xff]
        %v479 = vld [vmem:[#allocation5 + $0x11c] sm:$0xf]
        %v480 = vld [vmem:[#allocation5 + $0x120] sm:$0xff]
        %v481 = vld [vmem:[#allocation5 + $0x128] sm:$0xf]
        %v482 = vld [vmem:[#allocation5 + $0x12c] sm:$0xff]
        %v483 = vld [vmem:[#allocation5 + $0x134] sm:$0xf]
        %v484 = vld [vmem:[#allocation5 + $0x138] sm:$0xff]
        %v485 = vld [vmem:[#allocation5 + $0x140] sm:$0xf]
        %v486 = vld [vmem:[#allocation5 + $0x144] sm:$0xff]
        %v487 = vld [vmem:[#allocation5 + $0x14c] sm:$0xf]
        %v488 = vld [vmem:[#allocation5 + $0x150] sm:$0xff]
        %v489 = vld [vmem:[#allocation5 + $0x158] sm:$0xf]
        %v490 = vld [vmem:[#allocation5 + $0x15c] sm:$0xff]
        %v491 = vld [vmem:[#allocation5 + $0x164] sm:$0xf]
        %v492 = vld [vmem:[#allocation5 + $0x168] sm:$0xff]
        %v493 = vld [vmem:[#allocation5 + $0x170] sm:$0xf]
        %v494 = vld [vmem:[#allocation5 + $0x174] sm:$0xff]
        %v495 = vld [vmem:[#allocation5 + $0x17c] sm:$0xf]
        %v496 = vld [vmem:[#allocation5 + $0x180] sm:$0xff]
        %v497 = vld [vmem:[#allocation5 + $0x188] sm:$0xf]
        %v498 = vld [vmem:[#allocation5 + $0x18c] sm:$0xff]
        %v499 = vld [vmem:[#allocation5 + $0x194] sm:$0xf]
        %v500 = vld [vmem:[#allocation5 + $0x198] sm:$0xff]
        %v501 = vld [vmem:[#allocation5 + $0x1a0] sm:$0xf]
        %v502 = vld [vmem:[#allocation5 + $0x1a4] sm:$0xff]
        %v503 = vld [vmem:[#allocation5 + $0x1ac] sm:$0xf]
        %v504 = vld [vmem:[#allocation5 + $0x1b0] sm:$0xff]
        %v505 = vld [vmem:[#allocation5 + $0x1b8] sm:$0xf]
        %v506 = vld [vmem:[#allocation5 + $0x1bc] sm:$0xff]
        %v507 = vld [vmem:[#allocation5 + $0x1c4] sm:$0xf]
        %v508 = vld [vmem:[#allocation5 + $0x1c8] sm:$0xff]
        %v509 = vld [vmem:[#allocation5 + $0x1d0] sm:$0xf]
        %v510 = vld [vmem:[#allocation5 + $0x1d4] sm:$0xff]
        %v511 = vld [vmem:[#allocation5 + $0x1dc] sm:$0xf]
        %v512 = vld [vmem:[#allocation5 + $0x1e0] sm:$0xff]
        %v513 = vld [vmem:[#allocation5 + $0x1e8] sm:$0xf]
        %v514 = vld [vmem:[#allocation5 + $0x1ec] sm:$0xff]
        %v515 = vld [vmem:[#allocation5 + $0x1f4] sm:$0xf]
        %v516 = vld [vmem:[#allocation5 + $0x1f8] sm:$0xff]
        %v517 = vld [vmem:[#allocation5 + $0x200] sm:$0xf]
        %v518 = vld [vmem:[#allocation5 + $0x204] sm:$0xff]
        %v519 = vld [vmem:[#allocation5 + $0x20c] sm:$0xf]
        %v520 = vld [vmem:[#allocation5 + $0x210] sm:$0xff]
        %v521 = vld [vmem:[#allocation5 + $0x218] sm:$0xf]
        %v522 = vld [vmem:[#allocation5 + $0x21c] sm:$0xff]
        %v523 = vld [vmem:[#allocation5 + $0x224] sm:$0xf]
        %v524 = vld [vmem:[#allocation5 + $0x228] sm:$0xff]
        %v525 = vld [vmem:[#allocation5 + $0x230] sm:$0xf]
        %v526 = vld [vmem:[#allocation5 + $0x234] sm:$0xff]
        %v527 = vld [vmem:[#allocation5 + $0x23c] sm:$0xf]
        %v624 = vunpack.c.l.b16 %v432
        %v625 = vunpack.c.h.b16 %v432
        %v626 = vunpack.c.l.b16 %v433
        %v627 = vunpack.c.l.b16 %v434
        %v628 = vunpack.c.h.b16 %v434
        %v629 = vunpack.c.l.b16 %v435
        %v630 = vunpack.c.l.b16 %v436
        %v631 = vunpack.c.h.b16 %v436
        %v632 = vunpack.c.l.b16 %v437
        %v633 = vunpack.c.l.b16 %v438
        %v634 = vunpack.c.h.b16 %v438
        %v635 = vunpack.c.l.b16 %v439
        %v636 = vunpack.c.l.b16 %v440
        %v637 = vunpack.c.h.b16 %v440
        %v638 = vunpack.c.l.b16 %v441
        %v639 = vunpack.c.l.b16 %v442
        %v640 = vunpack.c.h.b16 %v442
        %v641 = vunpack.c.l.b16 %v443
        %v642 = vunpack.c.l.b16 %v444
        %v643 = vunpack.c.h.b16 %v444
        %v644 = vunpack.c.l.b16 %v445
        %v645 = vunpack.c.l.b16 %v446
        %v646 = vunpack.c.h.b16 %v446
        %v647 = vunpack.c.l.b16 %v447
        %v648 = vunpack.c.l.b16 %v448
        %v649 = vunpack.c.h.b16 %v448
        %v650 = vunpack.c.l.b16 %v449
        %v651 = vunpack.c.l.b16 %v450
        %v652 = vunpack.c.h.b16 %v450
        %v653 = vunpack.c.l.b16 %v451
        %v654 = vunpack.c.l.b16 %v452
        %v655 = vunpack.c.h.b16 %v452
        %v656 = vunpack.c.l.b16 %v453
        %v657 = vunpack.c.l.b16 %v454
        %v658 = vunpack.c.h.b16 %v454
        %v659 = vunpack.c.l.b16 %v455
        %v660 = vunpack.c.l.b16 %v456
        %v661 = vunpack.c.h.b16 %v456
        %v662 = vunpack.c.l.b16 %v457
        %v663 = vunpack.c.l.b16 %v458
        %v664 = vunpack.c.h.b16 %v458
        %v665 = vunpack.c.l.b16 %v459
        %v666 = vunpack.c.l.b16 %v460
        %v667 = vunpack.c.h.b16 %v460
        %v668 = vunpack.c.l.b16 %v461
        %v669 = vunpack.c.l.b16 %v462
        %v670 = vunpack.c.h.b16 %v462
        %v671 = vunpack.c.l.b16 %v463
        %v672 = vunpack.c.l.b16 %v464
        %v673 = vunpack.c.h.b16 %v464
        %v674 = vunpack.c.l.b16 %v465
        %v675 = vunpack.c.l.b16 %v466
        %v676 = vunpack.c.h.b16 %v466
        %v677 = vunpack.c.l.b16 %v467
        %v678 = vunpack.c.l.b16 %v468
        %v679 = vunpack.c.h.b16 %v468
        %v680 = vunpack.c.l.b16 %v469
        %v681 = vunpack.c.l.b16 %v470
        %v682 = vunpack.c.h.b16 %v470
        %v683 = vunpack.c.l.b16 %v471
        %v684 = vunpack.c.l.b16 %v472
        %v685 = vunpack.c.h.b16 %v472
        %v686 = vunpack.c.l.b16 %v473
        %v687 = vunpack.c.l.b16 %v474
        %v688 = vunpack.c.h.b16 %v474
        %v689 = vunpack.c.l.b16 %v475
        %v690 = vunpack.c.l.b16 %v476
        %v691 = vunpack.c.h.b16 %v476
        %v692 = vunpack.c.l.b16 %v477
        %v693 = vunpack.c.l.b16 %v478
        %v694 = vunpack.c.h.b16 %v478
        %v695 = vunpack.c.l.b16 %v479
        %v696 = vunpack.c.l.b16 %v480
        %v697 = vunpack.c.h.b16 %v480
        %v698 = vunpack.c.l.b16 %v481
        %v699 = vunpack.c.l.b16 %v482
        %v700 = vunpack.c.h.b16 %v482
        %v701 = vunpack.c.l.b16 %v483
        %v702 = vunpack.c.l.b16 %v484
        %v703 = vunpack.c.h.b16 %v484
        %v704 = vunpack.c.l.b16 %v485
        %v705 = vunpack.c.l.b16 %v486
        %v706 = vunpack.c.h.b16 %v486
        %v707 = vunpack.c.l.b16 %v487
        %v708 = vunpack.c.l.b16 %v488
        %v709 = vunpack.c.h.b16 %v488
        %v710 = vunpack.c.l.b16 %v489
        %v711 = vunpack.c.l.b16 %v490
        %v712 = vunpack.c.h.b16 %v490
        %v713 = vunpack.c.l.b16 %v491
        %v714 = vunpack.c.l.b16 %v492
        %v715 = vunpack.c.h.b16 %v492
        %v716 = vunpack.c.l.b16 %v493
        %v717 = vunpack.c.l.b16 %v494
        %v718 = vunpack.c.h.b16 %v494
        %v719 = vunpack.c.l.b16 %v495
        %v720 = vunpack.c.l.b16 %v496
        %v721 = vunpack.c.h.b16 %v496
        %v722 = vunpack.c.l.b16 %v497
        %v723 = vunpack.c.l.b16 %v498
        %v724 = vunpack.c.h.b16 %v498
        %v725 = vunpack.c.l.b16 %v499
        %v726 = vunpack.c.l.b16 %v500
        %v727 = vunpack.c.h.b16 %v500
        %v728 = vunpack.c.l.b16 %v501
        %v729 = vunpack.c.l.b16 %v502
        %v730 = vunpack.c.h.b16 %v502
        %v731 = vunpack.c.l.b16 %v503
        %v732 = vunpack.c.l.b16 %v504
        %v733 = vunpack.c.h.b16 %v504
        %v734 = vunpack.c.l.b16 %v505
        %v735 = vunpack.c.l.b16 %v506
        %v736 = vunpack.c.h.b16 %v506
        %v737 = vunpack.c.l.b16 %v507
        %v738 = vunpack.c.l.b16 %v508
        %v739 = vunpack.c.h.b16 %v508
        %v740 = vunpack.c.l.b16 %v509
        %v741 = vunpack.c.l.b16 %v510
        %v742 = vunpack.c.h.b16 %v510
        %v743 = vunpack.c.l.b16 %v511
        %v744 = vunpack.c.l.b16 %v512
        %v745 = vunpack.c.h.b16 %v512
        %v746 = vunpack.c.l.b16 %v513
        %v747 = vunpack.c.l.b16 %v514
        %v748 = vunpack.c.h.b16 %v514
        %v749 = vunpack.c.l.b16 %v515
        %v750 = vunpack.c.l.b16 %v516
        %v751 = vunpack.c.h.b16 %v516
        %v752 = vunpack.c.l.b16 %v517
        %v753 = vunpack.c.l.b16 %v518
        %v754 = vunpack.c.h.b16 %v518
        %v755 = vunpack.c.l.b16 %v519
        %v756 = vunpack.c.l.b16 %v520
        %v757 = vunpack.c.h.b16 %v520
        %v758 = vunpack.c.l.b16 %v521
        %v759 = vunpack.c.l.b16 %v522
        %v760 = vunpack.c.h.b16 %v522
        %v761 = vunpack.c.l.b16 %v523
        %v762 = vunpack.c.l.b16 %v524
        %v763 = vunpack.c.h.b16 %v524
        %v764 = vunpack.c.l.b16 %v525
        %v765 = vunpack.c.l.b16 %v526
        %v766 = vunpack.c.h.b16 %v526
        %v767 = vunpack.c.l.b16 %v527
        %v768 = vpack.c.b16 %v627, %v624
        %v769 = vpack.c.b16 %v628, %v625
        %v770 = vpack.c.b16 %v629, %v626
        %v771 = vpack.c.b16 %v633, %v630
        %v772 = vpack.c.b16 %v634, %v631
        %v773 = vpack.c.b16 %v635, %v632
        %v774 = vpack.c.b16 %v639, %v636
        %v775 = vpack.c.b16 %v640, %v637
        %v776 = vpack.c.b16 %v641, %v638
        %v777 = vpack.c.b16 %v645, %v642
        %v778 = vpack.c.b16 %v646, %v643
        %v779 = vpack.c.b16 %v647, %v644
        %v780 = vpack.c.b16 %v651, %v648
        %v781 = vpack.c.b16 %v652, %v649
        %v782 = vpack.c.b16 %v653, %v650
        %v783 = vpack.c.b16 %v657, %v654
        %v784 = vpack.c.b16 %v658, %v655
        %v785 = vpack.c.b16 %v659, %v656
        %v786 = vpack.c.b16 %v663, %v660
        %v787 = vpack.c.b16 %v664, %v661
        %v788 = vpack.c.b16 %v665, %v662
        %v789 = vpack.c.b16 %v669, %v666
        %v790 = vpack.c.b16 %v670, %v667
        %v791 = vpack.c.b16 %v671, %v668
        %v792 = vpack.c.b16 %v675, %v672
        %v793 = vpack.c.b16 %v676, %v673
        %v794 = vpack.c.b16 %v677, %v674
        %v795 = vpack.c.b16 %v681, %v678
        %v796 = vpack.c.b16 %v682, %v679
        %v797 = vpack.c.b16 %v683, %v680
        %v798 = vpack.c.b16 %v687, %v684
        %v799 = vpack.c.b16 %v688, %v685
        %v800 = vpack.c.b16 %v689, %v686
        %v801 = vpack.c.b16 %v693, %v690
        %v802 = vpack.c.b16 %v694, %v691
        %v803 = vpack.c.b16 %v695, %v692
        %v804 = vpack.c.b16 %v699, %v696
        %v805 = vpack.c.b16 %v700, %v697
        %v806 = vpack.c.b16 %v701, %v698
        %v807 = vpack.c.b16 %v705, %v702
        %v808 = vpack.c.b16 %v706, %v703
        %v809 = vpack.c.b16 %v707, %v704
        %v810 = vpack.c.b16 %v711, %v708
        %v811 = vpack.c.b16 %v712, %v709
        %v812 = vpack.c.b16 %v713, %v710
        %v813 = vpack.c.b16 %v717, %v714
        %v814 = vpack.c.b16 %v718, %v715
        %v815 = vpack.c.b16 %v719, %v716
        %v816 = vpack.c.b16 %v723, %v720
        %v817 = vpack.c.b16 %v724, %v721
        %v818 = vpack.c.b16 %v725, %v722
        %v819 = vpack.c.b16 %v729, %v726
        %v820 = vpack.c.b16 %v730, %v727
        %v821 = vpack.c.b16 %v731, %v728
        %v822 = vpack.c.b16 %v735, %v732
        %v823 = vpack.c.b16 %v736, %v733
        %v824 = vpack.c.b16 %v737, %v734
        %v825 = vpack.c.b16 %v741, %v738
        %v826 = vpack.c.b16 %v742, %v739
        %v827 = vpack.c.b16 %v743, %v740
        %v828 = vpack.c.b16 %v747, %v744
        %v829 = vpack.c.b16 %v748, %v745
        %v830 = vpack.c.b16 %v749, %v746
        %v831 = vpack.c.b16 %v753, %v750
        %v832 = vpack.c.b16 %v754, %v751
        %v833 = vpack.c.b16 %v755, %v752
        %v834 = vpack.c.b16 %v759, %v756
        %v835 = vpack.c.b16 %v760, %v757
        %v836 = vpack.c.b16 %v761, %v758
        %v837 = vpack.c.b16 %v765, %v762
        %v838 = vpack.c.b16 %v766, %v763
        %v839 = vpack.c.b16 %v767, %v764
        %912 = vmatprep.subr.bf16.mxu0 %v769
        %913 = vmatpush1.bf16.msra.mxu0 %v768
        %914 = vmatprep.subr.bf16.mxu0 %v772
        %915 = vmatpush1.bf16.msra.mxu0 %v771
        %916 = vmatprep.subr.bf16.mxu0 %v775
        %917 = vmatpush1.bf16.msra.mxu0 %v774
        %918 = vmatprep.subr.bf16.mxu0 %v778
        %919 = vmatpush1.bf16.msra.mxu0 %v777
        %920 = vmatprep.subr.bf16.mxu0 %v781
        %921 = vmatpush1.bf16.msra.mxu0 %v780
        %922 = vmatprep.subr.bf16.mxu0 %v784
        %923 = vmatpush1.bf16.msra.mxu0 %v783
        %924 = vmatprep.subr.bf16.mxu0 %v787
        %925 = vmatpush1.bf16.msra.mxu0 %v786
        %926 = vmatprep.subr.bf16.mxu0 %v790
        %927 = vmatpush1.bf16.msra.mxu0 %v789
        %928 = vmatprep.subr.bf16.mxu0 %v793
        %929 = vmatpush1.bf16.msra.mxu0 %v792
        %930 = vmatprep.subr.bf16.mxu0 %v796
        %931 = vmatpush1.bf16.msra.mxu0 %v795
        %932 = vmatprep.subr.bf16.mxu0 %v799
        %933 = vmatpush1.bf16.msra.mxu0 %v798
        %934 = vmatprep.subr.bf16.mxu0 %v802
        %935 = vmatpush1.bf16.msra.mxu0 %v801
        %936 = vmatprep.subr.bf16.mxu0 %v805
        %937 = vmatpush1.bf16.msra.mxu0 %v804
        %938 = vmatprep.subr.bf16.mxu0 %v808
        %939 = vmatpush1.bf16.msra.mxu0 %v807
        %940 = vmatprep.subr.bf16.mxu0 %v811
        %941 = vmatpush1.bf16.msra.mxu0 %v810
        %942 = vmatprep.subr.bf16.mxu0 %v814
        %943 = vmatpush1.bf16.msra.mxu0 %v813
        %944 = vmatprep.mubr.bf16.mxu0 %v405
        %945 = vmatmul.mubr.bf16.gmra.mrb[0].mxu0 %v381
        %v946 = vpop.f32.mrb[0].mxu0
        %v947 = vadd.f32 0.0, %v946
        %v948 = vpop.f32.mrb[0].mxu0
        %v949 = vadd.f32 0.0, %v948
        %v950 = vpop.f32.mrb[0].mxu0
        %v951 = vadd.f32 0.0, %v950
        %v952 = vpop.f32.mrb[0].mxu0
        %v953 = vadd.f32 0.0, %v952
        %954 = vmatprep.mubr.bf16.mxu0 %v406
        %955 = vmatmul.mubr.bf16.gmra.mrb[0].mxu0 %v382
        %v956 = vpop.f32.mrb[0].mxu0
        %v957 = vadd.f32 0.0, %v956
        %v958 = vpop.f32.mrb[0].mxu0
        %v959 = vadd.f32 0.0, %v958
        %v960 = vpop.f32.mrb[0].mxu0
        %v961 = vadd.f32 0.0, %v960
        %v962 = vpop.f32.mrb[0].mxu0
        %v963 = vadd.f32 0.0, %v962
        %964 = vmatprep.mubr.bf16.mxu0 %v407
        %965 = vmatmul.mubr.bf16.gmra.mrb[0].mxu0 %v383
        %v966 = vpop.f32.mrb[0].mxu0
        %v967 = vadd.f32 0.0, %v966
        %v968 = vpop.f32.mrb[0].mxu0
        %v969 = vadd.f32 0.0, %v968
        %v970 = vpop.f32.mrb[0].mxu0
        %v971 = vadd.f32 0.0, %v970
        %v972 = vpop.f32.mrb[0].mxu0
        %v973 = vadd.f32 0.0, %v972
        %974 = vmatprep.mubr.bf16.mxu0 %v408
        %975 = vmatmul.mubr.bf16.gmra.mrb[0].mxu0 %v384
        %v976 = vpop.f32.mrb[0].mxu0
        %v977 = vadd.f32 0.0, %v976
        %v978 = vpop.f32.mrb[0].mxu0
        %v979 = vadd.f32 0.0, %v978
        %v980 = vpop.f32.mrb[0].mxu0
        %v981 = vadd.f32 0.0, %v980
        %v982 = vpop.f32.mrb[0].mxu0
        %v983 = vadd.f32 0.0, %v982
        %984 = vmatprep.mubr.bf16.mxu0 %v409
        %985 = vmatmul.mubr.bf16.gmra.mrb[0].mxu0 %v385
        %v986 = vpop.f32.mrb[0].mxu0
        %v987 = vadd.f32 0.0, %v986
        %v988 = vpop.f32.mrb[0].mxu0
        %v989 = vadd.f32 0.0, %v988
        %v990 = vpop.f32.mrb[0].mxu0
        %v991 = vadd.f32 0.0, %v990
        %v992 = vpop.f32.mrb[0].mxu0
        %v993 = vadd.f32 0.0, %v992
        %994 = vmatprep.mubr.bf16.mxu0 %v410
        %995 = vmatmul.mubr.bf16.gmra.mrb[0].mxu0 %v386
        %v996 = vpop.f32.mrb[0].mxu0
        %v997 = vadd.f32 0.0, %v996
        %v998 = vpop.f32.mrb[0].mxu0
        %v999 = vadd.f32 0.0, %v998
        %v1000 = vpop.f32.mrb[0].mxu0
        %v1001 = vadd.f32 0.0, %v1000
        %v1002 = vpop.f32.mrb[0].mxu0
        %v1003 = vadd.f32 0.0, %v1002
        %1004 = vmatprep.mubr.bf16.mxu0 %v411
        %1005 = vmatmul.mubr.bf16.gmra.mrb[0].mxu0 %v387
        %v1006 = vpop.f32.mrb[0].mxu0
        %v1007 = vadd.f32 0.0, %v1006
        %v1008 = vpop.f32.mrb[0].mxu0
        %v1009 = vadd.f32 0.0, %v1008
        %v1010 = vpop.f32.mrb[0].mxu0
        %v1011 = vadd.f32 0.0, %v1010
        %v1012 = vpop.f32.mrb[0].mxu0
        %v1013 = vadd.f32 0.0, %v1012
        %1014 = vmatprep.mubr.bf16.mxu0 %v412
        %1015 = vmatmul.mubr.bf16.gmra.mrb[0].mxu0 %v388
        %v1016 = vpop.f32.mrb[0].mxu0
        %v1017 = vadd.f32 0.0, %v1016
        %v1018 = vpop.f32.mrb[0].mxu0
        %v1019 = vadd.f32 0.0, %v1018
        %v1020 = vpop.f32.mrb[0].mxu0
        %v1021 = vadd.f32 0.0, %v1020
        %v1022 = vpop.f32.mrb[0].mxu0
        %v1023 = vadd.f32 0.0, %v1022
        %1024 = vmatprep.mubr.bf16.mxu0 %v413
        %1025 = vmatmul.mubr.bf16.gmra.mrb[0].mxu0 %v389
        %v1026 = vpop.f32.mrb[0].mxu0
        %v1027 = vadd.f32 0.0, %v1026
        %v1028 = vpop.f32.mrb[0].mxu0
        %v1029 = vadd.f32 0.0, %v1028
        %v1030 = vpop.f32.mrb[0].mxu0
        %v1031 = vadd.f32 0.0, %v1030
        %v1032 = vpop.f32.mrb[0].mxu0
        %v1033 = vadd.f32 0.0, %v1032
        %1034 = vmatprep.mubr.bf16.mxu0 %v414
        %1035 = vmatmul.mubr.bf16.gmra.mrb[0].mxu0 %v390
        %v1036 = vpop.f32.mrb[0].mxu0
        %v1037 = vadd.f32 0.0, %v1036
        %v1038 = vpop.f32.mrb[0].mxu0
        %v1039 = vadd.f32 0.0, %v1038
        %v1040 = vpop.f32.mrb[0].mxu0
        %v1041 = vadd.f32 0.0, %v1040
        %v1042 = vpop.f32.mrb[0].mxu0
        %v1043 = vadd.f32 0.0, %v1042
        %1044 = vmatprep.mubr.bf16.mxu0 %v415
        %1045 = vmatmul.mubr.bf16.gmra.mrb[0].mxu0 %v391
        %v1046 = vpop.f32.mrb[0].mxu0
        %v1047 = vadd.f32 0.0, %v1046
        %v1048 = vpop.f32.mrb[0].mxu0
        %v1049 = vadd.f32 0.0, %v1048
        %v1050 = vpop.f32.mrb[0].mxu0
        %v1051 = vadd.f32 0.0, %v1050
        %v1052 = vpop.f32.mrb[0].mxu0
        %v1053 = vadd.f32 0.0, %v1052
        %1054 = vmatprep.mubr.bf16.mxu0 %v416
        %1055 = vmatmul.mubr.bf16.gmra.mrb[0].mxu0 %v392
        %v1056 = vpop.f32.mrb[0].mxu0
        %v1057 = vadd.f32 0.0, %v1056
        %v1058 = vpop.f32.mrb[0].mxu0
        %v1059 = vadd.f32 0.0, %v1058
        %v1060 = vpop.f32.mrb[0].mxu0
        %v1061 = vadd.f32 0.0, %v1060
        %v1062 = vpop.f32.mrb[0].mxu0
        %v1063 = vadd.f32 0.0, %v1062
        %1064 = vmatprep.mubr.bf16.mxu0 %v417
        %1065 = vmatmul.mubr.bf16.gmra.mrb[0].mxu0 %v393
        %v1066 = vpop.f32.mrb[0].mxu0
        %v1067 = vadd.f32 0.0, %v1066
        %v1068 = vpop.f32.mrb[0].mxu0
        %v1069 = vadd.f32 0.0, %v1068
        %v1070 = vpop.f32.mrb[0].mxu0
        %v1071 = vadd.f32 0.0, %v1070
        %v1072 = vpop.f32.mrb[0].mxu0
        %v1073 = vadd.f32 0.0, %v1072
        %1074 = vmatprep.mubr.bf16.mxu0 %v418
        %1075 = vmatmul.mubr.bf16.gmra.mrb[0].mxu0 %v394
        %v1076 = vpop.f32.mrb[0].mxu0
        %v1077 = vadd.f32 0.0, %v1076
        %v1078 = vpop.f32.mrb[0].mxu0
        %v1079 = vadd.f32 0.0, %v1078
        %v1080 = vpop.f32.mrb[0].mxu0
        %v1081 = vadd.f32 0.0, %v1080
        %v1082 = vpop.f32.mrb[0].mxu0
        %v1083 = vadd.f32 0.0, %v1082
        %1084 = vmatprep.mubr.bf16.mxu0 %v419
        %1085 = vmatmul.mubr.bf16.gmra.mrb[0].mxu0 %v395
        %v1086 = vpop.f32.mrb[0].mxu0
        %v1087 = vadd.f32 0.0, %v1086
        %v1088 = vpop.f32.mrb[0].mxu0
        %v1089 = vadd.f32 0.0, %v1088
        %v1090 = vpop.f32.mrb[0].mxu0
        %v1091 = vadd.f32 0.0, %v1090
        %v1092 = vpop.f32.mrb[0].mxu0
        %v1093 = vadd.f32 0.0, %v1092
        %1094 = vmatprep.mubr.bf16.mxu0 %v420
        %1095 = vmatmul.mubr.bf16.gmra.mrb[0].mxu0 %v396
        %v1096 = vpop.f32.mrb[0].mxu0
        %v1097 = vadd.f32 0.0, %v1096
        %v1098 = vpop.f32.mrb[0].mxu0
        %v1099 = vadd.f32 0.0, %v1098
        %v1100 = vpop.f32.mrb[0].mxu0
        %v1101 = vadd.f32 0.0, %v1100
        %v1102 = vpop.f32.mrb[0].mxu0
        %v1103 = vadd.f32 0.0, %v1102
        %1104 = vmatprep.mubr.bf16.mxu0 %v421
        %1105 = vmatmul.mubr.bf16.gmra.mrb[0].mxu0 %v397
        %v1106 = vpop.f32.mrb[0].mxu0
        %v1107 = vadd.f32 0.0, %v1106
        %v1108 = vpop.f32.mrb[0].mxu0
        %v1109 = vadd.f32 0.0, %v1108
        %v1110 = vpop.f32.mrb[0].mxu0
        %v1111 = vadd.f32 0.0, %v1110
        %v1112 = vpop.f32.mrb[0].mxu0
        %v1113 = vadd.f32 0.0, %v1112
        %1114 = vmatprep.mubr.bf16.mxu0 %v422
        %1115 = vmatmul.mubr.bf16.gmra.mrb[0].mxu0 %v398
        %v1116 = vpop.f32.mrb[0].mxu0
        %v1117 = vadd.f32 0.0, %v1116
        %v1118 = vpop.f32.mrb[0].mxu0
        %v1119 = vadd.f32 0.0, %v1118
        %v1120 = vpop.f32.mrb[0].mxu0
        %v1121 = vadd.f32 0.0, %v1120
        %v1122 = vpop.f32.mrb[0].mxu0
        %v1123 = vadd.f32 0.0, %v1122
        %1124 = vmatprep.mubr.bf16.mxu0 %v423
        %1125 = vmatmul.mubr.bf16.gmra.mrb[0].mxu0 %v399
        %v1126 = vpop.f32.mrb[0].mxu0
        %v1127 = vadd.f32 0.0, %v1126
        %v1128 = vpop.f32.mrb[0].mxu0
        %v1129 = vadd.f32 0.0, %v1128
        %v1130 = vpop.f32.mrb[0].mxu0
        %v1131 = vadd.f32 0.0, %v1130
        %v1132 = vpop.f32.mrb[0].mxu0
        %v1133 = vadd.f32 0.0, %v1132
        %1134 = vmatprep.mubr.bf16.mxu0 %v424
        %1135 = vmatmul.mubr.bf16.gmra.mrb[0].mxu0 %v400
        %v1136 = vpop.f32.mrb[0].mxu0
        %v1137 = vadd.f32 0.0, %v1136
        %v1138 = vpop.f32.mrb[0].mxu0
        %v1139 = vadd.f32 0.0, %v1138
        %v1140 = vpop.f32.mrb[0].mxu0
        %v1141 = vadd.f32 0.0, %v1140
        %v1142 = vpop.f32.mrb[0].mxu0
        %v1143 = vadd.f32 0.0, %v1142
        %1144 = vmatprep.mubr.bf16.mxu0 %v425
        %1145 = vmatmul.mubr.bf16.gmra.mrb[0].mxu0 %v401
        %v1146 = vpop.f32.mrb[0].mxu0
        %v1147 = vadd.f32 0.0, %v1146
        %v1148 = vpop.f32.mrb[0].mxu0
        %v1149 = vadd.f32 0.0, %v1148
        %v1150 = vpop.f32.mrb[0].mxu0
        %v1151 = vadd.f32 0.0, %v1150
        %v1152 = vpop.f32.mrb[0].mxu0
        %v1153 = vadd.f32 0.0, %v1152
        %1154 = vmatprep.mubr.bf16.mxu0 %v426
        %1155 = vmatmul.mubr.bf16.gmra.mrb[0].mxu0 %v402
        %v1156 = vpop.f32.mrb[0].mxu0
        %v1157 = vadd.f32 0.0, %v1156
        %v1158 = vpop.f32.mrb[0].mxu0
        %v1159 = vadd.f32 0.0, %v1158
        %v1160 = vpop.f32.mrb[0].mxu0
        %v1161 = vadd.f32 0.0, %v1160
        %v1162 = vpop.f32.mrb[0].mxu0
        %v1163 = vadd.f32 0.0, %v1162
        %1164 = vmatprep.mubr.bf16.mxu0 %v427
        %1165 = vmatmul.mubr.bf16.gmra.mrb[0].mxu0 %v403
        %v1166 = vpop.f32.mrb[0].mxu0
        %v1167 = vadd.f32 0.0, %v1166
        %v1168 = vpop.f32.mrb[0].mxu0
        %v1169 = vadd.f32 0.0, %v1168
        %v1170 = vpop.f32.mrb[0].mxu0
        %v1171 = vadd.f32 0.0, %v1170
        %v1172 = vpop.f32.mrb[0].mxu0
        %v1173 = vadd.f32 0.0, %v1172
        %1174 = vmatprep.mubr.bf16.mxu0 %v428
        %1175 = vmatmul.mubr.bf16.gmra.mrb[0].mxu0 %v404
        %v1176 = vpop.f32.mrb[0].mxu0
        %v1177 = vadd.f32 0.0, %v1176
        %v1178 = vpop.f32.mrb[0].mxu0
        %v1179 = vadd.f32 0.0, %v1178
        %v1180 = vpop.f32.mrb[0].mxu0
        %v1181 = vadd.f32 0.0, %v1180
        %v1182 = vpop.f32.mrb[0].mxu0
        %v1183 = vadd.f32 0.0, %v1182
        %1184 = vdwg.mxu0
        %1185 = vmatprep.subr.bf16.mxu0 %v817
        %1186 = vmatpush1.bf16.msra.mxu0 %v816
        %1187 = vmatprep.subr.bf16.mxu0 %v820
        %1188 = vmatpush1.bf16.msra.mxu0 %v819
        %1189 = vmatprep.subr.bf16.mxu0 %v823
        %1190 = vmatpush1.bf16.msra.mxu0 %v822
        %1191 = vmatprep.subr.bf16.mxu0 %v826
        %1192 = vmatpush1.bf16.msra.mxu0 %v825
        %1193 = vmatprep.subr.bf16.mxu0 %v829
        %1194 = vmatpush1.bf16.msra.mxu0 %v828
        %1195 = vmatprep.subr.bf16.mxu0 %v832
        %1196 = vmatpush1.bf16.msra.mxu0 %v831
        %1197 = vmatprep.subr.bf16.mxu0 %v835
        %1198 = vmatpush1.bf16.msra.mxu0 %v834
        %1199 = vmatprep.subr.bf16.mxu0 %v838
        %1200 = vmatpush1.bf16.msra.mxu0 %v837
        %1201 = vmatprep.subr.bf16.mxu0 0
        %1202 = vmatpush1.bf16.msra.mxu0 0
        %1203 = vmatprep.subr.bf16.mxu0 0
        %1204 = vmatpush1.bf16.msra.mxu0 0
        %1205 = vmatprep.subr.bf16.mxu0 0
        %1206 = vmatpush1.bf16.msra.mxu0 0
        %1207 = vmatprep.subr.bf16.mxu0 0
        %1208 = vmatpush1.bf16.msra.mxu0 0
        %1209 = vmatprep.subr.bf16.mxu0 0
        %1210 = vmatpush1.bf16.msra.mxu0 0
        %1211 = vmatprep.subr.bf16.mxu0 0
        %1212 = vmatpush1.bf16.msra.mxu0 0
        %1213 = vmatprep.subr.bf16.mxu0 0
        %1214 = vmatpush1.bf16.msra.mxu0 0
        %1215 = vmatprep.subr.bf16.mxu0 0
        %1216 = vmatpush1.bf16.msra.mxu0 0
        %1217 = vmatprep.mubr.bf16.mxu0 0
        %1218 = vmatmul.mubr.bf16.gmra.mrb[0].mxu0 %v384
        %v1219 = vpop.f32.mrb[0].mxu0
        %v1220 = vadd.f32 %v947, %v1219
        %v1221 = vpop.f32.mrb[0].mxu0
        %v1222 = vadd.f32 %v949, %v1221
        %v1223 = vpop.f32.mrb[0].mxu0
        %v1224 = vadd.f32 %v951, %v1223
        %v1225 = vpop.f32.mrb[0].mxu0
        %v1226 = vadd.f32 %v953, %v1225
        %1227 = vmatprep.mubr.bf16.mxu0 0
        %1228 = vmatmul.mubr.bf16.gmra.mrb[0].mxu0 %v385
        %v1229 = vpop.f32.mrb[0].mxu0
        %v1230 = vadd.f32 %v957, %v1229
        %v1231 = vpop.f32.mrb[0].mxu0
        %v1232 = vadd.f32 %v959, %v1231
        %v1233 = vpop.f32.mrb[0].mxu0
        %v1234 = vadd.f32 %v961, %v1233
        %v1235 = vpop.f32.mrb[0].mxu0
        %v1236 = vadd.f32 %v963, %v1235
        %1237 = vmatprep.mubr.bf16.mxu0 0
        %1238 = vmatmul.mubr.bf16.gmra.mrb[0].mxu0 %v386
        %v1239 = vpop.f32.mrb[0].mxu0
        %v1240 = vadd.f32 %v967, %v1239
        %v1241 = vpop.f32.mrb[0].mxu0
        %v1242 = vadd.f32 %v969, %v1241
        %v1243 = vpop.f32.mrb[0].mxu0
        %v1244 = vadd.f32 %v971, %v1243
        %v1245 = vpop.f32.mrb[0].mxu0
        %v1246 = vadd.f32 %v973, %v1245
        %1247 = vmatprep.mubr.bf16.mxu0 0
        %1248 = vmatmul.mubr.bf16.gmra.mrb[0].mxu0 %v387
        %v1249 = vpop.f32.mrb[0].mxu0
        %v1250 = vadd.f32 %v977, %v1249
        %v1251 = vpop.f32.mrb[0].mxu0
        %v1252 = vadd.f32 %v979, %v1251
        %v1253 = vpop.f32.mrb[0].mxu0
        %v1254 = vadd.f32 %v981, %v1253
        %v1255 = vpop.f32.mrb[0].mxu0
        %v1256 = vadd.f32 %v983, %v1255
        %1257 = vmatprep.mubr.bf16.mxu0 0
        %1258 = vmatmul.mubr.bf16.gmra.mrb[0].mxu0 %v388
        %v1259 = vpop.f32.mrb[0].mxu0
        %v1260 = vadd.f32 %v987, %v1259
        %v1261 = vpop.f32.mrb[0].mxu0
        %v1262 = vadd.f32 %v989, %v1261
        %v1263 = vpop.f32.mrb[0].mxu0
        %v1264 = vadd.f32 %v991, %v1263
        %v1265 = vpop.f32.mrb[0].mxu0
        %v1266 = vadd.f32 %v993, %v1265
        %1267 = vmatprep.mubr.bf16.mxu0 0
        %1268 = vmatmul.mubr.bf16.gmra.mrb[0].mxu0 %v389
        %v1269 = vpop.f32.mrb[0].mxu0
        %v1270 = vadd.f32 %v997, %v1269
        %v1271 = vpop.f32.mrb[0].mxu0
        %v1272 = vadd.f32 %v999, %v1271
        %v1273 = vpop.f32.mrb[0].mxu0
        %v1274 = vadd.f32 %v1001, %v1273
        %v1275 = vpop.f32.mrb[0].mxu0
        %v1276 = vadd.f32 %v1003, %v1275
        %1277 = vmatprep.mubr.bf16.mxu0 0
        %1278 = vmatmul.mubr.bf16.gmra.mrb[0].mxu0 %v390
        %v1279 = vpop.f32.mrb[0].mxu0
        %v1280 = vadd.f32 %v1007, %v1279
        %v1281 = vpop.f32.mrb[0].mxu0
        %v1282 = vadd.f32 %v1009, %v1281
        %v1283 = vpop.f32.mrb[0].mxu0
        %v1284 = vadd.f32 %v1011, %v1283
        %v1285 = vpop.f32.mrb[0].mxu0
        %v1286 = vadd.f32 %v1013, %v1285
        %1287 = vmatprep.mubr.bf16.mxu0 0
        %1288 = vmatmul.mubr.bf16.gmra.mrb[0].mxu0 %v391
        %v1289 = vpop.f32.mrb[0].mxu0
        %v1290 = vadd.f32 %v1017, %v1289
        %v1291 = vpop.f32.mrb[0].mxu0
        %v1292 = vadd.f32 %v1019, %v1291
        %v1293 = vpop.f32.mrb[0].mxu0
        %v1294 = vadd.f32 %v1021, %v1293
        %v1295 = vpop.f32.mrb[0].mxu0
        %v1296 = vadd.f32 %v1023, %v1295
        %1297 = vmatprep.mubr.bf16.mxu0 0
        %1298 = vmatmul.mubr.bf16.gmra.mrb[0].mxu0 %v392
        %v1299 = vpop.f32.mrb[0].mxu0
        %v1300 = vadd.f32 %v1027, %v1299
        %v1301 = vpop.f32.mrb[0].mxu0
        %v1302 = vadd.f32 %v1029, %v1301
        %v1303 = vpop.f32.mrb[0].mxu0
        %v1304 = vadd.f32 %v1031, %v1303
        %v1305 = vpop.f32.mrb[0].mxu0
        %v1306 = vadd.f32 %v1033, %v1305
        %1307 = vmatprep.mubr.bf16.mxu0 0
        %1308 = vmatmul.mubr.bf16.gmra.mrb[0].mxu0 %v393
        %v1309 = vpop.f32.mrb[0].mxu0
        %v1310 = vadd.f32 %v1037, %v1309
        %v1311 = vpop.f32.mrb[0].mxu0
        %v1312 = vadd.f32 %v1039, %v1311
        %v1313 = vpop.f32.mrb[0].mxu0
        %v1314 = vadd.f32 %v1041, %v1313
        %v1315 = vpop.f32.mrb[0].mxu0
        %v1316 = vadd.f32 %v1043, %v1315
        %1317 = vmatprep.mubr.bf16.mxu0 0
        %1318 = vmatmul.mubr.bf16.gmra.mrb[0].mxu0 %v394
        %v1319 = vpop.f32.mrb[0].mxu0
        %v1320 = vadd.f32 %v1047, %v1319
        %v1321 = vpop.f32.mrb[0].mxu0
        %v1322 = vadd.f32 %v1049, %v1321
        %v1323 = vpop.f32.mrb[0].mxu0
        %v1324 = vadd.f32 %v1051, %v1323
        %v1325 = vpop.f32.mrb[0].mxu0
        %v1326 = vadd.f32 %v1053, %v1325
        %1327 = vmatprep.mubr.bf16.mxu0 0
        %1328 = vmatmul.mubr.bf16.gmra.mrb[0].mxu0 %v395
        %v1329 = vpop.f32.mrb[0].mxu0
        %v1330 = vadd.f32 %v1057, %v1329
        %v1331 = vpop.f32.mrb[0].mxu0
        %v1332 = vadd.f32 %v1059, %v1331
        %v1333 = vpop.f32.mrb[0].mxu0
        %v1334 = vadd.f32 %v1061, %v1333
        %v1335 = vpop.f32.mrb[0].mxu0
        %v1336 = vadd.f32 %v1063, %v1335
        %1337 = vmatprep.mubr.bf16.mxu0 0
        %1338 = vmatmul.mubr.bf16.gmra.mrb[0].mxu0 %v396
        %v1339 = vpop.f32.mrb[0].mxu0
        %v1340 = vadd.f32 %v1067, %v1339
        %v1341 = vpop.f32.mrb[0].mxu0
        %v1342 = vadd.f32 %v1069, %v1341
        %v1343 = vpop.f32.mrb[0].mxu0
        %v1344 = vadd.f32 %v1071, %v1343
        %v1345 = vpop.f32.mrb[0].mxu0
        %v1346 = vadd.f32 %v1073, %v1345
        %1347 = vmatprep.mubr.bf16.mxu0 0
        %1348 = vmatmul.mubr.bf16.gmra.mrb[0].mxu0 %v397
        %v1349 = vpop.f32.mrb[0].mxu0
        %v1350 = vadd.f32 %v1077, %v1349
        %v1351 = vpop.f32.mrb[0].mxu0
        %v1352 = vadd.f32 %v1079, %v1351
        %v1353 = vpop.f32.mrb[0].mxu0
        %v1354 = vadd.f32 %v1081, %v1353
        %v1355 = vpop.f32.mrb[0].mxu0
        %v1356 = vadd.f32 %v1083, %v1355
        %1357 = vmatprep.mubr.bf16.mxu0 0
        %1358 = vmatmul.mubr.bf16.gmra.mrb[0].mxu0 %v398
        %v1359 = vpop.f32.mrb[0].mxu0
        %v1360 = vadd.f32 %v1087, %v1359
        %v1361 = vpop.f32.mrb[0].mxu0
        %v1362 = vadd.f32 %v1089, %v1361
        %v1363 = vpop.f32.mrb[0].mxu0
        %v1364 = vadd.f32 %v1091, %v1363
        %v1365 = vpop.f32.mrb[0].mxu0
        %v1366 = vadd.f32 %v1093, %v1365
        %1367 = vmatprep.mubr.bf16.mxu0 0
        %1368 = vmatmul.mubr.bf16.gmra.mrb[0].mxu0 %v399
        %v1369 = vpop.f32.mrb[0].mxu0
        %v1370 = vadd.f32 %v1097, %v1369
        %v1371 = vpop.f32.mrb[0].mxu0
        %v1372 = vadd.f32 %v1099, %v1371
        %v1373 = vpop.f32.mrb[0].mxu0
        %v1374 = vadd.f32 %v1101, %v1373
        %v1375 = vpop.f32.mrb[0].mxu0
        %v1376 = vadd.f32 %v1103, %v1375
        %1377 = vmatprep.mubr.bf16.mxu0 0
        %1378 = vmatmul.mubr.bf16.gmra.mrb[0].mxu0 %v400
        %v1379 = vpop.f32.mrb[0].mxu0
        %v1380 = vadd.f32 %v1107, %v1379
        %v1381 = vpop.f32.mrb[0].mxu0
        %v1382 = vadd.f32 %v1109, %v1381
        %v1383 = vpop.f32.mrb[0].mxu0
        %v1384 = vadd.f32 %v1111, %v1383
        %v1385 = vpop.f32.mrb[0].mxu0
        %v1386 = vadd.f32 %v1113, %v1385
        %1387 = vmatprep.mubr.bf16.mxu0 0
        %1388 = vmatmul.mubr.bf16.gmra.mrb[0].mxu0 %v401
        %v1389 = vpop.f32.mrb[0].mxu0
        %v1390 = vadd.f32 %v1117, %v1389
        %v1391 = vpop.f32.mrb[0].mxu0
        %v1392 = vadd.f32 %v1119, %v1391
        %v1393 = vpop.f32.mrb[0].mxu0
        %v1394 = vadd.f32 %v1121, %v1393
        %v1395 = vpop.f32.mrb[0].mxu0
        %v1396 = vadd.f32 %v1123, %v1395
        %1397 = vmatprep.mubr.bf16.mxu0 0
        %1398 = vmatmul.mubr.bf16.gmra.mrb[0].mxu0 %v402
        %v1399 = vpop.f32.mrb[0].mxu0
        %v1400 = vadd.f32 %v1127, %v1399
        %v1401 = vpop.f32.mrb[0].mxu0
        %v1402 = vadd.f32 %v1129, %v1401
        %v1403 = vpop.f32.mrb[0].mxu0
        %v1404 = vadd.f32 %v1131, %v1403
        %v1405 = vpop.f32.mrb[0].mxu0
        %v1406 = vadd.f32 %v1133, %v1405
        %1407 = vmatprep.mubr.bf16.mxu0 0
        %1408 = vmatmul.mubr.bf16.gmra.mrb[0].mxu0 %v403
        %v1409 = vpop.f32.mrb[0].mxu0
        %v1410 = vadd.f32 %v1137, %v1409
        %v1411 = vpop.f32.mrb[0].mxu0
        %v1412 = vadd.f32 %v1139, %v1411
        %v1413 = vpop.f32.mrb[0].mxu0
        %v1414 = vadd.f32 %v1141, %v1413
        %v1415 = vpop.f32.mrb[0].mxu0
        %v1416 = vadd.f32 %v1143, %v1415
        %1417 = vmatprep.mubr.bf16.mxu0 0
        %1418 = vmatmul.mubr.bf16.gmra.mrb[0].mxu0 %v404
        %v1419 = vpop.f32.mrb[0].mxu0
        %v1420 = vadd.f32 %v1147, %v1419
        %v1421 = vpop.f32.mrb[0].mxu0
        %v1422 = vadd.f32 %v1149, %v1421
        %v1423 = vpop.f32.mrb[0].mxu0
        %v1424 = vadd.f32 %v1151, %v1423
        %v1425 = vpop.f32.mrb[0].mxu0
        %v1426 = vadd.f32 %v1153, %v1425
        %1427 = vmatprep.mubr.bf16.mxu0 0
        %1428 = vmatmul.mubr.bf16.gmra.mrb[0].mxu0 %v429
        %v1429 = vpop.f32.mrb[0].mxu0
        %v1430 = vadd.f32 %v1157, %v1429
        %v1431 = vpop.f32.mrb[0].mxu0
        %v1432 = vadd.f32 %v1159, %v1431
        %v1433 = vpop.f32.mrb[0].mxu0
        %v1434 = vadd.f32 %v1161, %v1433
        %v1435 = vpop.f32.mrb[0].mxu0
        %v1436 = vadd.f32 %v1163, %v1435
        %1437 = vmatprep.mubr.bf16.mxu0 0
        %1438 = vmatmul.mubr.bf16.gmra.mrb[0].mxu0 %v430
        %v1439 = vpop.f32.mrb[0].mxu0
        %v1440 = vadd.f32 %v1167, %v1439
        %v1441 = vpop.f32.mrb[0].mxu0
        %v1442 = vadd.f32 %v1169, %v1441
        %v1443 = vpop.f32.mrb[0].mxu0
        %v1444 = vadd.f32 %v1171, %v1443
        %v1445 = vpop.f32.mrb[0].mxu0
        %v1446 = vadd.f32 %v1173, %v1445
        %1447 = vmatprep.mubr.bf16.mxu0 0
        %1448 = vmatmul.mubr.bf16.gmra.mrb[0].mxu0 %v431
        %v1449 = vpop.f32.mrb[0].mxu0
        %v1450 = vadd.f32 %v1177, %v1449
        %v1451 = vpop.f32.mrb[0].mxu0
        %v1452 = vadd.f32 %v1179, %v1451
        %v1453 = vpop.f32.mrb[0].mxu0
        %v1454 = vadd.f32 %v1181, %v1453
        %v1455 = vpop.f32.mrb[0].mxu0
        %v1456 = vadd.f32 %v1183, %v1455
        %1457 = vdwg.mxu0
        %1458 = vmatprep.subr.bf16.mxu0 0
        %1459 = vmatpush1.bf16.msra.mxu0 %v770
        %1460 = vmatprep.subr.bf16.mxu0 0
        %1461 = vmatpush1.bf16.msra.mxu0 %v773
        %1462 = vmatprep.subr.bf16.mxu0 0
        %1463 = vmatpush1.bf16.msra.mxu0 %v776
        %1464 = vmatprep.subr.bf16.mxu0 0
        %1465 = vmatpush1.bf16.msra.mxu0 %v779
        %1466 = vmatprep.subr.bf16.mxu0 0
        %1467 = vmatpush1.bf16.msra.mxu0 %v782
        %1468 = vmatprep.subr.bf16.mxu0 0
        %1469 = vmatpush1.bf16.msra.mxu0 %v785
        %1470 = vmatprep.subr.bf16.mxu0 0
        %1471 = vmatpush1.bf16.msra.mxu0 %v788
        %1472 = vmatprep.subr.bf16.mxu0 0
        %1473 = vmatpush1.bf16.msra.mxu0 %v791
        %1474 = vmatprep.subr.bf16.mxu0 0
        %1475 = vmatpush1.bf16.msra.mxu0 %v794
        %1476 = vmatprep.subr.bf16.mxu0 0
        %1477 = vmatpush1.bf16.msra.mxu0 %v797
        %1478 = vmatprep.subr.bf16.mxu0 0
        %1479 = vmatpush1.bf16.msra.mxu0 %v800
        %1480 = vmatprep.subr.bf16.mxu0 0
        %1481 = vmatpush1.bf16.msra.mxu0 %v803
        %1482 = vmatprep.subr.bf16.mxu0 0
        %1483 = vmatpush1.bf16.msra.mxu0 %v806
        %1484 = vmatprep.subr.bf16.mxu0 0
        %1485 = vmatpush1.bf16.msra.mxu0 %v809
        %1486 = vmatprep.subr.bf16.mxu0 0
        %1487 = vmatpush1.bf16.msra.mxu0 %v812
        %1488 = vmatprep.subr.bf16.mxu0 0
        %1489 = vmatpush1.bf16.msra.mxu0 %v815
        %1490 = vmatprep.mubr.bf16.mxu0 %v405
        %1491 = vmatmul.mubr.bf16.gmra.mrb[0].mxu0 %v381
        %v1492 = vpop.f32.mrb[0].mxu0
        %v1493 = vadd.f32 0.0, %v1492
        %v1494 = vpop.f32.mrb[0].mxu0
        %v1495 = vpop.f32.mrb[0].mxu0
        %v1496 = vadd.f32 0.0, %v1495
        %v1497 = vpop.f32.mrb[0].mxu0
        %1498 = vmatprep.mubr.bf16.mxu0 %v406
        %1499 = vmatmul.mubr.bf16.gmra.mrb[0].mxu0 %v382
        %v1500 = vpop.f32.mrb[0].mxu0
        %v1501 = vadd.f32 0.0, %v1500
        %v1502 = vpop.f32.mrb[0].mxu0
        %v1503 = vpop.f32.mrb[0].mxu0
        %v1504 = vadd.f32 0.0, %v1503
        %v1505 = vpop.f32.mrb[0].mxu0
        %1506 = vmatprep.mubr.bf16.mxu0 %v407
        %1507 = vmatmul.mubr.bf16.gmra.mrb[0].mxu0 %v383
        %v1508 = vpop.f32.mrb[0].mxu0
        %v1509 = vadd.f32 0.0, %v1508
        %v1510 = vpop.f32.mrb[0].mxu0
        %v1511 = vpop.f32.mrb[0].mxu0
        %v1512 = vadd.f32 0.0, %v1511
        %v1513 = vpop.f32.mrb[0].mxu0
        %1514 = vmatprep.mubr.bf16.mxu0 %v408
        %1515 = vmatmul.mubr.bf16.gmra.mrb[0].mxu0 %v384
        %v1516 = vpop.f32.mrb[0].mxu0
        %v1517 = vadd.f32 0.0, %v1516
        %v1518 = vpop.f32.mrb[0].mxu0
        %v1519 = vpop.f32.mrb[0].mxu0
        %v1520 = vadd.f32 0.0, %v1519
        %v1521 = vpop.f32.mrb[0].mxu0
        %1522 = vmatprep.mubr.bf16.mxu0 %v409
        %1523 = vmatmul.mubr.bf16.gmra.mrb[0].mxu0 %v385
        %v1524 = vpop.f32.mrb[0].mxu0
        %v1525 = vadd.f32 0.0, %v1524
        %v1526 = vpop.f32.mrb[0].mxu0
        %v1527 = vpop.f32.mrb[0].mxu0
        %v1528 = vadd.f32 0.0, %v1527
        %v1529 = vpop.f32.mrb[0].mxu0
        %1530 = vmatprep.mubr.bf16.mxu0 %v410
        %1531 = vmatmul.mubr.bf16.gmra.mrb[0].mxu0 %v386
        %v1532 = vpop.f32.mrb[0].mxu0
        %v1533 = vadd.f32 0.0, %v1532
        %v1534 = vpop.f32.mrb[0].mxu0
        %v1535 = vpop.f32.mrb[0].mxu0
        %v1536 = vadd.f32 0.0, %v1535
        %v1537 = vpop.f32.mrb[0].mxu0
        %1538 = vmatprep.mubr.bf16.mxu0 %v411
        %1539 = vmatmul.mubr.bf16.gmra.mrb[0].mxu0 %v387
        %v1540 = vpop.f32.mrb[0].mxu0
        %v1541 = vadd.f32 0.0, %v1540
        %v1542 = vpop.f32.mrb[0].mxu0
        %v1543 = vpop.f32.mrb[0].mxu0
        %v1544 = vadd.f32 0.0, %v1543
        %v1545 = vpop.f32.mrb[0].mxu0
        %1546 = vmatprep.mubr.bf16.mxu0 %v412
        %1547 = vmatmul.mubr.bf16.gmra.mrb[0].mxu0 %v388
        %v1548 = vpop.f32.mrb[0].mxu0
        %v1549 = vadd.f32 0.0, %v1548
        %v1550 = vpop.f32.mrb[0].mxu0
        %v1551 = vpop.f32.mrb[0].mxu0
        %v1552 = vadd.f32 0.0, %v1551
        %v1553 = vpop.f32.mrb[0].mxu0
        %1554 = vmatprep.mubr.bf16.mxu0 %v413
        %1555 = vmatmul.mubr.bf16.gmra.mrb[0].mxu0 %v389
        %v1556 = vpop.f32.mrb[0].mxu0
        %v1557 = vadd.f32 0.0, %v1556
        %v1558 = vpop.f32.mrb[0].mxu0
        %v1559 = vpop.f32.mrb[0].mxu0
        %v1560 = vadd.f32 0.0, %v1559
        %v1561 = vpop.f32.mrb[0].mxu0
        %1562 = vmatprep.mubr.bf16.mxu0 %v414
        %1563 = vmatmul.mubr.bf16.gmra.mrb[0].mxu0 %v390
        %v1564 = vpop.f32.mrb[0].mxu0
        %v1565 = vadd.f32 0.0, %v1564
        %v1566 = vpop.f32.mrb[0].mxu0
        %v1567 = vpop.f32.mrb[0].mxu0
        %v1568 = vadd.f32 0.0, %v1567
        %v1569 = vpop.f32.mrb[0].mxu0
        %1570 = vmatprep.mubr.bf16.mxu0 %v415
        %1571 = vmatmul.mubr.bf16.gmra.mrb[0].mxu0 %v391
        %v1572 = vpop.f32.mrb[0].mxu0
        %v1573 = vadd.f32 0.0, %v1572
        %v1574 = vpop.f32.mrb[0].mxu0
        %v1575 = vpop.f32.mrb[0].mxu0
        %v1576 = vadd.f32 0.0, %v1575
        %v1577 = vpop.f32.mrb[0].mxu0
        %1578 = vmatprep.mubr.bf16.mxu0 %v416
        %1579 = vmatmul.mubr.bf16.gmra.mrb[0].mxu0 %v392
        %v1580 = vpop.f32.mrb[0].mxu0
        %v1581 = vadd.f32 0.0, %v1580
        %v1582 = vpop.f32.mrb[0].mxu0
        %v1583 = vpop.f32.mrb[0].mxu0
        %v1584 = vadd.f32 0.0, %v1583
        %v1585 = vpop.f32.mrb[0].mxu0
        %1586 = vmatprep.mubr.bf16.mxu0 %v417
        %1587 = vmatmul.mubr.bf16.gmra.mrb[0].mxu0 %v393
        %v1588 = vpop.f32.mrb[0].mxu0
        %v1589 = vadd.f32 0.0, %v1588
        %v1590 = vpop.f32.mrb[0].mxu0
        %v1591 = vpop.f32.mrb[0].mxu0
        %v1592 = vadd.f32 0.0, %v1591
        %v1593 = vpop.f32.mrb[0].mxu0
        %1594 = vmatprep.mubr.bf16.mxu0 %v418
        %1595 = vmatmul.mubr.bf16.gmra.mrb[0].mxu0 %v394
        %v1596 = vpop.f32.mrb[0].mxu0
        %v1597 = vadd.f32 0.0, %v1596
        %v1598 = vpop.f32.mrb[0].mxu0
        %v1599 = vpop.f32.mrb[0].mxu0
        %v1600 = vadd.f32 0.0, %v1599
        %v1601 = vpop.f32.mrb[0].mxu0
        %1602 = vmatprep.mubr.bf16.mxu0 %v419
        %1603 = vmatmul.mubr.bf16.gmra.mrb[0].mxu0 %v395
        %v1604 = vpop.f32.mrb[0].mxu0
        %v1605 = vadd.f32 0.0, %v1604
        %v1606 = vpop.f32.mrb[0].mxu0
        %v1607 = vpop.f32.mrb[0].mxu0
        %v1608 = vadd.f32 0.0, %v1607
        %v1609 = vpop.f32.mrb[0].mxu0
        %1610 = vmatprep.mubr.bf16.mxu0 %v420
        %1611 = vmatmul.mubr.bf16.gmra.mrb[0].mxu0 %v396
        %v1612 = vpop.f32.mrb[0].mxu0
        %v1613 = vadd.f32 0.0, %v1612
        %v1614 = vpop.f32.mrb[0].mxu0
        %v1615 = vpop.f32.mrb[0].mxu0
        %v1616 = vadd.f32 0.0, %v1615
        %v1617 = vpop.f32.mrb[0].mxu0
        %1618 = vmatprep.mubr.bf16.mxu0 %v421
        %1619 = vmatmul.mubr.bf16.gmra.mrb[0].mxu0 %v397
        %v1620 = vpop.f32.mrb[0].mxu0
        %v1621 = vadd.f32 0.0, %v1620
        %v1622 = vpop.f32.mrb[0].mxu0
        %v1623 = vpop.f32.mrb[0].mxu0
        %v1624 = vadd.f32 0.0, %v1623
        %v1625 = vpop.f32.mrb[0].mxu0
        %1626 = vmatprep.mubr.bf16.mxu0 %v422
        %1627 = vmatmul.mubr.bf16.gmra.mrb[0].mxu0 %v398
        %v1628 = vpop.f32.mrb[0].mxu0
        %v1629 = vadd.f32 0.0, %v1628
        %v1630 = vpop.f32.mrb[0].mxu0
        %v1631 = vpop.f32.mrb[0].mxu0
        %v1632 = vadd.f32 0.0, %v1631
        %v1633 = vpop.f32.mrb[0].mxu0
        %1634 = vmatprep.mubr.bf16.mxu0 %v423
        %1635 = vmatmul.mubr.bf16.gmra.mrb[0].mxu0 %v399
        %v1636 = vpop.f32.mrb[0].mxu0
        %v1637 = vadd.f32 0.0, %v1636
        %v1638 = vpop.f32.mrb[0].mxu0
        %v1639 = vpop.f32.mrb[0].mxu0
        %v1640 = vadd.f32 0.0, %v1639
        %v1641 = vpop.f32.mrb[0].mxu0
        %1642 = vmatprep.mubr.bf16.mxu0 %v424
        %1643 = vmatmul.mubr.bf16.gmra.mrb[0].mxu0 %v400
        %v1644 = vpop.f32.mrb[0].mxu0
        %v1645 = vadd.f32 0.0, %v1644
        %v1646 = vpop.f32.mrb[0].mxu0
        %v1647 = vpop.f32.mrb[0].mxu0
        %v1648 = vadd.f32 0.0, %v1647
        %v1649 = vpop.f32.mrb[0].mxu0
        %1650 = vmatprep.mubr.bf16.mxu0 %v425
        %1651 = vmatmul.mubr.bf16.gmra.mrb[0].mxu0 %v401
        %v1652 = vpop.f32.mrb[0].mxu0
        %v1653 = vadd.f32 0.0, %v1652
        %v1654 = vpop.f32.mrb[0].mxu0
        %v1655 = vpop.f32.mrb[0].mxu0
        %v1656 = vadd.f32 0.0, %v1655
        %v1657 = vpop.f32.mrb[0].mxu0
        %1658 = vmatprep.mubr.bf16.mxu0 %v426
        %1659 = vmatmul.mubr.bf16.gmra.mrb[0].mxu0 %v402
        %v1660 = vpop.f32.mrb[0].mxu0
        %v1661 = vadd.f32 0.0, %v1660
        %v1662 = vpop.f32.mrb[0].mxu0
        %v1663 = vpop.f32.mrb[0].mxu0
        %v1664 = vadd.f32 0.0, %v1663
        %v1665 = vpop.f32.mrb[0].mxu0
        %1666 = vmatprep.mubr.bf16.mxu0 %v427
        %1667 = vmatmul.mubr.bf16.gmra.mrb[0].mxu0 %v403
        %v1668 = vpop.f32.mrb[0].mxu0
        %v1669 = vadd.f32 0.0, %v1668
        %v1670 = vpop.f32.mrb[0].mxu0
        %v1671 = vpop.f32.mrb[0].mxu0
        %v1672 = vadd.f32 0.0, %v1671
        %v1673 = vpop.f32.mrb[0].mxu0
        %1674 = vmatprep.mubr.bf16.mxu0 %v428
        %1675 = vmatmul.mubr.bf16.gmra.mrb[0].mxu0 %v404
        %v1676 = vpop.f32.mrb[0].mxu0
        %v1677 = vadd.f32 0.0, %v1676
        %v1678 = vpop.f32.mrb[0].mxu0
        %v1679 = vpop.f32.mrb[0].mxu0
        %v1680 = vadd.f32 0.0, %v1679
        %v1681 = vpop.f32.mrb[0].mxu0
        %1682 = vdwg.mxu0
        %1683 = vmatprep.subr.bf16.mxu0 0
        %1684 = vmatpush1.bf16.msra.mxu0 %v818
        %1685 = vmatprep.subr.bf16.mxu0 0
        %1686 = vmatpush1.bf16.msra.mxu0 %v821
        %1687 = vmatprep.subr.bf16.mxu0 0
        %1688 = vmatpush1.bf16.msra.mxu0 %v824
        %1689 = vmatprep.subr.bf16.mxu0 0
        %1690 = vmatpush1.bf16.msra.mxu0 %v827
        %1691 = vmatprep.subr.bf16.mxu0 0
        %1692 = vmatpush1.bf16.msra.mxu0 %v830
        %1693 = vmatprep.subr.bf16.mxu0 0
        %1694 = vmatpush1.bf16.msra.mxu0 %v833
        %1695 = vmatprep.subr.bf16.mxu0 0
        %1696 = vmatpush1.bf16.msra.mxu0 %v836
        %1697 = vmatprep.subr.bf16.mxu0 0
        %1698 = vmatpush1.bf16.msra.mxu0 %v839
        %1699 = vmatprep.subr.bf16.mxu0 0
        %1700 = vmatpush1.bf16.msra.mxu0 0
        %1701 = vmatprep.subr.bf16.mxu0 0
        %1702 = vmatpush1.bf16.msra.mxu0 0
        %1703 = vmatprep.subr.bf16.mxu0 0
        %1704 = vmatpush1.bf16.msra.mxu0 0
        %1705 = vmatprep.subr.bf16.mxu0 0
        %1706 = vmatpush1.bf16.msra.mxu0 0
        %1707 = vmatprep.subr.bf16.mxu0 0
        %1708 = vmatpush1.bf16.msra.mxu0 0
        %1709 = vmatprep.subr.bf16.mxu0 0
        %1710 = vmatpush1.bf16.msra.mxu0 0
        %1711 = vmatprep.subr.bf16.mxu0 0
        %1712 = vmatpush1.bf16.msra.mxu0 0
        %1713 = vmatprep.subr.bf16.mxu0 0
        %1714 = vmatpush1.bf16.msra.mxu0 0
        %1715 = vmatprep.mubr.bf16.mxu0 0
        %1716 = vmatmul.mubr.bf16.gmra.mrb[0].mxu0 %v384
        %v1717 = vpop.f32.mrb[0].mxu0
        %v1718 = vadd.f32 %v1493, %v1717
        %v1719 = vpop.f32.mrb[0].mxu0
        %v1720 = vpop.f32.mrb[0].mxu0
        %v1721 = vadd.f32 %v1496, %v1720
        %v1722 = vpop.f32.mrb[0].mxu0
        %1723 = vmatprep.mubr.bf16.mxu0 0
        %1724 = vmatmul.mubr.bf16.gmra.mrb[0].mxu0 %v385
        %v1725 = vpop.f32.mrb[0].mxu0
        %v1726 = vadd.f32 %v1501, %v1725
        %v1727 = vpop.f32.mrb[0].mxu0
        %v1728 = vpop.f32.mrb[0].mxu0
        %v1729 = vadd.f32 %v1504, %v1728
        %v1730 = vpop.f32.mrb[0].mxu0
        %1731 = vmatprep.mubr.bf16.mxu0 0
        %1732 = vmatmul.mubr.bf16.gmra.mrb[0].mxu0 %v386
        %v1733 = vpop.f32.mrb[0].mxu0
        %v1734 = vadd.f32 %v1509, %v1733
        %v1735 = vpop.f32.mrb[0].mxu0
        %v1736 = vpop.f32.mrb[0].mxu0
        %v1737 = vadd.f32 %v1512, %v1736
        %v1738 = vpop.f32.mrb[0].mxu0
        %1739 = vmatprep.mubr.bf16.mxu0 0
        %1740 = vmatmul.mubr.bf16.gmra.mrb[0].mxu0 %v387
        %v1741 = vpop.f32.mrb[0].mxu0
        %v1742 = vadd.f32 %v1517, %v1741
        %v1743 = vpop.f32.mrb[0].mxu0
        %v1744 = vpop.f32.mrb[0].mxu0
        %v1745 = vadd.f32 %v1520, %v1744
        %v1746 = vpop.f32.mrb[0].mxu0
        %1747 = vmatprep.mubr.bf16.mxu0 0
        %1748 = vmatmul.mubr.bf16.gmra.mrb[0].mxu0 %v388
        %v1749 = vpop.f32.mrb[0].mxu0
        %v1750 = vadd.f32 %v1525, %v1749
        %v1751 = vpop.f32.mrb[0].mxu0
        %v1752 = vpop.f32.mrb[0].mxu0
        %v1753 = vadd.f32 %v1528, %v1752
        %v1754 = vpop.f32.mrb[0].mxu0
        %1755 = vmatprep.mubr.bf16.mxu0 0
        %1756 = vmatmul.mubr.bf16.gmra.mrb[0].mxu0 %v389
        %v1757 = vpop.f32.mrb[0].mxu0
        %v1758 = vadd.f32 %v1533, %v1757
        %v1759 = vpop.f32.mrb[0].mxu0
        %v1760 = vpop.f32.mrb[0].mxu0
        %v1761 = vadd.f32 %v1536, %v1760
        %v1762 = vpop.f32.mrb[0].mxu0
        %1763 = vmatprep.mubr.bf16.mxu0 0
        %1764 = vmatmul.mubr.bf16.gmra.mrb[0].mxu0 %v390
        %v1765 = vpop.f32.mrb[0].mxu0
        %v1766 = vadd.f32 %v1541, %v1765
        %v1767 = vpop.f32.mrb[0].mxu0
        %v1768 = vpop.f32.mrb[0].mxu0
        %v1769 = vadd.f32 %v1544, %v1768
        %v1770 = vpop.f32.mrb[0].mxu0
        %1771 = vmatprep.mubr.bf16.mxu0 0
        %1772 = vmatmul.mubr.bf16.gmra.mrb[0].mxu0 %v391
        %v1773 = vpop.f32.mrb[0].mxu0
        %v1774 = vadd.f32 %v1549, %v1773
        %v1775 = vpop.f32.mrb[0].mxu0
        %v1776 = vpop.f32.mrb[0].mxu0
        %v1777 = vadd.f32 %v1552, %v1776
        %v1778 = vpop.f32.mrb[0].mxu0
        %1779 = vmatprep.mubr.bf16.mxu0 0
        %1780 = vmatmul.mubr.bf16.gmra.mrb[0].mxu0 %v392
        %v1781 = vpop.f32.mrb[0].mxu0
        %v1782 = vadd.f32 %v1557, %v1781
        %v1783 = vpop.f32.mrb[0].mxu0
        %v1784 = vpop.f32.mrb[0].mxu0
        %v1785 = vadd.f32 %v1560, %v1784
        %v1786 = vpop.f32.mrb[0].mxu0
        %1787 = vmatprep.mubr.bf16.mxu0 0
        %1788 = vmatmul.mubr.bf16.gmra.mrb[0].mxu0 %v393
        %v1789 = vpop.f32.mrb[0].mxu0
        %v1790 = vadd.f32 %v1565, %v1789
        %v1791 = vpop.f32.mrb[0].mxu0
        %v1792 = vpop.f32.mrb[0].mxu0
        %v1793 = vadd.f32 %v1568, %v1792
        %v1794 = vpop.f32.mrb[0].mxu0
        %1795 = vmatprep.mubr.bf16.mxu0 0
        %1796 = vmatmul.mubr.bf16.gmra.mrb[0].mxu0 %v394
        %v1797 = vpop.f32.mrb[0].mxu0
        %v1798 = vadd.f32 %v1573, %v1797
        %v1799 = vpop.f32.mrb[0].mxu0
        %v1800 = vpop.f32.mrb[0].mxu0
        %v1801 = vadd.f32 %v1576, %v1800
        %v1802 = vpop.f32.mrb[0].mxu0
        %1803 = vmatprep.mubr.bf16.mxu0 0
        %1804 = vmatmul.mubr.bf16.gmra.mrb[0].mxu0 %v395
        %v1805 = vpop.f32.mrb[0].mxu0
        %v1806 = vadd.f32 %v1581, %v1805
        %v1807 = vpop.f32.mrb[0].mxu0
        %v1808 = vpop.f32.mrb[0].mxu0
        %v1809 = vadd.f32 %v1584, %v1808
        %v1810 = vpop.f32.mrb[0].mxu0
        %1811 = vmatprep.mubr.bf16.mxu0 0
        %1812 = vmatmul.mubr.bf16.gmra.mrb[0].mxu0 %v396
        %v1813 = vpop.f32.mrb[0].mxu0
        %v1814 = vadd.f32 %v1589, %v1813
        %v1815 = vpop.f32.mrb[0].mxu0
        %v1816 = vpop.f32.mrb[0].mxu0
        %v1817 = vadd.f32 %v1592, %v1816
        %v1818 = vpop.f32.mrb[0].mxu0
        %1819 = vmatprep.mubr.bf16.mxu0 0
        %1820 = vmatmul.mubr.bf16.gmra.mrb[0].mxu0 %v397
        %v1821 = vpop.f32.mrb[0].mxu0
        %v1822 = vadd.f32 %v1597, %v1821
        %v1823 = vpop.f32.mrb[0].mxu0
        %v1824 = vpop.f32.mrb[0].mxu0
        %v1825 = vadd.f32 %v1600, %v1824
        %v1826 = vpop.f32.mrb[0].mxu0
        %1827 = vmatprep.mubr.bf16.mxu0 0
        %1828 = vmatmul.mubr.bf16.gmra.mrb[0].mxu0 %v398
        %v1829 = vpop.f32.mrb[0].mxu0
        %v1830 = vadd.f32 %v1605, %v1829
        %v1831 = vpop.f32.mrb[0].mxu0
        %v1832 = vpop.f32.mrb[0].mxu0
        %v1833 = vadd.f32 %v1608, %v1832
        %v1834 = vpop.f32.mrb[0].mxu0
        %1835 = vmatprep.mubr.bf16.mxu0 0
        %1836 = vmatmul.mubr.bf16.gmra.mrb[0].mxu0 %v399
        %v1837 = vpop.f32.mrb[0].mxu0
        %v1838 = vadd.f32 %v1613, %v1837
        %v1839 = vpop.f32.mrb[0].mxu0
        %v1840 = vpop.f32.mrb[0].mxu0
        %v1841 = vadd.f32 %v1616, %v1840
        %v1842 = vpop.f32.mrb[0].mxu0
        %1843 = vmatprep.mubr.bf16.mxu0 0
        %1844 = vmatmul.mubr.bf16.gmra.mrb[0].mxu0 %v400
        %v1845 = vpop.f32.mrb[0].mxu0
        %v1846 = vadd.f32 %v1621, %v1845
        %v1847 = vpop.f32.mrb[0].mxu0
        %v1848 = vpop.f32.mrb[0].mxu0
        %v1849 = vadd.f32 %v1624, %v1848
        %v1850 = vpop.f32.mrb[0].mxu0
        %1851 = vmatprep.mubr.bf16.mxu0 0
        %1852 = vmatmul.mubr.bf16.gmra.mrb[0].mxu0 %v401
        %v1853 = vpop.f32.mrb[0].mxu0
        %v1854 = vadd.f32 %v1629, %v1853
        %v1855 = vpop.f32.mrb[0].mxu0
        %v1856 = vpop.f32.mrb[0].mxu0
        %v1857 = vadd.f32 %v1632, %v1856
        %v1858 = vpop.f32.mrb[0].mxu0
        %1859 = vmatprep.mubr.bf16.mxu0 0
        %1860 = vmatmul.mubr.bf16.gmra.mrb[0].mxu0 %v402
        %v1861 = vpop.f32.mrb[0].mxu0
        %v1862 = vadd.f32 %v1637, %v1861
        %v1863 = vpop.f32.mrb[0].mxu0
        %v1864 = vpop.f32.mrb[0].mxu0
        %v1865 = vadd.f32 %v1640, %v1864
        %v1866 = vpop.f32.mrb[0].mxu0
        %1867 = vmatprep.mubr.bf16.mxu0 0
        %1868 = vmatmul.mubr.bf16.gmra.mrb[0].mxu0 %v403
        %v1869 = vpop.f32.mrb[0].mxu0
        %v1870 = vadd.f32 %v1645, %v1869
        %v1871 = vpop.f32.mrb[0].mxu0
        %v1872 = vpop.f32.mrb[0].mxu0
        %v1873 = vadd.f32 %v1648, %v1872
        %v1874 = vpop.f32.mrb[0].mxu0
        %1875 = vmatprep.mubr.bf16.mxu0 0
        %1876 = vmatmul.mubr.bf16.gmra.mrb[0].mxu0 %v404
        %v1877 = vpop.f32.mrb[0].mxu0
        %v1878 = vadd.f32 %v1653, %v1877
        %v1879 = vpop.f32.mrb[0].mxu0
        %v1880 = vpop.f32.mrb[0].mxu0
        %v1881 = vadd.f32 %v1656, %v1880
        %v1882 = vpop.f32.mrb[0].mxu0
        %1883 = vmatprep.mubr.bf16.mxu0 0
        %1884 = vmatmul.mubr.bf16.gmra.mrb[0].mxu0 %v429
        %v1885 = vpop.f32.mrb[0].mxu0
        %v1886 = vadd.f32 %v1661, %v1885
        %v1887 = vpop.f32.mrb[0].mxu0
        %v1888 = vpop.f32.mrb[0].mxu0
        %v1889 = vadd.f32 %v1664, %v1888
        %v1890 = vpop.f32.mrb[0].mxu0
        %1891 = vmatprep.mubr.bf16.mxu0 0
        %1892 = vmatmul.mubr.bf16.gmra.mrb[0].mxu0 %v430
        %v1893 = vpop.f32.mrb[0].mxu0
        %v1894 = vadd.f32 %v1669, %v1893
        %v1895 = vpop.f32.mrb[0].mxu0
        %v1896 = vpop.f32.mrb[0].mxu0
        %v1897 = vadd.f32 %v1672, %v1896
        %v1898 = vpop.f32.mrb[0].mxu0
        %1899 = vmatprep.mubr.bf16.mxu0 0
        %1900 = vmatmul.mubr.bf16.gmra.mrb[0].mxu0 %v431
        %v1901 = vpop.f32.mrb[0].mxu0
        %v1902 = vadd.f32 %v1677, %v1901
        %v1903 = vpop.f32.mrb[0].mxu0
        %v1904 = vpop.f32.mrb[0].mxu0
        %v1905 = vadd.f32 %v1680, %v1904
        %v1906 = vpop.f32.mrb[0].mxu0
        %1907 = vdwg.mxu0
        %vm1956 = vcmask 1046528
        %v1957 = vrot.slane %v1222, 1
        %v1958 = vrot.slane %v1226, 1
        %v1959 = vsel %vm1956, %v1957, %v1958
        %v1960 = vrot.slane %v1232, 1
        %v1961 = vsel %vm1956, %v1958, %v1960
        %v1962 = vrot.slane %v1236, 1
        %v1963 = vsel %vm1956, %v1960, %v1962
        %v1964 = vrot.slane %v1242, 1
        %v1965 = vsel %vm1956, %v1962, %v1964
        %v1966 = vrot.slane %v1246, 1
        %v1967 = vsel %vm1956, %v1964, %v1966
        %v1968 = vrot.slane %v1252, 1
        %v1969 = vsel %vm1956, %v1966, %v1968
        %v1970 = vrot.slane %v1256, 1
        %v1971 = vsel %vm1956, %v1968, %v1970
        %v1972 = vrot.slane %v1262, 1
        %v1973 = vsel %vm1956, %v1970, %v1972
        %v1974 = vrot.slane %v1266, 1
        %v1975 = vsel %vm1956, %v1972, %v1974
        %v1976 = vrot.slane %v1272, 1
        %v1977 = vsel %vm1956, %v1974, %v1976
        %v1978 = vrot.slane %v1276, 1
        %v1979 = vsel %vm1956, %v1976, %v1978
        %v1980 = vrot.slane %v1282, 1
        %v1981 = vsel %vm1956, %v1978, %v1980
        %v1982 = vrot.slane %v1286, 1
        %v1983 = vsel %vm1956, %v1980, %v1982
        %v1984 = vrot.slane %v1292, 1
        %v1985 = vsel %vm1956, %v1982, %v1984
        %v1986 = vrot.slane %v1296, 1
        %v1987 = vsel %vm1956, %v1984, %v1986
        %v1988 = vrot.slane %v1302, 1
        %v1989 = vsel %vm1956, %v1986, %v1988
        %v1990 = vrot.slane %v1306, 1
        %v1991 = vsel %vm1956, %v1988, %v1990
        %v1992 = vrot.slane %v1312, 1
        %v1993 = vsel %vm1956, %v1990, %v1992
        %v1994 = vrot.slane %v1316, 1
        %v1995 = vsel %vm1956, %v1992, %v1994
        %v1996 = vrot.slane %v1322, 1
        %v1997 = vsel %vm1956, %v1994, %v1996
        %v1998 = vrot.slane %v1326, 1
        %v1999 = vsel %vm1956, %v1996, %v1998
        %v2000 = vrot.slane %v1332, 1
        %v2001 = vsel %vm1956, %v1998, %v2000
        %v2002 = vrot.slane %v1336, 1
        %v2003 = vsel %vm1956, %v2000, %v2002
        %v2004 = vrot.slane %v1342, 1
        %v2005 = vsel %vm1956, %v2002, %v2004
        %v2006 = vrot.slane %v1346, 1
        %v2007 = vsel %vm1956, %v2004, %v2006
        %v2008 = vrot.slane %v1352, 1
        %v2009 = vsel %vm1956, %v2006, %v2008
        %v2010 = vrot.slane %v1356, 1
        %v2011 = vsel %vm1956, %v2008, %v2010
        %v2012 = vrot.slane %v1362, 1
        %v2013 = vsel %vm1956, %v2010, %v2012
        %v2014 = vrot.slane %v1366, 1
        %v2015 = vsel %vm1956, %v2012, %v2014
        %v2016 = vrot.slane %v1372, 1
        %v2017 = vsel %vm1956, %v2014, %v2016
        %v2018 = vrot.slane %v1376, 1
        %v2019 = vsel %vm1956, %v2016, %v2018
        %v2020 = vrot.slane %v1382, 1
        %v2021 = vsel %vm1956, %v2018, %v2020
        %v2022 = vrot.slane %v1386, 1
        %v2023 = vsel %vm1956, %v2020, %v2022
        %v2024 = vrot.slane %v1392, 1
        %v2025 = vsel %vm1956, %v2022, %v2024
        %v2026 = vrot.slane %v1396, 1
        %v2027 = vsel %vm1956, %v2024, %v2026
        %v2028 = vrot.slane %v1402, 1
        %v2029 = vsel %vm1956, %v2026, %v2028
        %v2030 = vrot.slane %v1406, 1
        %v2031 = vsel %vm1956, %v2028, %v2030
        %v2032 = vrot.slane %v1412, 1
        %v2033 = vsel %vm1956, %v2030, %v2032
        %v2034 = vrot.slane %v1416, 1
        %v2035 = vsel %vm1956, %v2032, %v2034
        %v2036 = vrot.slane %v1422, 1
        %v2037 = vsel %vm1956, %v2034, %v2036
        %v2038 = vrot.slane %v1426, 1
        %v2039 = vsel %vm1956, %v2036, %v2038
        %v2040 = vrot.slane %v1432, 1
        %v2041 = vsel %vm1956, %v2038, %v2040
        %v2042 = vrot.slane %v1436, 1
        %v2043 = vsel %vm1956, %v2040, %v2042
        %v2044 = vrot.slane %v1442, 1
        %v2045 = vsel %vm1956, %v2042, %v2044
        %v2046 = vrot.slane %v1446, 1
        %v2047 = vsel %vm1956, %v2044, %v2046
        %v2048 = vrot.slane %v1452, 1
        %v2049 = vsel %vm1956, %v2046, %v2048
        %v2050 = vrot.slane %v1456, 1
        %v2051 = vsel %vm1956, %v2048, %v2050
        %v2101 = vsel %vm1956, %v2050, %v1957
        %v2102 = vadd.f32 %v1220, %v1959
        %v2103 = vadd.f32 %v1224, %v1961
        %v2104 = vadd.f32 %v1230, %v1963
        %v2105 = vadd.f32 %v1234, %v1965
        %v2106 = vadd.f32 %v1240, %v1967
        %v2107 = vadd.f32 %v1244, %v1969
        %v2108 = vadd.f32 %v1250, %v1971
        %v2109 = vadd.f32 %v1254, %v1973
        %v2110 = vadd.f32 %v1260, %v1975
        %v2111 = vadd.f32 %v1264, %v1977
        %v2112 = vadd.f32 %v1270, %v1979
        %v2113 = vadd.f32 %v1274, %v1981
        %v2114 = vadd.f32 %v1280, %v1983
        %v2115 = vadd.f32 %v1284, %v1985
        %v2116 = vadd.f32 %v1290, %v1987
        %v2117 = vadd.f32 %v1294, %v1989
        %v2118 = vadd.f32 %v1300, %v1991
        %v2119 = vadd.f32 %v1304, %v1993
        %v2120 = vadd.f32 %v1310, %v1995
        %v2121 = vadd.f32 %v1314, %v1997
        %v2122 = vadd.f32 %v1320, %v1999
        %v2123 = vadd.f32 %v1324, %v2001
        %v2124 = vadd.f32 %v1330, %v2003
        %v2125 = vadd.f32 %v1334, %v2005
        %v2126 = vadd.f32 %v1340, %v2007
        %v2127 = vadd.f32 %v1344, %v2009
        %v2128 = vadd.f32 %v1350, %v2011
        %v2129 = vadd.f32 %v1354, %v2013
        %v2130 = vadd.f32 %v1360, %v2015
        %v2131 = vadd.f32 %v1364, %v2017
        %v2132 = vadd.f32 %v1370, %v2019
        %v2133 = vadd.f32 %v1374, %v2021
        %v2134 = vadd.f32 %v1380, %v2023
        %v2135 = vadd.f32 %v1384, %v2025
        %v2136 = vadd.f32 %v1390, %v2027
        %v2137 = vadd.f32 %v1394, %v2029
        %v2138 = vadd.f32 %v1400, %v2031
        %v2139 = vadd.f32 %v1404, %v2033
        %v2140 = vadd.f32 %v1410, %v2035
        %v2141 = vadd.f32 %v1414, %v2037
        %v2142 = vadd.f32 %v1420, %v2039
        %v2143 = vadd.f32 %v1424, %v2041
        %v2144 = vadd.f32 %v1430, %v2043
        %v2145 = vadd.f32 %v1434, %v2045
        %v2146 = vadd.f32 %v1440, %v2047
        %v2147 = vadd.f32 %v1444, %v2049
        %v2148 = vadd.f32 %v1450, %v2051
        %v2149 = vadd.f32 %v1454, %v2101
        %vm2198 = vcmask 1045504
        %v2199 = vrot.slane %v1718, 2
        %v2200 = vrot.slane %v1721, 2
        %v2201 = vsel %vm2198, %v2199, %v2200
        %v2202 = vrot.slane %v1726, 2
        %v2203 = vsel %vm2198, %v2200, %v2202
        %v2204 = vrot.slane %v1729, 2
        %v2205 = vsel %vm2198, %v2202, %v2204
        %v2206 = vrot.slane %v1734, 2
        %v2207 = vsel %vm2198, %v2204, %v2206
        %v2208 = vrot.slane %v1737, 2
        %v2209 = vsel %vm2198, %v2206, %v2208
        %v2210 = vrot.slane %v1742, 2
        %v2211 = vsel %vm2198, %v2208, %v2210
        %v2212 = vrot.slane %v1745, 2
        %v2213 = vsel %vm2198, %v2210, %v2212
        %v2214 = vrot.slane %v1750, 2
        %v2215 = vsel %vm2198, %v2212, %v2214
        %v2216 = vrot.slane %v1753, 2
        %v2217 = vsel %vm2198, %v2214, %v2216
        %v2218 = vrot.slane %v1758, 2
        %v2219 = vsel %vm2198, %v2216, %v2218
        %v2220 = vrot.slane %v1761, 2
        %v2221 = vsel %vm2198, %v2218, %v2220
        %v2222 = vrot.slane %v1766, 2
        %v2223 = vsel %vm2198, %v2220, %v2222
        %v2224 = vrot.slane %v1769, 2
        %v2225 = vsel %vm2198, %v2222, %v2224
        %v2226 = vrot.slane %v1774, 2
        %v2227 = vsel %vm2198, %v2224, %v2226
        %v2228 = vrot.slane %v1777, 2
        %v2229 = vsel %vm2198, %v2226, %v2228
        %v2230 = vrot.slane %v1782, 2
        %v2231 = vsel %vm2198, %v2228, %v2230
        %v2232 = vrot.slane %v1785, 2
        %v2233 = vsel %vm2198, %v2230, %v2232
        %v2234 = vrot.slane %v1790, 2
        %v2235 = vsel %vm2198, %v2232, %v2234
        %v2236 = vrot.slane %v1793, 2
        %v2237 = vsel %vm2198, %v2234, %v2236
        %v2238 = vrot.slane %v1798, 2
        %v2239 = vsel %vm2198, %v2236, %v2238
        %v2240 = vrot.slane %v1801, 2
        %v2241 = vsel %vm2198, %v2238, %v2240
        %v2242 = vrot.slane %v1806, 2
        %v2243 = vsel %vm2198, %v2240, %v2242
        %v2244 = vrot.slane %v1809, 2
        %v2245 = vsel %vm2198, %v2242, %v2244
        %v2246 = vrot.slane %v1814, 2
        %v2247 = vsel %vm2198, %v2244, %v2246
        %v2248 = vrot.slane %v1817, 2
        %v2249 = vsel %vm2198, %v2246, %v2248
        %v2250 = vrot.slane %v1822, 2
        %v2251 = vsel %vm2198, %v2248, %v2250
        %v2252 = vrot.slane %v1825, 2
        %v2253 = vsel %vm2198, %v2250, %v2252
        %v2254 = vrot.slane %v1830, 2
        %v2255 = vsel %vm2198, %v2252, %v2254
        %v2256 = vrot.slane %v1833, 2
        %v2257 = vsel %vm2198, %v2254, %v2256
        %v2258 = vrot.slane %v1838, 2
        %v2259 = vsel %vm2198, %v2256, %v2258
        %v2260 = vrot.slane %v1841, 2
        %v2261 = vsel %vm2198, %v2258, %v2260
        %v2262 = vrot.slane %v1846, 2
        %v2263 = vsel %vm2198, %v2260, %v2262
        %v2264 = vrot.slane %v1849, 2
        %v2265 = vsel %vm2198, %v2262, %v2264
        %v2266 = vrot.slane %v1854, 2
        %v2267 = vsel %vm2198, %v2264, %v2266
        %v2268 = vrot.slane %v1857, 2
        %v2269 = vsel %vm2198, %v2266, %v2268
        %v2270 = vrot.slane %v1862, 2
        %v2271 = vsel %vm2198, %v2268, %v2270
        %v2272 = vrot.slane %v1865, 2
        %v2273 = vsel %vm2198, %v2270, %v2272
        %v2274 = vrot.slane %v1870, 2
        %v2275 = vsel %vm2198, %v2272, %v2274
        %v2276 = vrot.slane %v1873, 2
        %v2277 = vsel %vm2198, %v2274, %v2276
        %v2278 = vrot.slane %v1878, 2
        %v2279 = vsel %vm2198, %v2276, %v2278
        %v2280 = vrot.slane %v1881, 2
        %v2281 = vsel %vm2198, %v2278, %v2280
        %v2282 = vrot.slane %v1886, 2
        %v2283 = vsel %vm2198, %v2280, %v2282
        %v2284 = vrot.slane %v1889, 2
        %v2285 = vsel %vm2198, %v2282, %v2284
        %v2286 = vrot.slane %v1894, 2
        %v2287 = vsel %vm2198, %v2284, %v2286
        %v2288 = vrot.slane %v1897, 2
        %v2289 = vsel %vm2198, %v2286, %v2288
        %v2290 = vrot.slane %v1902, 2
        %v2291 = vsel %vm2198, %v2288, %v2290
        %v2292 = vrot.slane %v1905, 2
        %v2293 = vsel %vm2198, %v2290, %v2292
        %v2343 = vsel %vm2198, %v2292, %v2199
        %v2344 = vadd.f32 %v2102, %v2201
        %v2345 = vadd.f32 %v2103, %v2203
        %v2346 = vadd.f32 %v2104, %v2205
        %v2347 = vadd.f32 %v2105, %v2207
        %v2348 = vadd.f32 %v2106, %v2209
        %v2349 = vadd.f32 %v2107, %v2211
        %v2350 = vadd.f32 %v2108, %v2213
        %v2351 = vadd.f32 %v2109, %v2215
        %v2352 = vadd.f32 %v2110, %v2217
        %v2353 = vadd.f32 %v2111, %v2219
        %v2354 = vadd.f32 %v2112, %v2221
        %v2355 = vadd.f32 %v2113, %v2223
        %v2356 = vadd.f32 %v2114, %v2225
        %v2357 = vadd.f32 %v2115, %v2227
        %v2358 = vadd.f32 %v2116, %v2229
        %v2359 = vadd.f32 %v2117, %v2231
        %v2360 = vadd.f32 %v2118, %v2233
        %v2361 = vadd.f32 %v2119, %v2235
        %v2362 = vadd.f32 %v2120, %v2237
        %v2363 = vadd.f32 %v2121, %v2239
        %v2364 = vadd.f32 %v2122, %v2241
        %v2365 = vadd.f32 %v2123, %v2243
        %v2366 = vadd.f32 %v2124, %v2245
        %v2367 = vadd.f32 %v2125, %v2247
        %v2368 = vadd.f32 %v2126, %v2249
        %v2369 = vadd.f32 %v2127, %v2251
        %v2370 = vadd.f32 %v2128, %v2253
        %v2371 = vadd.f32 %v2129, %v2255
        %v2372 = vadd.f32 %v2130, %v2257
        %v2373 = vadd.f32 %v2131, %v2259
        %v2374 = vadd.f32 %v2132, %v2261
        %v2375 = vadd.f32 %v2133, %v2263
        %v2376 = vadd.f32 %v2134, %v2265
        %v2377 = vadd.f32 %v2135, %v2267
        %v2378 = vadd.f32 %v2136, %v2269
        %v2379 = vadd.f32 %v2137, %v2271
        %v2380 = vadd.f32 %v2138, %v2273
        %v2381 = vadd.f32 %v2139, %v2275
        %v2382 = vadd.f32 %v2140, %v2277
        %v2383 = vadd.f32 %v2141, %v2279
        %v2384 = vadd.f32 %v2142, %v2281
        %v2385 = vadd.f32 %v2143, %v2283
        %v2386 = vadd.f32 %v2144, %v2285
        %v2387 = vadd.f32 %v2145, %v2287
        %v2388 = vadd.f32 %v2146, %v2289
        %v2389 = vadd.f32 %v2147, %v2291
        %v2390 = vadd.f32 %v2148, %v2293
        %v2391 = vadd.f32 %v2149, %v2343
        %v2392 = vld [vmem:[%s2] sm:$0x1]
        %v2394 = vlaneseq
        %v2395 = vshrl.u32 %v2394, 7
        %v2396 = vsub.s32 0, %v2395
        %v2397 = vrot.slane %v2392, %v2396
        %v2399 = vmul.f32 %v2344, %v2397
        %v2400 = vmul.f32 %v2345, %v2397
        %v2401 = vmul.f32 %v2346, %v2397
        %v2402 = vmul.f32 %v2347, %v2397
        %v2403 = vmul.f32 %v2348, %v2397
        %v2404 = vmul.f32 %v2349, %v2397
        %v2405 = vmul.f32 %v2350, %v2397
        %v2406 = vmul.f32 %v2351, %v2397
        %v2407 = vmul.f32 %v2352, %v2397
        %v2408 = vmul.f32 %v2353, %v2397
        %v2409 = vmul.f32 %v2354, %v2397
        %v2410 = vmul.f32 %v2355, %v2397
        %v2411 = vmul.f32 %v2356, %v2397
        %v2412 = vmul.f32 %v2357, %v2397
        %v2413 = vmul.f32 %v2358, %v2397
        %v2414 = vmul.f32 %v2359, %v2397
        %v2415 = vmul.f32 %v2360, %v2397
        %v2416 = vmul.f32 %v2361, %v2397
        %v2417 = vmul.f32 %v2362, %v2397
        %v2418 = vmul.f32 %v2363, %v2397
        %v2419 = vmul.f32 %v2364, %v2397
        %v2420 = vmul.f32 %v2365, %v2397
        %v2421 = vmul.f32 %v2366, %v2397
        %v2422 = vmul.f32 %v2367, %v2397
        %v2423 = vmul.f32 %v2368, %v2397
        %v2424 = vmul.f32 %v2369, %v2397
        %v2425 = vmul.f32 %v2370, %v2397
        %v2426 = vmul.f32 %v2371, %v2397
        %v2427 = vmul.f32 %v2372, %v2397
        %v2428 = vmul.f32 %v2373, %v2397
        %v2429 = vmul.f32 %v2374, %v2397
        %v2430 = vmul.f32 %v2375, %v2397
        %v2431 = vmul.f32 %v2376, %v2397
        %v2432 = vmul.f32 %v2377, %v2397
        %v2433 = vmul.f32 %v2378, %v2397
        %v2434 = vmul.f32 %v2379, %v2397
        %v2435 = vmul.f32 %v2380, %v2397
        %v2436 = vmul.f32 %v2381, %v2397
        %v2437 = vmul.f32 %v2382, %v2397
        %v2438 = vmul.f32 %v2383, %v2397
        %v2439 = vmul.f32 %v2384, %v2397
        %v2440 = vmul.f32 %v2385, %v2397
        %v2441 = vmul.f32 %v2386, %v2397
        %v2442 = vmul.f32 %v2387, %v2397
        %v2443 = vmul.f32 %v2388, %v2397
        %v2444 = vmul.f32 %v2389, %v2397
        %v2445 = vmul.f32 %v2390, %v2397
        %v2446 = vmul.f32 %v2391, %v2397
        %v2447 = vld [vmem:[%s3] sm:$0x1]
        %v2449 = vlaneseq
        %v2450 = vshrl.u32 %v2449, 7
        %v2451 = vsub.s32 0, %v2450
        %v2452 = vrot.slane %v2447, %v2451
        %v2454 = vadd.f32 %v2399, %v2452
        %v2455 = vadd.f32 %v2400, %v2452
        %v2456 = vadd.f32 %v2401, %v2452
        %v2457 = vadd.f32 %v2402, %v2452
        %v2458 = vadd.f32 %v2403, %v2452
        %v2459 = vadd.f32 %v2404, %v2452
        %v2460 = vadd.f32 %v2405, %v2452
        %v2461 = vadd.f32 %v2406, %v2452
        %v2462 = vadd.f32 %v2407, %v2452
        %v2463 = vadd.f32 %v2408, %v2452
        %v2464 = vadd.f32 %v2409, %v2452
        %v2465 = vadd.f32 %v2410, %v2452
        %v2466 = vadd.f32 %v2411, %v2452
        %v2467 = vadd.f32 %v2412, %v2452
        %v2468 = vadd.f32 %v2413, %v2452
        %v2469 = vadd.f32 %v2414, %v2452
        %v2470 = vadd.f32 %v2415, %v2452
        %v2471 = vadd.f32 %v2416, %v2452
        %v2472 = vadd.f32 %v2417, %v2452
        %v2473 = vadd.f32 %v2418, %v2452
        %v2474 = vadd.f32 %v2419, %v2452
        %v2475 = vadd.f32 %v2420, %v2452
        %v2476 = vadd.f32 %v2421, %v2452
        %v2477 = vadd.f32 %v2422, %v2452
        %v2478 = vadd.f32 %v2423, %v2452
        %v2479 = vadd.f32 %v2424, %v2452
        %v2480 = vadd.f32 %v2425, %v2452
        %v2481 = vadd.f32 %v2426, %v2452
        %v2482 = vadd.f32 %v2427, %v2452
        %v2483 = vadd.f32 %v2428, %v2452
        %v2484 = vadd.f32 %v2429, %v2452
        %v2485 = vadd.f32 %v2430, %v2452
        %v2486 = vadd.f32 %v2431, %v2452
        %v2487 = vadd.f32 %v2432, %v2452
        %v2488 = vadd.f32 %v2433, %v2452
        %v2489 = vadd.f32 %v2434, %v2452
        %v2490 = vadd.f32 %v2435, %v2452
        %v2491 = vadd.f32 %v2436, %v2452
        %v2492 = vadd.f32 %v2437, %v2452
        %v2493 = vadd.f32 %v2438, %v2452
        %v2494 = vadd.f32 %v2439, %v2452
        %v2495 = vadd.f32 %v2440, %v2452
        %v2496 = vadd.f32 %v2441, %v2452
        %v2497 = vadd.f32 %v2442, %v2452
        %v2498 = vadd.f32 %v2443, %v2452
        %v2499 = vadd.f32 %v2444, %v2452
        %v2500 = vadd.f32 %v2445, %v2452
        %v2501 = vadd.f32 %v2446, %v2452
        %v2502 = vmax.f32 %v2454, 0.0
        %v2503 = vmax.f32 %v2455, 0.0
        %v2504 = vmax.f32 %v2456, 0.0
        %v2505 = vmax.f32 %v2457, 0.0
        %v2506 = vmax.f32 %v2458, 0.0
        %v2507 = vmax.f32 %v2459, 0.0
        %v2508 = vmax.f32 %v2460, 0.0
        %v2509 = vmax.f32 %v2461, 0.0
        %v2510 = vmax.f32 %v2462, 0.0
        %v2511 = vmax.f32 %v2463, 0.0
        %v2512 = vmax.f32 %v2464, 0.0
        %v2513 = vmax.f32 %v2465, 0.0
        %v2514 = vmax.f32 %v2466, 0.0
        %v2515 = vmax.f32 %v2467, 0.0
        %v2516 = vmax.f32 %v2468, 0.0
        %v2517 = vmax.f32 %v2469, 0.0
        %v2518 = vmax.f32 %v2470, 0.0
        %v2519 = vmax.f32 %v2471, 0.0
        %v2520 = vmax.f32 %v2472, 0.0
        %v2521 = vmax.f32 %v2473, 0.0
        %v2522 = vmax.f32 %v2474, 0.0
        %v2523 = vmax.f32 %v2475, 0.0
        %v2524 = vmax.f32 %v2476, 0.0
        %v2525 = vmax.f32 %v2477, 0.0
        %v2526 = vmax.f32 %v2478, 0.0
        %v2527 = vmax.f32 %v2479, 0.0
        %v2528 = vmax.f32 %v2480, 0.0
        %v2529 = vmax.f32 %v2481, 0.0
        %v2530 = vmax.f32 %v2482, 0.0
        %v2531 = vmax.f32 %v2483, 0.0
        %v2532 = vmax.f32 %v2484, 0.0
        %v2533 = vmax.f32 %v2485, 0.0
        %v2534 = vmax.f32 %v2486, 0.0
        %v2535 = vmax.f32 %v2487, 0.0
        %v2536 = vmax.f32 %v2488, 0.0
        %v2537 = vmax.f32 %v2489, 0.0
        %v2538 = vmax.f32 %v2490, 0.0
        %v2539 = vmax.f32 %v2491, 0.0
        %v2540 = vmax.f32 %v2492, 0.0
        %v2541 = vmax.f32 %v2493, 0.0
        %v2542 = vmax.f32 %v2494, 0.0
        %v2543 = vmax.f32 %v2495, 0.0
        %v2544 = vmax.f32 %v2496, 0.0
        %v2545 = vmax.f32 %v2497, 0.0
        %v2546 = vmax.f32 %v2498, 0.0
        %v2547 = vmax.f32 %v2499, 0.0
        %v2548 = vmax.f32 %v2500, 0.0
        %v2549 = vmax.f32 %v2501, 0.0
        %v2550 = vlaneseq
        %v2551 = vshrl.u32 %v2550, 7
        %v2552 = vadd.s32 %v2551, 8
        %v2553 = vadd.s32 %v2551, 16
        %vm2554 = vcmp.ge.s32.totalorder %v2551, 1
        %vm2555 = vcmp.ge.s32.totalorder %v2552, 1
        %vm2556 = vcmp.ge.s32.totalorder %v2553, 1
        %vm2557 = vcmp.le.s32.totalorder %v2551, 16
        %vm2558 = vcmp.le.s32.totalorder %v2552, 16
        %vm2559 = vcmp.le.s32.totalorder %v2553, 16
        %vm2560 = vmand %vm2554, %vm2557
        %vm2561 = vmand %vm2555, %vm2558
        %vm2562 = vmand %vm2556, %vm2559
        %v2563 = vsel %vm2560, %v2502, 0.0
        %v2564 = vsel %vm2561, %v2503, 0.0
        %v2565 = vsel %vm2562, %v2504, 0.0
        %v2566 = vsel %vm2560, %v2505, 0.0
        %v2567 = vsel %vm2561, %v2506, 0.0
        %v2568 = vsel %vm2562, %v2507, 0.0
        %v2569 = vsel %vm2560, %v2508, 0.0
        %v2570 = vsel %vm2561, %v2509, 0.0
        %v2571 = vsel %vm2562, %v2510, 0.0
        %v2572 = vsel %vm2560, %v2511, 0.0
        %v2573 = vsel %vm2561, %v2512, 0.0
        %v2574 = vsel %vm2562, %v2513, 0.0
        %v2575 = vsel %vm2560, %v2514, 0.0
        %v2576 = vsel %vm2561, %v2515, 0.0
        %v2577 = vsel %vm2562, %v2516, 0.0
        %v2578 = vsel %vm2560, %v2517, 0.0
        %v2579 = vsel %vm2561, %v2518, 0.0
        %v2580 = vsel %vm2562, %v2519, 0.0
        %v2581 = vsel %vm2560, %v2520, 0.0
        %v2582 = vsel %vm2561, %v2521, 0.0
        %v2583 = vsel %vm2562, %v2522, 0.0
        %v2584 = vsel %vm2560, %v2523, 0.0
        %v2585 = vsel %vm2561, %v2524, 0.0
        %v2586 = vsel %vm2562, %v2525, 0.0
        %v2587 = vsel %vm2560, %v2526, 0.0
        %v2588 = vsel %vm2561, %v2527, 0.0
        %v2589 = vsel %vm2562, %v2528, 0.0
        %v2590 = vsel %vm2560, %v2529, 0.0
        %v2591 = vsel %vm2561, %v2530, 0.0
        %v2592 = vsel %vm2562, %v2531, 0.0
        %v2593 = vsel %vm2560, %v2532, 0.0
        %v2594 = vsel %vm2561, %v2533, 0.0
        %v2595 = vsel %vm2562, %v2534, 0.0
        %v2596 = vsel %vm2560, %v2535, 0.0
        %v2597 = vsel %vm2561, %v2536, 0.0
        %v2598 = vsel %vm2562, %v2537, 0.0
        %v2599 = vsel %vm2560, %v2538, 0.0
        %v2600 = vsel %vm2561, %v2539, 0.0
        %v2601 = vsel %vm2562, %v2540, 0.0
        %v2602 = vsel %vm2560, %v2541, 0.0
        %v2603 = vsel %vm2561, %v2542, 0.0
        %v2604 = vsel %vm2562, %v2543, 0.0
        %v2605 = vsel %vm2560, %v2544, 0.0
        %v2606 = vsel %vm2561, %v2545, 0.0
        %v2607 = vsel %vm2562, %v2546, 0.0
        %v2608 = vsel %vm2560, %v2547, 0.0
        %v2609 = vsel %vm2561, %v2548, 0.0
        %v2610 = vsel %vm2562, %v2549, 0.0
        %v2611 = vpack.c.bf16 0.0, 0.0
        %v2612 = vpack.c.bf16 %v2563, 0.0
        %v2613 = vpack.c.bf16 %v2565, %v2564
        %v2614 = vpack.c.bf16 %v2567, %v2566
        %v2615 = vpack.c.bf16 %v2569, %v2568
        %v2616 = vpack.c.bf16 %v2571, %v2570
        %v2617 = vpack.c.bf16 %v2573, %v2572
        %v2618 = vpack.c.bf16 %v2575, %v2574
        %v2619 = vpack.c.bf16 %v2577, %v2576
        %v2620 = vpack.c.bf16 %v2579, %v2578
        %v2621 = vpack.c.bf16 %v2581, %v2580
        %v2622 = vpack.c.bf16 %v2583, %v2582
        %v2623 = vpack.c.bf16 %v2585, %v2584
        %v2624 = vpack.c.bf16 %v2587, %v2586
        %v2625 = vpack.c.bf16 %v2589, %v2588
        %v2626 = vpack.c.bf16 %v2591, %v2590
        %v2627 = vpack.c.bf16 %v2593, %v2592
        %v2628 = vpack.c.bf16 %v2595, %v2594
        %v2629 = vpack.c.bf16 %v2597, %v2596
        %v2630 = vpack.c.bf16 %v2599, %v2598
        %v2631 = vpack.c.bf16 %v2601, %v2600
        %v2632 = vpack.c.bf16 %v2603, %v2602
        %v2633 = vpack.c.bf16 %v2605, %v2604
        %v2634 = vpack.c.bf16 %v2607, %v2606
        %v2635 = vpack.c.bf16 %v2564, %v2563
        %v2636 = vpack.c.bf16 %v2566, %v2565
        %v2637 = vpack.c.bf16 %v2568, %v2567
        %v2638 = vpack.c.bf16 %v2570, %v2569
        %v2639 = vpack.c.bf16 %v2572, %v2571
        %v2640 = vpack.c.bf16 %v2574, %v2573
        %v2641 = vpack.c.bf16 %v2576, %v2575
        %v2642 = vpack.c.bf16 %v2578, %v2577
        %v2643 = vpack.c.bf16 %v2580, %v2579
        %v2644 = vpack.c.bf16 %v2582, %v2581
        %v2645 = vpack.c.bf16 %v2584, %v2583
        %v2646 = vpack.c.bf16 %v2586, %v2585
        %v2647 = vpack.c.bf16 %v2588, %v2587
        %v2648 = vpack.c.bf16 %v2590, %v2589
        %v2649 = vpack.c.bf16 %v2592, %v2591
        %v2650 = vpack.c.bf16 %v2594, %v2593
        %v2651 = vpack.c.bf16 %v2596, %v2595
        %v2652 = vpack.c.bf16 %v2598, %v2597
        %v2653 = vpack.c.bf16 %v2600, %v2599
        %v2654 = vpack.c.bf16 %v2602, %v2601
        %v2655 = vpack.c.bf16 %v2604, %v2603
        %v2656 = vpack.c.bf16 %v2606, %v2605
        %v2657 = vpack.c.bf16 %v2608, %v2607
        %v2658 = vpack.c.bf16 %v2610, %v2609
        %v2659 = vpack.c.bf16 %v2609, %v2608
        %v2660 = vpack.c.bf16 0.0, %v2610
        %v2661 = vld [vmem:[#allocation7] sm:$0xff]
        %v2662 = vld [vmem:[#allocation7 + $0x8] sm:$0xf]
        %v2663 = vld [vmem:[#allocation7 + $0xc] sm:$0xff]
        %v2664 = vld [vmem:[#allocation7 + $0x14] sm:$0xf]
        %v2665 = vld [vmem:[#allocation7 + $0x18] sm:$0xff]
        %v2666 = vld [vmem:[#allocation7 + $0x20] sm:$0xf]
        %v2667 = vld [vmem:[#allocation7 + $0x24] sm:$0xff]
        %v2668 = vld [vmem:[#allocation7 + $0x2c] sm:$0xf]
        %v2669 = vld [vmem:[#allocation7 + $0x30] sm:$0xff]
        %v2670 = vld [vmem:[#allocation7 + $0x38] sm:$0xf]
        %v2671 = vld [vmem:[#allocation7 + $0x3c] sm:$0xff]
        %v2672 = vld [vmem:[#allocation7 + $0x44] sm:$0xf]
        %v2673 = vld [vmem:[#allocation7 + $0x48] sm:$0xff]
        %v2674 = vld [vmem:[#allocation7 + $0x50] sm:$0xf]
        %v2675 = vld [vmem:[#allocation7 + $0x54] sm:$0xff]
        %v2676 = vld [vmem:[#allocation7 + $0x5c] sm:$0xf]
        %v2677 = vld [vmem:[#allocation7 + $0x60] sm:$0xff]
        %v2678 = vld [vmem:[#allocation7 + $0x68] sm:$0xf]
        %v2679 = vld [vmem:[#allocation7 + $0x6c] sm:$0xff]
        %v2680 = vld [vmem:[#allocation7 + $0x74] sm:$0xf]
        %v2681 = vld [vmem:[#allocation7 + $0x78] sm:$0xff]
        %v2682 = vld [vmem:[#allocation7 + $0x80] sm:$0xf]
        %v2683 = vld [vmem:[#allocation7 + $0x84] sm:$0xff]
        %v2684 = vld [vmem:[#allocation7 + $0x8c] sm:$0xf]
        %v2685 = vld [vmem:[#allocation7 + $0x90] sm:$0xff]
        %v2686 = vld [vmem:[#allocation7 + $0x98] sm:$0xf]
        %v2687 = vld [vmem:[#allocation7 + $0x9c] sm:$0xff]
        %v2688 = vld [vmem:[#allocation7 + $0xa4] sm:$0xf]
        %v2689 = vld [vmem:[#allocation7 + $0xa8] sm:$0xff]
        %v2690 = vld [vmem:[#allocation7 + $0xb0] sm:$0xf]
        %v2691 = vld [vmem:[#allocation7 + $0xb4] sm:$0xff]
        %v2692 = vld [vmem:[#allocation7 + $0xbc] sm:$0xf]
        %v2693 = vld [vmem:[#allocation7 + $0xc0] sm:$0xff]
        %v2694 = vld [vmem:[#allocation7 + $0xc8] sm:$0xf]
        %v2695 = vld [vmem:[#allocation7 + $0xcc] sm:$0xff]
        %v2696 = vld [vmem:[#allocation7 + $0xd4] sm:$0xf]
        %v2697 = vld [vmem:[#allocation7 + $0xd8] sm:$0xff]
        %v2698 = vld [vmem:[#allocation7 + $0xe0] sm:$0xf]
        %v2699 = vld [vmem:[#allocation7 + $0xe4] sm:$0xff]
        %v2700 = vld [vmem:[#allocation7 + $0xec] sm:$0xf]
        %v2701 = vld [vmem:[#allocation7 + $0xf0] sm:$0xff]
        %v2702 = vld [vmem:[#allocation7 + $0xf8] sm:$0xf]
        %v2703 = vld [vmem:[#allocation7 + $0xfc] sm:$0xff]
        %v2704 = vld [vmem:[#allocation7 + $0x104] sm:$0xf]
        %v2705 = vld [vmem:[#allocation7 + $0x108] sm:$0xff]
        %v2706 = vld [vmem:[#allocation7 + $0x110] sm:$0xf]
        %v2707 = vld [vmem:[#allocation7 + $0x114] sm:$0xff]
        %v2708 = vld [vmem:[#allocation7 + $0x11c] sm:$0xf]
        %v2709 = vld [vmem:[#allocation7 + $0x120] sm:$0xff]
        %v2710 = vld [vmem:[#allocation7 + $0x128] sm:$0xf]
        %v2711 = vld [vmem:[#allocation7 + $0x12c] sm:$0xff]
        %v2712 = vld [vmem:[#allocation7 + $0x134] sm:$0xf]
        %v2713 = vld [vmem:[#allocation7 + $0x138] sm:$0xff]
        %v2714 = vld [vmem:[#allocation7 + $0x140] sm:$0xf]
        %v2715 = vld [vmem:[#allocation7 + $0x144] sm:$0xff]
        %v2716 = vld [vmem:[#allocation7 + $0x14c] sm:$0xf]
        %v2717 = vld [vmem:[#allocation7 + $0x150] sm:$0xff]
        %v2718 = vld [vmem:[#allocation7 + $0x158] sm:$0xf]
        %v2719 = vld [vmem:[#allocation7 + $0x15c] sm:$0xff]
        %v2720 = vld [vmem:[#allocation7 + $0x164] sm:$0xf]
        %v2721 = vld [vmem:[#allocation7 + $0x168] sm:$0xff]
        %v2722 = vld [vmem:[#allocation7 + $0x170] sm:$0xf]
        %v2723 = vld [vmem:[#allocation7 + $0x174] sm:$0xff]
        %v2724 = vld [vmem:[#allocation7 + $0x17c] sm:$0xf]
        %v2725 = vld [vmem:[#allocation7 + $0x180] sm:$0xff]
        %v2726 = vld [vmem:[#allocation7 + $0x188] sm:$0xf]
        %v2727 = vld [vmem:[#allocation7 + $0x18c] sm:$0xff]
        %v2728 = vld [vmem:[#allocation7 + $0x194] sm:$0xf]
        %v2729 = vld [vmem:[#allocation7 + $0x198] sm:$0xff]
        %v2730 = vld [vmem:[#allocation7 + $0x1a0] sm:$0xf]
        %v2731 = vld [vmem:[#allocation7 + $0x1a4] sm:$0xff]
        %v2732 = vld [vmem:[#allocation7 + $0x1ac] sm:$0xf]
        %v2733 = vld [vmem:[#allocation7 + $0x1b0] sm:$0xff]
        %v2734 = vld [vmem:[#allocation7 + $0x1b8] sm:$0xf]
        %v2735 = vld [vmem:[#allocation7 + $0x1bc] sm:$0xff]
        %v2736 = vld [vmem:[#allocation7 + $0x1c4] sm:$0xf]
        %v2737 = vld [vmem:[#allocation7 + $0x1c8] sm:$0xff]
        %v2738 = vld [vmem:[#allocation7 + $0x1d0] sm:$0xf]
        %v2739 = vld [vmem:[#allocation7 + $0x1d4] sm:$0xff]
        %v2740 = vld [vmem:[#allocation7 + $0x1dc] sm:$0xf]
        %v2741 = vld [vmem:[#allocation7 + $0x1e0] sm:$0xff]
        %v2742 = vld [vmem:[#allocation7 + $0x1e8] sm:$0xf]
        %v2743 = vld [vmem:[#allocation7 + $0x1ec] sm:$0xff]
        %v2744 = vld [vmem:[#allocation7 + $0x1f4] sm:$0xf]
        %v2745 = vld [vmem:[#allocation7 + $0x1f8] sm:$0xff]
        %v2746 = vld [vmem:[#allocation7 + $0x200] sm:$0xf]
        %v2747 = vld [vmem:[#allocation7 + $0x204] sm:$0xff]
        %v2748 = vld [vmem:[#allocation7 + $0x20c] sm:$0xf]
        %v2749 = vld [vmem:[#allocation7 + $0x210] sm:$0xff]
        %v2750 = vld [vmem:[#allocation7 + $0x218] sm:$0xf]
        %v2751 = vld [vmem:[#allocation7 + $0x21c] sm:$0xff]
        %v2752 = vld [vmem:[#allocation7 + $0x224] sm:$0xf]
        %v2753 = vld [vmem:[#allocation7 + $0x228] sm:$0xff]
        %v2754 = vld [vmem:[#allocation7 + $0x230] sm:$0xf]
        %v2755 = vld [vmem:[#allocation7 + $0x234] sm:$0xff]
        %v2756 = vld [vmem:[#allocation7 + $0x23c] sm:$0xf]
        %v2853 = vunpack.c.l.b16 %v2661
        %v2854 = vunpack.c.h.b16 %v2661
        %v2855 = vunpack.c.l.b16 %v2662
        %v2856 = vunpack.c.l.b16 %v2663
        %v2857 = vunpack.c.h.b16 %v2663
        %v2858 = vunpack.c.l.b16 %v2664
        %v2859 = vunpack.c.l.b16 %v2665
        %v2860 = vunpack.c.h.b16 %v2665
        %v2861 = vunpack.c.l.b16 %v2666
        %v2862 = vunpack.c.l.b16 %v2667
        %v2863 = vunpack.c.h.b16 %v2667
        %v2864 = vunpack.c.l.b16 %v2668
        %v2865 = vunpack.c.l.b16 %v2669
        %v2866 = vunpack.c.h.b16 %v2669
        %v2867 = vunpack.c.l.b16 %v2670
        %v2868 = vunpack.c.l.b16 %v2671
        %v2869 = vunpack.c.h.b16 %v2671
        %v2870 = vunpack.c.l.b16 %v2672
        %v2871 = vunpack.c.l.b16 %v2673
        %v2872 = vunpack.c.h.b16 %v2673
        %v2873 = vunpack.c.l.b16 %v2674
        %v2874 = vunpack.c.l.b16 %v2675
        %v2875 = vunpack.c.h.b16 %v2675
        %v2876 = vunpack.c.l.b16 %v2676
        %v2877 = vunpack.c.l.b16 %v2677
        %v2878 = vunpack.c.h.b16 %v2677
        %v2879 = vunpack.c.l.b16 %v2678
        %v2880 = vunpack.c.l.b16 %v2679
        %v2881 = vunpack.c.h.b16 %v2679
        %v2882 = vunpack.c.l.b16 %v2680
        %v2883 = vunpack.c.l.b16 %v2681
        %v2884 = vunpack.c.h.b16 %v2681
        %v2885 = vunpack.c.l.b16 %v2682
        %v2886 = vunpack.c.l.b16 %v2683
        %v2887 = vunpack.c.h.b16 %v2683
        %v2888 = vunpack.c.l.b16 %v2684
        %v2889 = vunpack.c.l.b16 %v2685
        %v2890 = vunpack.c.h.b16 %v2685
        %v2891 = vunpack.c.l.b16 %v2686
        %v2892 = vunpack.c.l.b16 %v2687
        %v2893 = vunpack.c.h.b16 %v2687
        %v2894 = vunpack.c.l.b16 %v2688
        %v2895 = vunpack.c.l.b16 %v2689
        %v2896 = vunpack.c.h.b16 %v2689
        %v2897 = vunpack.c.l.b16 %v2690
        %v2898 = vunpack.c.l.b16 %v2691
        %v2899 = vunpack.c.h.b16 %v2691
        %v2900 = vunpack.c.l.b16 %v2692
        %v2901 = vunpack.c.l.b16 %v2693
        %v2902 = vunpack.c.h.b16 %v2693
        %v2903 = vunpack.c.l.b16 %v2694
        %v2904 = vunpack.c.l.b16 %v2695
        %v2905 = vunpack.c.h.b16 %v2695
        %v2906 = vunpack.c.l.b16 %v2696
        %v2907 = vunpack.c.l.b16 %v2697
        %v2908 = vunpack.c.h.b16 %v2697
        %v2909 = vunpack.c.l.b16 %v2698
        %v2910 = vunpack.c.l.b16 %v2699
        %v2911 = vunpack.c.h.b16 %v2699
        %v2912 = vunpack.c.l.b16 %v2700
        %v2913 = vunpack.c.l.b16 %v2701
        %v2914 = vunpack.c.h.b16 %v2701
        %v2915 = vunpack.c.l.b16 %v2702
        %v2916 = vunpack.c.l.b16 %v2703
        %v2917 = vunpack.c.h.b16 %v2703
        %v2918 = vunpack.c.l.b16 %v2704
        %v2919 = vunpack.c.l.b16 %v2705
        %v2920 = vunpack.c.h.b16 %v2705
        %v2921 = vunpack.c.l.b16 %v2706
        %v2922 = vunpack.c.l.b16 %v2707
        %v2923 = vunpack.c.h.b16 %v2707
        %v2924 = vunpack.c.l.b16 %v2708
        %v2925 = vunpack.c.l.b16 %v2709
        %v2926 = vunpack.c.h.b16 %v2709
        %v2927 = vunpack.c.l.b16 %v2710
        %v2928 = vunpack.c.l.b16 %v2711
        %v2929 = vunpack.c.h.b16 %v2711
        %v2930 = vunpack.c.l.b16 %v2712
        %v2931 = vunpack.c.l.b16 %v2713
        %v2932 = vunpack.c.h.b16 %v2713
        %v2933 = vunpack.c.l.b16 %v2714
        %v2934 = vunpack.c.l.b16 %v2715
        %v2935 = vunpack.c.h.b16 %v2715
        %v2936 = vunpack.c.l.b16 %v2716
        %v2937 = vunpack.c.l.b16 %v2717
        %v2938 = vunpack.c.h.b16 %v2717
        %v2939 = vunpack.c.l.b16 %v2718
        %v2940 = vunpack.c.l.b16 %v2719
        %v2941 = vunpack.c.h.b16 %v2719
        %v2942 = vunpack.c.l.b16 %v2720
        %v2943 = vunpack.c.l.b16 %v2721
        %v2944 = vunpack.c.h.b16 %v2721
        %v2945 = vunpack.c.l.b16 %v2722
        %v2946 = vunpack.c.l.b16 %v2723
        %v2947 = vunpack.c.h.b16 %v2723
        %v2948 = vunpack.c.l.b16 %v2724
        %v2949 = vunpack.c.l.b16 %v2725
        %v2950 = vunpack.c.h.b16 %v2725
        %v2951 = vunpack.c.l.b16 %v2726
        %v2952 = vunpack.c.l.b16 %v2727
        %v2953 = vunpack.c.h.b16 %v2727
        %v2954 = vunpack.c.l.b16 %v2728
        %v2955 = vunpack.c.l.b16 %v2729
        %v2956 = vunpack.c.h.b16 %v2729
        %v2957 = vunpack.c.l.b16 %v2730
        %v2958 = vunpack.c.l.b16 %v2731
        %v2959 = vunpack.c.h.b16 %v2731
        %v2960 = vunpack.c.l.b16 %v2732
        %v2961 = vunpack.c.l.b16 %v2733
        %v2962 = vunpack.c.h.b16 %v2733
        %v2963 = vunpack.c.l.b16 %v2734
        %v2964 = vunpack.c.l.b16 %v2735
        %v2965 = vunpack.c.h.b16 %v2735
        %v2966 = vunpack.c.l.b16 %v2736
        %v2967 = vunpack.c.l.b16 %v2737
        %v2968 = vunpack.c.h.b16 %v2737
        %v2969 = vunpack.c.l.b16 %v2738
        %v2970 = vunpack.c.l.b16 %v2739
        %v2971 = vunpack.c.h.b16 %v2739
        %v2972 = vunpack.c.l.b16 %v2740
        %v2973 = vunpack.c.l.b16 %v2741
        %v2974 = vunpack.c.h.b16 %v2741
        %v2975 = vunpack.c.l.b16 %v2742
        %v2976 = vunpack.c.l.b16 %v2743
        %v2977 = vunpack.c.h.b16 %v2743
        %v2978 = vunpack.c.l.b16 %v2744
        %v2979 = vunpack.c.l.b16 %v2745
        %v2980 = vunpack.c.h.b16 %v2745
        %v2981 = vunpack.c.l.b16 %v2746
        %v2982 = vunpack.c.l.b16 %v2747
        %v2983 = vunpack.c.h.b16 %v2747
        %v2984 = vunpack.c.l.b16 %v2748
        %v2985 = vunpack.c.l.b16 %v2749
        %v2986 = vunpack.c.h.b16 %v2749
        %v2987 = vunpack.c.l.b16 %v2750
        %v2988 = vunpack.c.l.b16 %v2751
        %v2989 = vunpack.c.h.b16 %v2751
        %v2990 = vunpack.c.l.b16 %v2752
        %v2991 = vunpack.c.l.b16 %v2753
        %v2992 = vunpack.c.h.b16 %v2753
        %v2993 = vunpack.c.l.b16 %v2754
        %v2994 = vunpack.c.l.b16 %v2755
        %v2995 = vunpack.c.h.b16 %v2755
        %v2996 = vunpack.c.l.b16 %v2756
        %v2997 = vpack.c.b16 %v2856, %v2853
        %v2998 = vpack.c.b16 %v2857, %v2854
        %v2999 = vpack.c.b16 %v2858, %v2855
        %v3000 = vpack.c.b16 %v2862, %v2859
        %v3001 = vpack.c.b16 %v2863, %v2860
        %v3002 = vpack.c.b16 %v2864, %v2861
        %v3003 = vpack.c.b16 %v2868, %v2865
        %v3004 = vpack.c.b16 %v2869, %v2866
        %v3005 = vpack.c.b16 %v2870, %v2867
        %v3006 = vpack.c.b16 %v2874, %v2871
        %v3007 = vpack.c.b16 %v2875, %v2872
        %v3008 = vpack.c.b16 %v2876, %v2873
        %v3009 = vpack.c.b16 %v2880, %v2877
        %v3010 = vpack.c.b16 %v2881, %v2878
        %v3011 = vpack.c.b16 %v2882, %v2879
        %v3012 = vpack.c.b16 %v2886, %v2883
        %v3013 = vpack.c.b16 %v2887, %v2884
        %v3014 = vpack.c.b16 %v2888, %v2885
        %v3015 = vpack.c.b16 %v2892, %v2889
        %v3016 = vpack.c.b16 %v2893, %v2890
        %v3017 = vpack.c.b16 %v2894, %v2891
        %v3018 = vpack.c.b16 %v2898, %v2895
        %v3019 = vpack.c.b16 %v2899, %v2896
        %v3020 = vpack.c.b16 %v2900, %v2897
        %v3021 = vpack.c.b16 %v2904, %v2901
        %v3022 = vpack.c.b16 %v2905, %v2902
        %v3023 = vpack.c.b16 %v2906, %v2903
        %v3024 = vpack.c.b16 %v2910, %v2907
        %v3025 = vpack.c.b16 %v2911, %v2908
        %v3026 = vpack.c.b16 %v2912, %v2909
        %v3027 = vpack.c.b16 %v2916, %v2913
        %v3028 = vpack.c.b16 %v2917, %v2914
        %v3029 = vpack.c.b16 %v2918, %v2915
        %v3030 = vpack.c.b16 %v2922, %v2919
        %v3031 = vpack.c.b16 %v2923, %v2920
        %v3032 = vpack.c.b16 %v2924, %v2921
        %v3033 = vpack.c.b16 %v2928, %v2925
        %v3034 = vpack.c.b16 %v2929, %v2926
        %v3035 = vpack.c.b16 %v2930, %v2927
        %v3036 = vpack.c.b16 %v2934, %v2931
        %v3037 = vpack.c.b16 %v2935, %v2932
        %v3038 = vpack.c.b16 %v2936, %v2933
        %v3039 = vpack.c.b16 %v2940, %v2937
        %v3040 = vpack.c.b16 %v2941, %v2938
        %v3041 = vpack.c.b16 %v2942, %v2939
        %v3042 = vpack.c.b16 %v2946, %v2943
        %v3043 = vpack.c.b16 %v2947, %v2944
        %v3044 = vpack.c.b16 %v2948, %v2945
        %v3045 = vpack.c.b16 %v2952, %v2949
        %v3046 = vpack.c.b16 %v2953, %v2950
        %v3047 = vpack.c.b16 %v2954, %v2951
        %v3048 = vpack.c.b16 %v2958, %v2955
        %v3049 = vpack.c.b16 %v2959, %v2956
        %v3050 = vpack.c.b16 %v2960, %v2957
        %v3051 = vpack.c.b16 %v2964, %v2961
        %v3052 = vpack.c.b16 %v2965, %v2962
        %v3053 = vpack.c.b16 %v2966, %v2963
        %v3054 = vpack.c.b16 %v2970, %v2967
        %v3055 = vpack.c.b16 %v2971, %v2968
        %v3056 = vpack.c.b16 %v2972, %v2969
        %v3057 = vpack.c.b16 %v2976, %v2973
        %v3058 = vpack.c.b16 %v2977, %v2974
        %v3059 = vpack.c.b16 %v2978, %v2975
        %v3060 = vpack.c.b16 %v2982, %v2979
        %v3061 = vpack.c.b16 %v2983, %v2980
        %v3062 = vpack.c.b16 %v2984, %v2981
        %v3063 = vpack.c.b16 %v2988, %v2985
        %v3064 = vpack.c.b16 %v2989, %v2986
        %v3065 = vpack.c.b16 %v2990, %v2987
        %v3066 = vpack.c.b16 %v2994, %v2991
        %v3067 = vpack.c.b16 %v2995, %v2992
        %v3068 = vpack.c.b16 %v2996, %v2993
        %3141 = vmatprep.subr.bf16.mxu0 %v2998
        %3142 = vmatpush1.bf16.msra.mxu0 %v2997
        %3143 = vmatprep.subr.bf16.mxu0 %v3001
        %3144 = vmatpush1.bf16.msra.mxu0 %v3000
        %3145 = vmatprep.subr.bf16.mxu0 %v3004
        %3146 = vmatpush1.bf16.msra.mxu0 %v3003
        %3147 = vmatprep.subr.bf16.mxu0 %v3007
        %3148 = vmatpush1.bf16.msra.mxu0 %v3006
        %3149 = vmatprep.subr.bf16.mxu0 %v3010
        %3150 = vmatpush1.bf16.msra.mxu0 %v3009
        %3151 = vmatprep.subr.bf16.mxu0 %v3013
        %3152 = vmatpush1.bf16.msra.mxu0 %v3012
        %3153 = vmatprep.subr.bf16.mxu0 %v3016
        %3154 = vmatpush1.bf16.msra.mxu0 %v3015
        %3155 = vmatprep.subr.bf16.mxu0 %v3019
        %3156 = vmatpush1.bf16.msra.mxu0 %v3018
        %3157 = vmatprep.subr.bf16.mxu0 %v3022
        %3158 = vmatpush1.bf16.msra.mxu0 %v3021
        %3159 = vmatprep.subr.bf16.mxu0 %v3025
        %3160 = vmatpush1.bf16.msra.mxu0 %v3024
        %3161 = vmatprep.subr.bf16.mxu0 %v3028
        %3162 = vmatpush1.bf16.msra.mxu0 %v3027
        %3163 = vmatprep.subr.bf16.mxu0 %v3031
        %3164 = vmatpush1.bf16.msra.mxu0 %v3030
        %3165 = vmatprep.subr.bf16.mxu0 %v3034
        %3166 = vmatpush1.bf16.msra.mxu0 %v3033
        %3167 = vmatprep.subr.bf16.mxu0 %v3037
        %3168 = vmatpush1.bf16.msra.mxu0 %v3036
        %3169 = vmatprep.subr.bf16.mxu0 %v3040
        %3170 = vmatpush1.bf16.msra.mxu0 %v3039
        %3171 = vmatprep.subr.bf16.mxu0 %v3043
        %3172 = vmatpush1.bf16.msra.mxu0 %v3042
        %3173 = vmatprep.mubr.bf16.mxu0 %v2635
        %3174 = vmatmul.mubr.bf16.gmra.mrb[0].mxu0 %v2611
        %v3175 = vpop.f32.mrb[0].mxu0
        %v3176 = vadd.f32 0.0, %v3175
        %v3177 = vpop.f32.mrb[0].mxu0
        %v3178 = vadd.f32 0.0, %v3177
        %v3179 = vpop.f32.mrb[0].mxu0
        %v3180 = vadd.f32 0.0, %v3179
        %v3181 = vpop.f32.mrb[0].mxu0
        %v3182 = vadd.f32 0.0, %v3181
        %3183 = vmatprep.mubr.bf16.mxu0 %v2636
        %3184 = vmatmul.mubr.bf16.gmra.mrb[0].mxu0 %v2612
        %v3185 = vpop.f32.mrb[0].mxu0
        %v3186 = vpop.f32.mrb[0].mxu0
        %v3187 = vadd.f32 0.0, %v3186
        %v3188 = vpop.f32.mrb[0].mxu0
        %v3189 = vadd.f32 0.0, %v3188
        %v3190 = vpop.f32.mrb[0].mxu0
        %v3191 = vadd.f32 0.0, %v3190
        %3192 = vmatprep.mubr.bf16.mxu0 %v2637
        %3193 = vmatmul.mubr.bf16.gmra.mrb[0].mxu0 %v2613
        %v3194 = vpop.f32.mrb[0].mxu0
        %v3195 = vadd.f32 0.0, %v3194
        %v3196 = vpop.f32.mrb[0].mxu0
        %v3197 = vadd.f32 0.0, %v3196
        %v3198 = vpop.f32.mrb[0].mxu0
        %v3199 = vpop.f32.mrb[0].mxu0
        %v3200 = vadd.f32 0.0, %v3199
        %3201 = vmatprep.mubr.bf16.mxu0 %v2638
        %3202 = vmatmul.mubr.bf16.gmra.mrb[0].mxu0 %v2614
        %v3203 = vpop.f32.mrb[0].mxu0
        %v3204 = vadd.f32 0.0, %v3203
        %v3205 = vpop.f32.mrb[0].mxu0
        %v3206 = vadd.f32 0.0, %v3205
        %v3207 = vpop.f32.mrb[0].mxu0
        %v3208 = vadd.f32 0.0, %v3207
        %v3209 = vpop.f32.mrb[0].mxu0
        %v3210 = vadd.f32 0.0, %v3209
        %3211 = vmatprep.mubr.bf16.mxu0 %v2639
        %3212 = vmatmul.mubr.bf16.gmra.mrb[0].mxu0 %v2615
        %v3213 = vpop.f32.mrb[0].mxu0
        %v3214 = vpop.f32.mrb[0].mxu0
        %v3215 = vadd.f32 0.0, %v3214
        %v3216 = vpop.f32.mrb[0].mxu0
        %v3217 = vadd.f32 0.0, %v3216
        %v3218 = vpop.f32.mrb[0].mxu0
        %v3219 = vadd.f32 0.0, %v3218
        %3220 = vmatprep.mubr.bf16.mxu0 %v2640
        %3221 = vmatmul.mubr.bf16.gmra.mrb[0].mxu0 %v2616
        %v3222 = vpop.f32.mrb[0].mxu0
        %v3223 = vadd.f32 0.0, %v3222
        %v3224 = vpop.f32.mrb[0].mxu0
        %v3225 = vadd.f32 0.0, %v3224
        %v3226 = vpop.f32.mrb[0].mxu0
        %v3227 = vpop.f32.mrb[0].mxu0
        %v3228 = vadd.f32 0.0, %v3227
        %3229 = vmatprep.mubr.bf16.mxu0 %v2641
        %3230 = vmatmul.mubr.bf16.gmra.mrb[0].mxu0 %v2617
        %v3231 = vpop.f32.mrb[0].mxu0
        %v3232 = vadd.f32 0.0, %v3231
        %v3233 = vpop.f32.mrb[0].mxu0
        %v3234 = vadd.f32 0.0, %v3233
        %v3235 = vpop.f32.mrb[0].mxu0
        %v3236 = vadd.f32 0.0, %v3235
        %v3237 = vpop.f32.mrb[0].mxu0
        %v3238 = vadd.f32 0.0, %v3237
        %3239 = vmatprep.mubr.bf16.mxu0 %v2642
        %3240 = vmatmul.mubr.bf16.gmra.mrb[0].mxu0 %v2618
        %v3241 = vpop.f32.mrb[0].mxu0
        %v3242 = vpop.f32.mrb[0].mxu0
        %v3243 = vadd.f32 0.0, %v3242
        %v3244 = vpop.f32.mrb[0].mxu0
        %v3245 = vadd.f32 0.0, %v3244
        %v3246 = vpop.f32.mrb[0].mxu0
        %v3247 = vadd.f32 0.0, %v3246
        %3248 = vmatprep.mubr.bf16.mxu0 %v2643
        %3249 = vmatmul.mubr.bf16.gmra.mrb[0].mxu0 %v2619
        %v3250 = vpop.f32.mrb[0].mxu0
        %v3251 = vadd.f32 0.0, %v3250
        %v3252 = vpop.f32.mrb[0].mxu0
        %v3253 = vadd.f32 0.0, %v3252
        %v3254 = vpop.f32.mrb[0].mxu0
        %v3255 = vpop.f32.mrb[0].mxu0
        %v3256 = vadd.f32 0.0, %v3255
        %3257 = vmatprep.mubr.bf16.mxu0 %v2644
        %3258 = vmatmul.mubr.bf16.gmra.mrb[0].mxu0 %v2620
        %v3259 = vpop.f32.mrb[0].mxu0
        %v3260 = vadd.f32 0.0, %v3259
        %v3261 = vpop.f32.mrb[0].mxu0
        %v3262 = vadd.f32 0.0, %v3261
        %v3263 = vpop.f32.mrb[0].mxu0
        %v3264 = vadd.f32 0.0, %v3263
        %v3265 = vpop.f32.mrb[0].mxu0
        %v3266 = vadd.f32 0.0, %v3265
        %3267 = vmatprep.mubr.bf16.mxu0 %v2645
        %3268 = vmatmul.mubr.bf16.gmra.mrb[0].mxu0 %v2621
        %v3269 = vpop.f32.mrb[0].mxu0
        %v3270 = vpop.f32.mrb[0].mxu0
        %v3271 = vadd.f32 0.0, %v3270
        %v3272 = vpop.f32.mrb[0].mxu0
        %v3273 = vadd.f32 0.0, %v3272
        %v3274 = vpop.f32.mrb[0].mxu0
        %v3275 = vadd.f32 0.0, %v3274
        %3276 = vmatprep.mubr.bf16.mxu0 %v2646
        %3277 = vmatmul.mubr.bf16.gmra.mrb[0].mxu0 %v2622
        %v3278 = vpop.f32.mrb[0].mxu0
        %v3279 = vadd.f32 0.0, %v3278
        %v3280 = vpop.f32.mrb[0].mxu0
        %v3281 = vadd.f32 0.0, %v3280
        %v3282 = vpop.f32.mrb[0].mxu0
        %v3283 = vpop.f32.mrb[0].mxu0
        %v3284 = vadd.f32 0.0, %v3283
        %3285 = vmatprep.mubr.bf16.mxu0 %v2647
        %3286 = vmatmul.mubr.bf16.gmra.mrb[0].mxu0 %v2623
        %v3287 = vpop.f32.mrb[0].mxu0
        %v3288 = vadd.f32 0.0, %v3287
        %v3289 = vpop.f32.mrb[0].mxu0
        %v3290 = vadd.f32 0.0, %v3289
        %v3291 = vpop.f32.mrb[0].mxu0
        %v3292 = vadd.f32 0.0, %v3291
        %v3293 = vpop.f32.mrb[0].mxu0
        %v3294 = vadd.f32 0.0, %v3293
        %3295 = vmatprep.mubr.bf16.mxu0 %v2648
        %3296 = vmatmul.mubr.bf16.gmra.mrb[0].mxu0 %v2624
        %v3297 = vpop.f32.mrb[0].mxu0
        %v3298 = vpop.f32.mrb[0].mxu0
        %v3299 = vadd.f32 0.0, %v3298
        %v3300 = vpop.f32.mrb[0].mxu0
        %v3301 = vadd.f32 0.0, %v3300
        %v3302 = vpop.f32.mrb[0].mxu0
        %v3303 = vadd.f32 0.0, %v3302
        %3304 = vmatprep.mubr.bf16.mxu0 %v2649
        %3305 = vmatmul.mubr.bf16.gmra.mrb[0].mxu0 %v2625
        %v3306 = vpop.f32.mrb[0].mxu0
        %v3307 = vadd.f32 0.0, %v3306
        %v3308 = vpop.f32.mrb[0].mxu0
        %v3309 = vadd.f32 0.0, %v3308
        %v3310 = vpop.f32.mrb[0].mxu0
        %v3311 = vpop.f32.mrb[0].mxu0
        %v3312 = vadd.f32 0.0, %v3311
        %3313 = vmatprep.mubr.bf16.mxu0 %v2650
        %3314 = vmatmul.mubr.bf16.gmra.mrb[0].mxu0 %v2626
        %v3315 = vpop.f32.mrb[0].mxu0
        %v3316 = vadd.f32 0.0, %v3315
        %v3317 = vpop.f32.mrb[0].mxu0
        %v3318 = vadd.f32 0.0, %v3317
        %v3319 = vpop.f32.mrb[0].mxu0
        %v3320 = vadd.f32 0.0, %v3319
        %v3321 = vpop.f32.mrb[0].mxu0
        %v3322 = vadd.f32 0.0, %v3321
        %3323 = vmatprep.mubr.bf16.mxu0 %v2651
        %3324 = vmatmul.mubr.bf16.gmra.mrb[0].mxu0 %v2627
        %v3325 = vpop.f32.mrb[0].mxu0
        %v3326 = vpop.f32.mrb[0].mxu0
        %v3327 = vadd.f32 0.0, %v3326
        %v3328 = vpop.f32.mrb[0].mxu0
        %v3329 = vadd.f32 0.0, %v3328
        %v3330 = vpop.f32.mrb[0].mxu0
        %v3331 = vadd.f32 0.0, %v3330
        %3332 = vmatprep.mubr.bf16.mxu0 %v2652
        %3333 = vmatmul.mubr.bf16.gmra.mrb[0].mxu0 %v2628
        %v3334 = vpop.f32.mrb[0].mxu0
        %v3335 = vadd.f32 0.0, %v3334
        %v3336 = vpop.f32.mrb[0].mxu0
        %v3337 = vadd.f32 0.0, %v3336
        %v3338 = vpop.f32.mrb[0].mxu0
        %v3339 = vpop.f32.mrb[0].mxu0
        %v3340 = vadd.f32 0.0, %v3339
        %3341 = vmatprep.mubr.bf16.mxu0 %v2653
        %3342 = vmatmul.mubr.bf16.gmra.mrb[0].mxu0 %v2629
        %v3343 = vpop.f32.mrb[0].mxu0
        %v3344 = vadd.f32 0.0, %v3343
        %v3345 = vpop.f32.mrb[0].mxu0
        %v3346 = vadd.f32 0.0, %v3345
        %v3347 = vpop.f32.mrb[0].mxu0
        %v3348 = vadd.f32 0.0, %v3347
        %v3349 = vpop.f32.mrb[0].mxu0
        %v3350 = vadd.f32 0.0, %v3349
        %3351 = vmatprep.mubr.bf16.mxu0 %v2654
        %3352 = vmatmul.mubr.bf16.gmra.mrb[0].mxu0 %v2630
        %v3353 = vpop.f32.mrb[0].mxu0
        %v3354 = vpop.f32.mrb[0].mxu0
        %v3355 = vadd.f32 0.0, %v3354
        %v3356 = vpop.f32.mrb[0].mxu0
        %v3357 = vadd.f32 0.0, %v3356
        %v3358 = vpop.f32.mrb[0].mxu0
        %v3359 = vadd.f32 0.0, %v3358
        %3360 = vmatprep.mubr.bf16.mxu0 %v2655
        %3361 = vmatmul.mubr.bf16.gmra.mrb[0].mxu0 %v2631
        %v3362 = vpop.f32.mrb[0].mxu0
        %v3363 = vadd.f32 0.0, %v3362
        %v3364 = vpop.f32.mrb[0].mxu0
        %v3365 = vadd.f32 0.0, %v3364
        %v3366 = vpop.f32.mrb[0].mxu0
        %v3367 = vpop.f32.mrb[0].mxu0
        %v3368 = vadd.f32 0.0, %v3367
        %3369 = vmatprep.mubr.bf16.mxu0 %v2656
        %3370 = vmatmul.mubr.bf16.gmra.mrb[0].mxu0 %v2632
        %v3371 = vpop.f32.mrb[0].mxu0
        %v3372 = vadd.f32 0.0, %v3371
        %v3373 = vpop.f32.mrb[0].mxu0
        %v3374 = vadd.f32 0.0, %v3373
        %v3375 = vpop.f32.mrb[0].mxu0
        %v3376 = vadd.f32 0.0, %v3375
        %v3377 = vpop.f32.mrb[0].mxu0
        %v3378 = vadd.f32 0.0, %v3377
        %3379 = vmatprep.mubr.bf16.mxu0 %v2657
        %3380 = vmatmul.mubr.bf16.gmra.mrb[0].mxu0 %v2633
        %v3381 = vpop.f32.mrb[0].mxu0
        %v3382 = vpop.f32.mrb[0].mxu0
        %v3383 = vadd.f32 0.0, %v3382
        %v3384 = vpop.f32.mrb[0].mxu0
        %v3385 = vadd.f32 0.0, %v3384
        %v3386 = vpop.f32.mrb[0].mxu0
        %v3387 = vadd.f32 0.0, %v3386
        %3388 = vmatprep.mubr.bf16.mxu0 %v2658
        %3389 = vmatmul.mubr.bf16.gmra.mrb[0].mxu0 %v2634
        %v3390 = vpop.f32.mrb[0].mxu0
        %v3391 = vadd.f32 0.0, %v3390
        %v3392 = vpop.f32.mrb[0].mxu0
        %v3393 = vadd.f32 0.0, %v3392
        %v3394 = vpop.f32.mrb[0].mxu0
        %v3395 = vpop.f32.mrb[0].mxu0
        %v3396 = vadd.f32 0.0, %v3395
        %3397 = vdwg.mxu0
        %3398 = vmatprep.subr.bf16.mxu0 %v3046
        %3399 = vmatpush1.bf16.msra.mxu0 %v3045
        %3400 = vmatprep.subr.bf16.mxu0 %v3049
        %3401 = vmatpush1.bf16.msra.mxu0 %v3048
        %3402 = vmatprep.subr.bf16.mxu0 %v3052
        %3403 = vmatpush1.bf16.msra.mxu0 %v3051
        %3404 = vmatprep.subr.bf16.mxu0 %v3055
        %3405 = vmatpush1.bf16.msra.mxu0 %v3054
        %3406 = vmatprep.subr.bf16.mxu0 %v3058
        %3407 = vmatpush1.bf16.msra.mxu0 %v3057
        %3408 = vmatprep.subr.bf16.mxu0 %v3061
        %3409 = vmatpush1.bf16.msra.mxu0 %v3060
        %3410 = vmatprep.subr.bf16.mxu0 %v3064
        %3411 = vmatpush1.bf16.msra.mxu0 %v3063
        %3412 = vmatprep.subr.bf16.mxu0 %v3067
        %3413 = vmatpush1.bf16.msra.mxu0 %v3066
        %3414 = vmatprep.subr.bf16.mxu0 0
        %3415 = vmatpush1.bf16.msra.mxu0 0
        %3416 = vmatprep.subr.bf16.mxu0 0
        %3417 = vmatpush1.bf16.msra.mxu0 0
        %3418 = vmatprep.subr.bf16.mxu0 0
        %3419 = vmatpush1.bf16.msra.mxu0 0
        %3420 = vmatprep.subr.bf16.mxu0 0
        %3421 = vmatpush1.bf16.msra.mxu0 0
        %3422 = vmatprep.subr.bf16.mxu0 0
        %3423 = vmatpush1.bf16.msra.mxu0 0
        %3424 = vmatprep.subr.bf16.mxu0 0
        %3425 = vmatpush1.bf16.msra.mxu0 0
        %3426 = vmatprep.subr.bf16.mxu0 0
        %3427 = vmatpush1.bf16.msra.mxu0 0
        %3428 = vmatprep.subr.bf16.mxu0 0
        %3429 = vmatpush1.bf16.msra.mxu0 0
        %3430 = vmatprep.mubr.bf16.mxu0 0
        %3431 = vmatmul.mubr.bf16.gmra.mrb[0].mxu0 %v2614
        %v3432 = vpop.f32.mrb[0].mxu0
        %v3433 = vadd.f32 %v3176, %v3432
        %v3434 = vpop.f32.mrb[0].mxu0
        %v3435 = vadd.f32 %v3178, %v3434
        %v3436 = vpop.f32.mrb[0].mxu0
        %v3437 = vadd.f32 %v3180, %v3436
        %v3438 = vpop.f32.mrb[0].mxu0
        %v3439 = vadd.f32 %v3182, %v3438
        %3440 = vmatprep.mubr.bf16.mxu0 0
        %3441 = vmatmul.mubr.bf16.gmra.mrb[0].mxu0 %v2615
        %v3442 = vpop.f32.mrb[0].mxu0
        %v3443 = vpop.f32.mrb[0].mxu0
        %v3444 = vadd.f32 %v3187, %v3443
        %v3445 = vpop.f32.mrb[0].mxu0
        %v3446 = vadd.f32 %v3189, %v3445
        %v3447 = vpop.f32.mrb[0].mxu0
        %v3448 = vadd.f32 %v3191, %v3447
        %3449 = vmatprep.mubr.bf16.mxu0 0
        %3450 = vmatmul.mubr.bf16.gmra.mrb[0].mxu0 %v2616
        %v3451 = vpop.f32.mrb[0].mxu0
        %v3452 = vadd.f32 %v3195, %v3451
        %v3453 = vpop.f32.mrb[0].mxu0
        %v3454 = vadd.f32 %v3197, %v3453
        %v3455 = vpop.f32.mrb[0].mxu0
        %v3456 = vpop.f32.mrb[0].mxu0
        %v3457 = vadd.f32 %v3200, %v3456
        %3458 = vmatprep.mubr.bf16.mxu0 0
        %3459 = vmatmul.mubr.bf16.gmra.mrb[0].mxu0 %v2617
        %v3460 = vpop.f32.mrb[0].mxu0
        %v3461 = vadd.f32 %v3204, %v3460
        %v3462 = vpop.f32.mrb[0].mxu0
        %v3463 = vadd.f32 %v3206, %v3462
        %v3464 = vpop.f32.mrb[0].mxu0
        %v3465 = vadd.f32 %v3208, %v3464
        %v3466 = vpop.f32.mrb[0].mxu0
        %v3467 = vadd.f32 %v3210, %v3466
        %3468 = vmatprep.mubr.bf16.mxu0 0
        %3469 = vmatmul.mubr.bf16.gmra.mrb[0].mxu0 %v2618
        %v3470 = vpop.f32.mrb[0].mxu0
        %v3471 = vpop.f32.mrb[0].mxu0
        %v3472 = vadd.f32 %v3215, %v3471
        %v3473 = vpop.f32.mrb[0].mxu0
        %v3474 = vadd.f32 %v3217, %v3473
        %v3475 = vpop.f32.mrb[0].mxu0
        %v3476 = vadd.f32 %v3219, %v3475
        %3477 = vmatprep.mubr.bf16.mxu0 0
        %3478 = vmatmul.mubr.bf16.gmra.mrb[0].mxu0 %v2619
        %v3479 = vpop.f32.mrb[0].mxu0
        %v3480 = vadd.f32 %v3223, %v3479
        %v3481 = vpop.f32.mrb[0].mxu0
        %v3482 = vadd.f32 %v3225, %v3481
        %v3483 = vpop.f32.mrb[0].mxu0
        %v3484 = vpop.f32.mrb[0].mxu0
        %v3485 = vadd.f32 %v3228, %v3484
        %3486 = vmatprep.mubr.bf16.mxu0 0
        %3487 = vmatmul.mubr.bf16.gmra.mrb[0].mxu0 %v2620
        %v3488 = vpop.f32.mrb[0].mxu0
        %v3489 = vadd.f32 %v3232, %v3488
        %v3490 = vpop.f32.mrb[0].mxu0
        %v3491 = vadd.f32 %v3234, %v3490
        %v3492 = vpop.f32.mrb[0].mxu0
        %v3493 = vadd.f32 %v3236, %v3492
        %v3494 = vpop.f32.mrb[0].mxu0
        %v3495 = vadd.f32 %v3238, %v3494
        %3496 = vmatprep.mubr.bf16.mxu0 0
        %3497 = vmatmul.mubr.bf16.gmra.mrb[0].mxu0 %v2621
        %v3498 = vpop.f32.mrb[0].mxu0
        %v3499 = vpop.f32.mrb[0].mxu0
        %v3500 = vadd.f32 %v3243, %v3499
        %v3501 = vpop.f32.mrb[0].mxu0
        %v3502 = vadd.f32 %v3245, %v3501
        %v3503 = vpop.f32.mrb[0].mxu0
        %v3504 = vadd.f32 %v3247, %v3503
        %3505 = vmatprep.mubr.bf16.mxu0 0
        %3506 = vmatmul.mubr.bf16.gmra.mrb[0].mxu0 %v2622
        %v3507 = vpop.f32.mrb[0].mxu0
        %v3508 = vadd.f32 %v3251, %v3507
        %v3509 = vpop.f32.mrb[0].mxu0
        %v3510 = vadd.f32 %v3253, %v3509
        %v3511 = vpop.f32.mrb[0].mxu0
        %v3512 = vpop.f32.mrb[0].mxu0
        %v3513 = vadd.f32 %v3256, %v3512
        %3514 = vmatprep.mubr.bf16.mxu0 0
        %3515 = vmatmul.mubr.bf16.gmra.mrb[0].mxu0 %v2623
        %v3516 = vpop.f32.mrb[0].mxu0
        %v3517 = vadd.f32 %v3260, %v3516
        %v3518 = vpop.f32.mrb[0].mxu0
        %v3519 = vadd.f32 %v3262, %v3518
        %v3520 = vpop.f32.mrb[0].mxu0
        %v3521 = vadd.f32 %v3264, %v3520
        %v3522 = vpop.f32.mrb[0].mxu0
        %v3523 = vadd.f32 %v3266, %v3522
        %3524 = vmatprep.mubr.bf16.mxu0 0
        %3525 = vmatmul.mubr.bf16.gmra.mrb[0].mxu0 %v2624
        %v3526 = vpop.f32.mrb[0].mxu0
        %v3527 = vpop.f32.mrb[0].mxu0
        %v3528 = vadd.f32 %v3271, %v3527
        %v3529 = vpop.f32.mrb[0].mxu0
        %v3530 = vadd.f32 %v3273, %v3529
        %v3531 = vpop.f32.mrb[0].mxu0
        %v3532 = vadd.f32 %v3275, %v3531
        %3533 = vmatprep.mubr.bf16.mxu0 0
        %3534 = vmatmul.mubr.bf16.gmra.mrb[0].mxu0 %v2625
        %v3535 = vpop.f32.mrb[0].mxu0
        %v3536 = vadd.f32 %v3279, %v3535
        %v3537 = vpop.f32.mrb[0].mxu0
        %v3538 = vadd.f32 %v3281, %v3537
        %v3539 = vpop.f32.mrb[0].mxu0
        %v3540 = vpop.f32.mrb[0].mxu0
        %v3541 = vadd.f32 %v3284, %v3540
        %3542 = vmatprep.mubr.bf16.mxu0 0
        %3543 = vmatmul.mubr.bf16.gmra.mrb[0].mxu0 %v2626
        %v3544 = vpop.f32.mrb[0].mxu0
        %v3545 = vadd.f32 %v3288, %v3544
        %v3546 = vpop.f32.mrb[0].mxu0
        %v3547 = vadd.f32 %v3290, %v3546
        %v3548 = vpop.f32.mrb[0].mxu0
        %v3549 = vadd.f32 %v3292, %v3548
        %v3550 = vpop.f32.mrb[0].mxu0
        %v3551 = vadd.f32 %v3294, %v3550
        %3552 = vmatprep.mubr.bf16.mxu0 0
        %3553 = vmatmul.mubr.bf16.gmra.mrb[0].mxu0 %v2627
        %v3554 = vpop.f32.mrb[0].mxu0
        %v3555 = vpop.f32.mrb[0].mxu0
        %v3556 = vadd.f32 %v3299, %v3555
        %v3557 = vpop.f32.mrb[0].mxu0
        %v3558 = vadd.f32 %v3301, %v3557
        %v3559 = vpop.f32.mrb[0].mxu0
        %v3560 = vadd.f32 %v3303, %v3559
        %3561 = vmatprep.mubr.bf16.mxu0 0
        %3562 = vmatmul.mubr.bf16.gmra.mrb[0].mxu0 %v2628
        %v3563 = vpop.f32.mrb[0].mxu0
        %v3564 = vadd.f32 %v3307, %v3563
        %v3565 = vpop.f32.mrb[0].mxu0
        %v3566 = vadd.f32 %v3309, %v3565
        %v3567 = vpop.f32.mrb[0].mxu0
        %v3568 = vpop.f32.mrb[0].mxu0
        %v3569 = vadd.f32 %v3312, %v3568
        %3570 = vmatprep.mubr.bf16.mxu0 0
        %3571 = vmatmul.mubr.bf16.gmra.mrb[0].mxu0 %v2629
        %v3572 = vpop.f32.mrb[0].mxu0
        %v3573 = vadd.f32 %v3316, %v3572
        %v3574 = vpop.f32.mrb[0].mxu0
        %v3575 = vadd.f32 %v3318, %v3574
        %v3576 = vpop.f32.mrb[0].mxu0
        %v3577 = vadd.f32 %v3320, %v3576
        %v3578 = vpop.f32.mrb[0].mxu0
        %v3579 = vadd.f32 %v3322, %v3578
        %3580 = vmatprep.mubr.bf16.mxu0 0
        %3581 = vmatmul.mubr.bf16.gmra.mrb[0].mxu0 %v2630
        %v3582 = vpop.f32.mrb[0].mxu0
        %v3583 = vpop.f32.mrb[0].mxu0
        %v3584 = vadd.f32 %v3327, %v3583
        %v3585 = vpop.f32.mrb[0].mxu0
        %v3586 = vadd.f32 %v3329, %v3585
        %v3587 = vpop.f32.mrb[0].mxu0
        %v3588 = vadd.f32 %v3331, %v3587
        %3589 = vmatprep.mubr.bf16.mxu0 0
        %3590 = vmatmul.mubr.bf16.gmra.mrb[0].mxu0 %v2631
        %v3591 = vpop.f32.mrb[0].mxu0
        %v3592 = vadd.f32 %v3335, %v3591
        %v3593 = vpop.f32.mrb[0].mxu0
        %v3594 = vadd.f32 %v3337, %v3593
        %v3595 = vpop.f32.mrb[0].mxu0
        %v3596 = vpop.f32.mrb[0].mxu0
        %v3597 = vadd.f32 %v3340, %v3596
        %3598 = vmatprep.mubr.bf16.mxu0 0
        %3599 = vmatmul.mubr.bf16.gmra.mrb[0].mxu0 %v2632
        %v3600 = vpop.f32.mrb[0].mxu0
        %v3601 = vadd.f32 %v3344, %v3600
        %v3602 = vpop.f32.mrb[0].mxu0
        %v3603 = vadd.f32 %v3346, %v3602
        %v3604 = vpop.f32.mrb[0].mxu0
        %v3605 = vadd.f32 %v3348, %v3604
        %v3606 = vpop.f32.mrb[0].mxu0
        %v3607 = vadd.f32 %v3350, %v3606
        %3608 = vmatprep.mubr.bf16.mxu0 0
        %3609 = vmatmul.mubr.bf16.gmra.mrb[0].mxu0 %v2633
        %v3610 = vpop.f32.mrb[0].mxu0
        %v3611 = vpop.f32.mrb[0].mxu0
        %v3612 = vadd.f32 %v3355, %v3611
        %v3613 = vpop.f32.mrb[0].mxu0
        %v3614 = vadd.f32 %v3357, %v3613
        %v3615 = vpop.f32.mrb[0].mxu0
        %v3616 = vadd.f32 %v3359, %v3615
        %3617 = vmatprep.mubr.bf16.mxu0 0
        %3618 = vmatmul.mubr.bf16.gmra.mrb[0].mxu0 %v2634
        %v3619 = vpop.f32.mrb[0].mxu0
        %v3620 = vadd.f32 %v3363, %v3619
        %v3621 = vpop.f32.mrb[0].mxu0
        %v3622 = vadd.f32 %v3365, %v3621
        %v3623 = vpop.f32.mrb[0].mxu0
        %v3624 = vpop.f32.mrb[0].mxu0
        %v3625 = vadd.f32 %v3368, %v3624
        %3626 = vmatprep.mubr.bf16.mxu0 0
        %3627 = vmatmul.mubr.bf16.gmra.mrb[0].mxu0 %v2659
        %v3628 = vpop.f32.mrb[0].mxu0
        %v3629 = vadd.f32 %v3372, %v3628
        %v3630 = vpop.f32.mrb[0].mxu0
        %v3631 = vadd.f32 %v3374, %v3630
        %v3632 = vpop.f32.mrb[0].mxu0
        %v3633 = vadd.f32 %v3376, %v3632
        %v3634 = vpop.f32.mrb[0].mxu0
        %v3635 = vadd.f32 %v3378, %v3634
        %3636 = vmatprep.mubr.bf16.mxu0 0
        %3637 = vmatmul.mubr.bf16.gmra.mrb[0].mxu0 %v2660
        %v3638 = vpop.f32.mrb[0].mxu0
        %v3639 = vpop.f32.mrb[0].mxu0
        %v3640 = vadd.f32 %v3383, %v3639
        %v3641 = vpop.f32.mrb[0].mxu0
        %v3642 = vadd.f32 %v3385, %v3641
        %v3643 = vpop.f32.mrb[0].mxu0
        %v3644 = vadd.f32 %v3387, %v3643
        %3645 = vmatprep.mubr.bf16.mxu0 0
        %3646 = vmatmul.mubr.bf16.gmra.mrb[0].mxu0 %v2611
        %v3647 = vpop.f32.mrb[0].mxu0
        %v3648 = vadd.f32 %v3391, %v3647
        %v3649 = vpop.f32.mrb[0].mxu0
        %v3650 = vadd.f32 %v3393, %v3649
        %v3651 = vpop.f32.mrb[0].mxu0
        %v3652 = vpop.f32.mrb[0].mxu0
        %v3653 = vadd.f32 %v3396, %v3652
        %3654 = vdwg.mxu0
        %3655 = vmatprep.subr.bf16.mxu0 0
        %3656 = vmatpush1.bf16.msra.mxu0 %v2999
        %3657 = vmatprep.subr.bf16.mxu0 0
        %3658 = vmatpush1.bf16.msra.mxu0 %v3002
        %3659 = vmatprep.subr.bf16.mxu0 0
        %3660 = vmatpush1.bf16.msra.mxu0 %v3005
        %3661 = vmatprep.subr.bf16.mxu0 0
        %3662 = vmatpush1.bf16.msra.mxu0 %v3008
        %3663 = vmatprep.subr.bf16.mxu0 0
        %3664 = vmatpush1.bf16.msra.mxu0 %v3011
        %3665 = vmatprep.subr.bf16.mxu0 0
        %3666 = vmatpush1.bf16.msra.mxu0 %v3014
        %3667 = vmatprep.subr.bf16.mxu0 0
        %3668 = vmatpush1.bf16.msra.mxu0 %v3017
        %3669 = vmatprep.subr.bf16.mxu0 0
        %3670 = vmatpush1.bf16.msra.mxu0 %v3020
        %3671 = vmatprep.subr.bf16.mxu0 0
        %3672 = vmatpush1.bf16.msra.mxu0 %v3023
        %3673 = vmatprep.subr.bf16.mxu0 0
        %3674 = vmatpush1.bf16.msra.mxu0 %v3026
        %3675 = vmatprep.subr.bf16.mxu0 0
        %3676 = vmatpush1.bf16.msra.mxu0 %v3029
        %3677 = vmatprep.subr.bf16.mxu0 0
        %3678 = vmatpush1.bf16.msra.mxu0 %v3032
        %3679 = vmatprep.subr.bf16.mxu0 0
        %3680 = vmatpush1.bf16.msra.mxu0 %v3035
        %3681 = vmatprep.subr.bf16.mxu0 0
        %3682 = vmatpush1.bf16.msra.mxu0 %v3038
        %3683 = vmatprep.subr.bf16.mxu0 0
        %3684 = vmatpush1.bf16.msra.mxu0 %v3041
        %3685 = vmatprep.subr.bf16.mxu0 0
        %3686 = vmatpush1.bf16.msra.mxu0 %v3044
        %3687 = vmatprep.mubr.bf16.mxu0 %v2635
        %3688 = vmatmul.mubr.bf16.gmra.mrb[0].mxu0 %v2611
        %v3689 = vpop.f32.mrb[0].mxu0
        %v3690 = vadd.f32 0.0, %v3689
        %v3691 = vpop.f32.mrb[0].mxu0
        %v3692 = vpop.f32.mrb[0].mxu0
        %v3693 = vadd.f32 0.0, %v3692
        %v3694 = vpop.f32.mrb[0].mxu0
        %3695 = vmatprep.mubr.bf16.mxu0 %v2636
        %3696 = vmatmul.mubr.bf16.gmra.mrb[0].mxu0 %v2612
        %v3697 = vpop.f32.mrb[0].mxu0
        %v3698 = vadd.f32 0.0, %v3697
        %v3699 = vpop.f32.mrb[0].mxu0
        %v3700 = vpop.f32.mrb[0].mxu0
        %v3701 = vadd.f32 0.0, %v3700
        %v3702 = vpop.f32.mrb[0].mxu0
        %3703 = vmatprep.mubr.bf16.mxu0 %v2637
        %3704 = vmatmul.mubr.bf16.gmra.mrb[0].mxu0 %v2613
        %v3705 = vpop.f32.mrb[0].mxu0
        %v3706 = vadd.f32 0.0, %v3705
        %v3707 = vpop.f32.mrb[0].mxu0
        %v3708 = vpop.f32.mrb[0].mxu0
        %v3709 = vadd.f32 0.0, %v3708
        %v3710 = vpop.f32.mrb[0].mxu0
        %3711 = vmatprep.mubr.bf16.mxu0 %v2638
        %3712 = vmatmul.mubr.bf16.gmra.mrb[0].mxu0 %v2614
        %v3713 = vpop.f32.mrb[0].mxu0
        %v3714 = vadd.f32 0.0, %v3713
        %v3715 = vpop.f32.mrb[0].mxu0
        %v3716 = vpop.f32.mrb[0].mxu0
        %v3717 = vadd.f32 0.0, %v3716
        %v3718 = vpop.f32.mrb[0].mxu0
        %3719 = vmatprep.mubr.bf16.mxu0 %v2639
        %3720 = vmatmul.mubr.bf16.gmra.mrb[0].mxu0 %v2615
        %v3721 = vpop.f32.mrb[0].mxu0
        %v3722 = vadd.f32 0.0, %v3721
        %v3723 = vpop.f32.mrb[0].mxu0
        %v3724 = vpop.f32.mrb[0].mxu0
        %v3725 = vadd.f32 0.0, %v3724
        %v3726 = vpop.f32.mrb[0].mxu0
        %3727 = vmatprep.mubr.bf16.mxu0 %v2640
        %3728 = vmatmul.mubr.bf16.gmra.mrb[0].mxu0 %v2616
        %v3729 = vpop.f32.mrb[0].mxu0
        %v3730 = vadd.f32 0.0, %v3729
        %v3731 = vpop.f32.mrb[0].mxu0
        %v3732 = vpop.f32.mrb[0].mxu0
        %v3733 = vadd.f32 0.0, %v3732
        %v3734 = vpop.f32.mrb[0].mxu0
        %3735 = vmatprep.mubr.bf16.mxu0 %v2641
        %3736 = vmatmul.mubr.bf16.gmra.mrb[0].mxu0 %v2617
        %v3737 = vpop.f32.mrb[0].mxu0
        %v3738 = vadd.f32 0.0, %v3737
        %v3739 = vpop.f32.mrb[0].mxu0
        %v3740 = vpop.f32.mrb[0].mxu0
        %v3741 = vadd.f32 0.0, %v3740
        %v3742 = vpop.f32.mrb[0].mxu0
        %3743 = vmatprep.mubr.bf16.mxu0 %v2642
        %3744 = vmatmul.mubr.bf16.gmra.mrb[0].mxu0 %v2618
        %v3745 = vpop.f32.mrb[0].mxu0
        %v3746 = vadd.f32 0.0, %v3745
        %v3747 = vpop.f32.mrb[0].mxu0
        %v3748 = vpop.f32.mrb[0].mxu0
        %v3749 = vadd.f32 0.0, %v3748
        %v3750 = vpop.f32.mrb[0].mxu0
        %3751 = vmatprep.mubr.bf16.mxu0 %v2643
        %3752 = vmatmul.mubr.bf16.gmra.mrb[0].mxu0 %v2619
        %v3753 = vpop.f32.mrb[0].mxu0
        %v3754 = vadd.f32 0.0, %v3753
        %v3755 = vpop.f32.mrb[0].mxu0
        %v3756 = vpop.f32.mrb[0].mxu0
        %v3757 = vadd.f32 0.0, %v3756
        %v3758 = vpop.f32.mrb[0].mxu0
        %3759 = vmatprep.mubr.bf16.mxu0 %v2644
        %3760 = vmatmul.mubr.bf16.gmra.mrb[0].mxu0 %v2620
        %v3761 = vpop.f32.mrb[0].mxu0
        %v3762 = vadd.f32 0.0, %v3761
        %v3763 = vpop.f32.mrb[0].mxu0
        %v3764 = vpop.f32.mrb[0].mxu0
        %v3765 = vadd.f32 0.0, %v3764
        %v3766 = vpop.f32.mrb[0].mxu0
        %3767 = vmatprep.mubr.bf16.mxu0 %v2645
        %3768 = vmatmul.mubr.bf16.gmra.mrb[0].mxu0 %v2621
        %v3769 = vpop.f32.mrb[0].mxu0
        %v3770 = vadd.f32 0.0, %v3769
        %v3771 = vpop.f32.mrb[0].mxu0
        %v3772 = vpop.f32.mrb[0].mxu0
        %v3773 = vadd.f32 0.0, %v3772
        %v3774 = vpop.f32.mrb[0].mxu0
        %3775 = vmatprep.mubr.bf16.mxu0 %v2646
        %3776 = vmatmul.mubr.bf16.gmra.mrb[0].mxu0 %v2622
        %v3777 = vpop.f32.mrb[0].mxu0
        %v3778 = vadd.f32 0.0, %v3777
        %v3779 = vpop.f32.mrb[0].mxu0
        %v3780 = vpop.f32.mrb[0].mxu0
        %v3781 = vadd.f32 0.0, %v3780
        %v3782 = vpop.f32.mrb[0].mxu0
        %3783 = vmatprep.mubr.bf16.mxu0 %v2647
        %3784 = vmatmul.mubr.bf16.gmra.mrb[0].mxu0 %v2623
        %v3785 = vpop.f32.mrb[0].mxu0
        %v3786 = vadd.f32 0.0, %v3785
        %v3787 = vpop.f32.mrb[0].mxu0
        %v3788 = vpop.f32.mrb[0].mxu0
        %v3789 = vadd.f32 0.0, %v3788
        %v3790 = vpop.f32.mrb[0].mxu0
        %3791 = vmatprep.mubr.bf16.mxu0 %v2648
        %3792 = vmatmul.mubr.bf16.gmra.mrb[0].mxu0 %v2624
        %v3793 = vpop.f32.mrb[0].mxu0
        %v3794 = vadd.f32 0.0, %v3793
        %v3795 = vpop.f32.mrb[0].mxu0
        %v3796 = vpop.f32.mrb[0].mxu0
        %v3797 = vadd.f32 0.0, %v3796
        %v3798 = vpop.f32.mrb[0].mxu0
        %3799 = vmatprep.mubr.bf16.mxu0 %v2649
        %3800 = vmatmul.mubr.bf16.gmra.mrb[0].mxu0 %v2625
        %v3801 = vpop.f32.mrb[0].mxu0
        %v3802 = vadd.f32 0.0, %v3801
        %v3803 = vpop.f32.mrb[0].mxu0
        %v3804 = vpop.f32.mrb[0].mxu0
        %v3805 = vadd.f32 0.0, %v3804
        %v3806 = vpop.f32.mrb[0].mxu0
        %3807 = vmatprep.mubr.bf16.mxu0 %v2650
        %3808 = vmatmul.mubr.bf16.gmra.mrb[0].mxu0 %v2626
        %v3809 = vpop.f32.mrb[0].mxu0
        %v3810 = vadd.f32 0.0, %v3809
        %v3811 = vpop.f32.mrb[0].mxu0
        %v3812 = vpop.f32.mrb[0].mxu0
        %v3813 = vadd.f32 0.0, %v3812
        %v3814 = vpop.f32.mrb[0].mxu0
        %3815 = vmatprep.mubr.bf16.mxu0 %v2651
        %3816 = vmatmul.mubr.bf16.gmra.mrb[0].mxu0 %v2627
        %v3817 = vpop.f32.mrb[0].mxu0
        %v3818 = vadd.f32 0.0, %v3817
        %v3819 = vpop.f32.mrb[0].mxu0
        %v3820 = vpop.f32.mrb[0].mxu0
        %v3821 = vadd.f32 0.0, %v3820
        %v3822 = vpop.f32.mrb[0].mxu0
        %3823 = vmatprep.mubr.bf16.mxu0 %v2652
        %3824 = vmatmul.mubr.bf16.gmra.mrb[0].mxu0 %v2628
        %v3825 = vpop.f32.mrb[0].mxu0
        %v3826 = vadd.f32 0.0, %v3825
        %v3827 = vpop.f32.mrb[0].mxu0
        %v3828 = vpop.f32.mrb[0].mxu0
        %v3829 = vadd.f32 0.0, %v3828
        %v3830 = vpop.f32.mrb[0].mxu0
        %3831 = vmatprep.mubr.bf16.mxu0 %v2653
        %3832 = vmatmul.mubr.bf16.gmra.mrb[0].mxu0 %v2629
        %v3833 = vpop.f32.mrb[0].mxu0
        %v3834 = vadd.f32 0.0, %v3833
        %v3835 = vpop.f32.mrb[0].mxu0
        %v3836 = vpop.f32.mrb[0].mxu0
        %v3837 = vadd.f32 0.0, %v3836
        %v3838 = vpop.f32.mrb[0].mxu0
        %3839 = vmatprep.mubr.bf16.mxu0 %v2654
        %3840 = vmatmul.mubr.bf16.gmra.mrb[0].mxu0 %v2630
        %v3841 = vpop.f32.mrb[0].mxu0
        %v3842 = vadd.f32 0.0, %v3841
        %v3843 = vpop.f32.mrb[0].mxu0
        %v3844 = vpop.f32.mrb[0].mxu0
        %v3845 = vadd.f32 0.0, %v3844
        %v3846 = vpop.f32.mrb[0].mxu0
        %3847 = vmatprep.mubr.bf16.mxu0 %v2655
        %3848 = vmatmul.mubr.bf16.gmra.mrb[0].mxu0 %v2631
        %v3849 = vpop.f32.mrb[0].mxu0
        %v3850 = vadd.f32 0.0, %v3849
        %v3851 = vpop.f32.mrb[0].mxu0
        %v3852 = vpop.f32.mrb[0].mxu0
        %v3853 = vadd.f32 0.0, %v3852
        %v3854 = vpop.f32.mrb[0].mxu0
        %3855 = vmatprep.mubr.bf16.mxu0 %v2656
        %3856 = vmatmul.mubr.bf16.gmra.mrb[0].mxu0 %v2632
        %v3857 = vpop.f32.mrb[0].mxu0
        %v3858 = vadd.f32 0.0, %v3857
        %v3859 = vpop.f32.mrb[0].mxu0
        %v3860 = vpop.f32.mrb[0].mxu0
        %v3861 = vadd.f32 0.0, %v3860
        %v3862 = vpop.f32.mrb[0].mxu0
        %3863 = vmatprep.mubr.bf16.mxu0 %v2657
        %3864 = vmatmul.mubr.bf16.gmra.mrb[0].mxu0 %v2633
        %v3865 = vpop.f32.mrb[0].mxu0
        %v3866 = vadd.f32 0.0, %v3865
        %v3867 = vpop.f32.mrb[0].mxu0
        %v3868 = vpop.f32.mrb[0].mxu0
        %v3869 = vadd.f32 0.0, %v3868
        %v3870 = vpop.f32.mrb[0].mxu0
        %3871 = vmatprep.mubr.bf16.mxu0 %v2658
        %3872 = vmatmul.mubr.bf16.gmra.mrb[0].mxu0 %v2634
        %v3873 = vpop.f32.mrb[0].mxu0
        %v3874 = vadd.f32 0.0, %v3873
        %v3875 = vpop.f32.mrb[0].mxu0
        %v3876 = vpop.f32.mrb[0].mxu0
        %v3877 = vadd.f32 0.0, %v3876
        %v3878 = vpop.f32.mrb[0].mxu0
        %3879 = vdwg.mxu0
        %3880 = vmatprep.subr.bf16.mxu0 0
        %3881 = vmatpush1.bf16.msra.mxu0 %v3047
        %3882 = vmatprep.subr.bf16.mxu0 0
        %3883 = vmatpush1.bf16.msra.mxu0 %v3050
        %3884 = vmatprep.subr.bf16.mxu0 0
        %3885 = vmatpush1.bf16.msra.mxu0 %v3053
        %3886 = vmatprep.subr.bf16.mxu0 0
        %3887 = vmatpush1.bf16.msra.mxu0 %v3056
        %3888 = vmatprep.subr.bf16.mxu0 0
        %3889 = vmatpush1.bf16.msra.mxu0 %v3059
        %3890 = vmatprep.subr.bf16.mxu0 0
        %3891 = vmatpush1.bf16.msra.mxu0 %v3062
        %3892 = vmatprep.subr.bf16.mxu0 0
        %3893 = vmatpush1.bf16.msra.mxu0 %v3065
        %3894 = vmatprep.subr.bf16.mxu0 0
        %3895 = vmatpush1.bf16.msra.mxu0 %v3068
        %3896 = vmatprep.subr.bf16.mxu0 0
        %3897 = vmatpush1.bf16.msra.mxu0 0
        %3898 = vmatprep.subr.bf16.mxu0 0
        %3899 = vmatpush1.bf16.msra.mxu0 0
        %3900 = vmatprep.subr.bf16.mxu0 0
        %3901 = vmatpush1.bf16.msra.mxu0 0
        %3902 = vmatprep.subr.bf16.mxu0 0
        %3903 = vmatpush1.bf16.msra.mxu0 0
        %3904 = vmatprep.subr.bf16.mxu0 0
        %3905 = vmatpush1.bf16.msra.mxu0 0
        %3906 = vmatprep.subr.bf16.mxu0 0
        %3907 = vmatpush1.bf16.msra.mxu0 0
        %3908 = vmatprep.subr.bf16.mxu0 0
        %3909 = vmatpush1.bf16.msra.mxu0 0
        %3910 = vmatprep.subr.bf16.mxu0 0
        %3911 = vmatpush1.bf16.msra.mxu0 0
        %3912 = vmatprep.mubr.bf16.mxu0 0
        %3913 = vmatmul.mubr.bf16.gmra.mrb[0].mxu0 %v2614
        %v3914 = vpop.f32.mrb[0].mxu0
        %v3915 = vadd.f32 %v3690, %v3914
        %v3916 = vpop.f32.mrb[0].mxu0
        %v3917 = vpop.f32.mrb[0].mxu0
        %v3918 = vadd.f32 %v3693, %v3917
        %v3919 = vpop.f32.mrb[0].mxu0
        %3920 = vmatprep.mubr.bf16.mxu0 0
        %3921 = vmatmul.mubr.bf16.gmra.mrb[0].mxu0 %v2615
        %v3922 = vpop.f32.mrb[0].mxu0
        %v3923 = vadd.f32 %v3698, %v3922
        %v3924 = vpop.f32.mrb[0].mxu0
        %v3925 = vpop.f32.mrb[0].mxu0
        %v3926 = vadd.f32 %v3701, %v3925
        %v3927 = vpop.f32.mrb[0].mxu0
        %3928 = vmatprep.mubr.bf16.mxu0 0
        %3929 = vmatmul.mubr.bf16.gmra.mrb[0].mxu0 %v2616
        %v3930 = vpop.f32.mrb[0].mxu0
        %v3931 = vadd.f32 %v3706, %v3930
        %v3932 = vpop.f32.mrb[0].mxu0
        %v3933 = vpop.f32.mrb[0].mxu0
        %v3934 = vadd.f32 %v3709, %v3933
        %v3935 = vpop.f32.mrb[0].mxu0
        %3936 = vmatprep.mubr.bf16.mxu0 0
        %3937 = vmatmul.mubr.bf16.gmra.mrb[0].mxu0 %v2617
        %v3938 = vpop.f32.mrb[0].mxu0
        %v3939 = vadd.f32 %v3714, %v3938
        %v3940 = vpop.f32.mrb[0].mxu0
        %v3941 = vpop.f32.mrb[0].mxu0
        %v3942 = vadd.f32 %v3717, %v3941
        %v3943 = vpop.f32.mrb[0].mxu0
        %3944 = vmatprep.mubr.bf16.mxu0 0
        %3945 = vmatmul.mubr.bf16.gmra.mrb[0].mxu0 %v2618
        %v3946 = vpop.f32.mrb[0].mxu0
        %v3947 = vadd.f32 %v3722, %v3946
        %v3948 = vpop.f32.mrb[0].mxu0
        %v3949 = vpop.f32.mrb[0].mxu0
        %v3950 = vadd.f32 %v3725, %v3949
        %v3951 = vpop.f32.mrb[0].mxu0
        %3952 = vmatprep.mubr.bf16.mxu0 0
        %3953 = vmatmul.mubr.bf16.gmra.mrb[0].mxu0 %v2619
        %v3954 = vpop.f32.mrb[0].mxu0
        %v3955 = vadd.f32 %v3730, %v3954
        %v3956 = vpop.f32.mrb[0].mxu0
        %v3957 = vpop.f32.mrb[0].mxu0
        %v3958 = vadd.f32 %v3733, %v3957
        %v3959 = vpop.f32.mrb[0].mxu0
        %3960 = vmatprep.mubr.bf16.mxu0 0
        %3961 = vmatmul.mubr.bf16.gmra.mrb[0].mxu0 %v2620
        %v3962 = vpop.f32.mrb[0].mxu0
        %v3963 = vadd.f32 %v3738, %v3962
        %v3964 = vpop.f32.mrb[0].mxu0
        %v3965 = vpop.f32.mrb[0].mxu0
        %v3966 = vadd.f32 %v3741, %v3965
        %v3967 = vpop.f32.mrb[0].mxu0
        %3968 = vmatprep.mubr.bf16.mxu0 0
        %3969 = vmatmul.mubr.bf16.gmra.mrb[0].mxu0 %v2621
        %v3970 = vpop.f32.mrb[0].mxu0
        %v3971 = vadd.f32 %v3746, %v3970
        %v3972 = vpop.f32.mrb[0].mxu0
        %v3973 = vpop.f32.mrb[0].mxu0
        %v3974 = vadd.f32 %v3749, %v3973
        %v3975 = vpop.f32.mrb[0].mxu0
        %3976 = vmatprep.mubr.bf16.mxu0 0
        %3977 = vmatmul.mubr.bf16.gmra.mrb[0].mxu0 %v2622
        %v3978 = vpop.f32.mrb[0].mxu0
        %v3979 = vadd.f32 %v3754, %v3978
        %v3980 = vpop.f32.mrb[0].mxu0
        %v3981 = vpop.f32.mrb[0].mxu0
        %v3982 = vadd.f32 %v3757, %v3981
        %v3983 = vpop.f32.mrb[0].mxu0
        %3984 = vmatprep.mubr.bf16.mxu0 0
        %3985 = vmatmul.mubr.bf16.gmra.mrb[0].mxu0 %v2623
        %v3986 = vpop.f32.mrb[0].mxu0
        %v3987 = vadd.f32 %v3762, %v3986
        %v3988 = vpop.f32.mrb[0].mxu0
        %v3989 = vpop.f32.mrb[0].mxu0
        %v3990 = vadd.f32 %v3765, %v3989
        %v3991 = vpop.f32.mrb[0].mxu0
        %3992 = vmatprep.mubr.bf16.mxu0 0
        %3993 = vmatmul.mubr.bf16.gmra.mrb[0].mxu0 %v2624
        %v3994 = vpop.f32.mrb[0].mxu0
        %v3995 = vadd.f32 %v3770, %v3994
        %v3996 = vpop.f32.mrb[0].mxu0
        %v3997 = vpop.f32.mrb[0].mxu0
        %v3998 = vadd.f32 %v3773, %v3997
        %v3999 = vpop.f32.mrb[0].mxu0
        %4000 = vmatprep.mubr.bf16.mxu0 0
        %4001 = vmatmul.mubr.bf16.gmra.mrb[0].mxu0 %v2625
        %v4002 = vpop.f32.mrb[0].mxu0
        %v4003 = vadd.f32 %v3778, %v4002
        %v4004 = vpop.f32.mrb[0].mxu0
        %v4005 = vpop.f32.mrb[0].mxu0
        %v4006 = vadd.f32 %v3781, %v4005
        %v4007 = vpop.f32.mrb[0].mxu0
        %4008 = vmatprep.mubr.bf16.mxu0 0
        %4009 = vmatmul.mubr.bf16.gmra.mrb[0].mxu0 %v2626
        %v4010 = vpop.f32.mrb[0].mxu0
        %v4011 = vadd.f32 %v3786, %v4010
        %v4012 = vpop.f32.mrb[0].mxu0
        %v4013 = vpop.f32.mrb[0].mxu0
        %v4014 = vadd.f32 %v3789, %v4013
        %v4015 = vpop.f32.mrb[0].mxu0
        %4016 = vmatprep.mubr.bf16.mxu0 0
        %4017 = vmatmul.mubr.bf16.gmra.mrb[0].mxu0 %v2627
        %v4018 = vpop.f32.mrb[0].mxu0
        %v4019 = vadd.f32 %v3794, %v4018
        %v4020 = vpop.f32.mrb[0].mxu0
        %v4021 = vpop.f32.mrb[0].mxu0
        %v4022 = vadd.f32 %v3797, %v4021
        %v4023 = vpop.f32.mrb[0].mxu0
        %4024 = vmatprep.mubr.bf16.mxu0 0
        %4025 = vmatmul.mubr.bf16.gmra.mrb[0].mxu0 %v2628
        %v4026 = vpop.f32.mrb[0].mxu0
        %v4027 = vadd.f32 %v3802, %v4026
        %v4028 = vpop.f32.mrb[0].mxu0
        %v4029 = vpop.f32.mrb[0].mxu0
        %v4030 = vadd.f32 %v3805, %v4029
        %v4031 = vpop.f32.mrb[0].mxu0
        %4032 = vmatprep.mubr.bf16.mxu0 0
        %4033 = vmatmul.mubr.bf16.gmra.mrb[0].mxu0 %v2629
        %v4034 = vpop.f32.mrb[0].mxu0
        %v4035 = vadd.f32 %v3810, %v4034
        %v4036 = vpop.f32.mrb[0].mxu0
        %v4037 = vpop.f32.mrb[0].mxu0
        %v4038 = vadd.f32 %v3813, %v4037
        %v4039 = vpop.f32.mrb[0].mxu0
        %4040 = vmatprep.mubr.bf16.mxu0 0
        %4041 = vmatmul.mubr.bf16.gmra.mrb[0].mxu0 %v2630
        %v4042 = vpop.f32.mrb[0].mxu0
        %v4043 = vadd.f32 %v3818, %v4042
        %v4044 = vpop.f32.mrb[0].mxu0
        %v4045 = vpop.f32.mrb[0].mxu0
        %v4046 = vadd.f32 %v3821, %v4045
        %v4047 = vpop.f32.mrb[0].mxu0
        %4048 = vmatprep.mubr.bf16.mxu0 0
        %4049 = vmatmul.mubr.bf16.gmra.mrb[0].mxu0 %v2631
        %v4050 = vpop.f32.mrb[0].mxu0
        %v4051 = vadd.f32 %v3826, %v4050
        %v4052 = vpop.f32.mrb[0].mxu0
        %v4053 = vpop.f32.mrb[0].mxu0
        %v4054 = vadd.f32 %v3829, %v4053
        %v4055 = vpop.f32.mrb[0].mxu0
        %4056 = vmatprep.mubr.bf16.mxu0 0
        %4057 = vmatmul.mubr.bf16.gmra.mrb[0].mxu0 %v2632
        %v4058 = vpop.f32.mrb[0].mxu0
        %v4059 = vadd.f32 %v3834, %v4058
        %v4060 = vpop.f32.mrb[0].mxu0
        %v4061 = vpop.f32.mrb[0].mxu0
        %v4062 = vadd.f32 %v3837, %v4061
        %v4063 = vpop.f32.mrb[0].mxu0
        %4064 = vmatprep.mubr.bf16.mxu0 0
        %4065 = vmatmul.mubr.bf16.gmra.mrb[0].mxu0 %v2633
        %v4066 = vpop.f32.mrb[0].mxu0
        %v4067 = vadd.f32 %v3842, %v4066
        %v4068 = vpop.f32.mrb[0].mxu0
        %v4069 = vpop.f32.mrb[0].mxu0
        %v4070 = vadd.f32 %v3845, %v4069
        %v4071 = vpop.f32.mrb[0].mxu0
        %4072 = vmatprep.mubr.bf16.mxu0 0
        %4073 = vmatmul.mubr.bf16.gmra.mrb[0].mxu0 %v2634
        %v4074 = vpop.f32.mrb[0].mxu0
        %v4075 = vadd.f32 %v3850, %v4074
        %v4076 = vpop.f32.mrb[0].mxu0
        %v4077 = vpop.f32.mrb[0].mxu0
        %v4078 = vadd.f32 %v3853, %v4077
        %v4079 = vpop.f32.mrb[0].mxu0
        %4080 = vmatprep.mubr.bf16.mxu0 0
        %4081 = vmatmul.mubr.bf16.gmra.mrb[0].mxu0 %v2659
        %v4082 = vpop.f32.mrb[0].mxu0
        %v4083 = vadd.f32 %v3858, %v4082
        %v4084 = vpop.f32.mrb[0].mxu0
        %v4085 = vpop.f32.mrb[0].mxu0
        %v4086 = vadd.f32 %v3861, %v4085
        %v4087 = vpop.f32.mrb[0].mxu0
        %4088 = vmatprep.mubr.bf16.mxu0 0
        %4089 = vmatmul.mubr.bf16.gmra.mrb[0].mxu0 %v2660
        %v4090 = vpop.f32.mrb[0].mxu0
        %v4091 = vadd.f32 %v3866, %v4090
        %v4092 = vpop.f32.mrb[0].mxu0
        %v4093 = vpop.f32.mrb[0].mxu0
        %v4094 = vadd.f32 %v3869, %v4093
        %v4095 = vpop.f32.mrb[0].mxu0
        %4096 = vmatprep.mubr.bf16.mxu0 0
        %4097 = vmatmul.mubr.bf16.gmra.mrb[0].mxu0 %v2611
        %v4098 = vpop.f32.mrb[0].mxu0
        %v4099 = vadd.f32 %v3874, %v4098
        %v4100 = vpop.f32.mrb[0].mxu0
        %v4101 = vpop.f32.mrb[0].mxu0
        %v4102 = vadd.f32 %v3877, %v4101
        %v4103 = vpop.f32.mrb[0].mxu0
        %4104 = vdwg.mxu0
        %v4153 = vrot.slane %v3435, 1
        %v4154 = vrot.slane %v3439, 1
        %v4155 = vsel %vm1956, %v4153, %v4154
        %v4156 = vrot.slane %v3444, 1
        %v4157 = vsel %vm1956, %v4154, %v4156
        %v4158 = vrot.slane %v3448, 1
        %v4159 = vrot.slane %v3454, 1
        %v4160 = vsel %vm1956, %v4158, %v4159
        %v4161 = vrot.slane %v3457, 1
        %v4162 = vsel %vm1956, %v4159, %v4161
        %v4163 = vrot.slane %v3463, 1
        %v4164 = vrot.slane %v3467, 1
        %v4165 = vsel %vm1956, %v4163, %v4164
        %v4166 = vrot.slane %v3472, 1
        %v4167 = vsel %vm1956, %v4164, %v4166
        %v4168 = vrot.slane %v3476, 1
        %v4169 = vrot.slane %v3482, 1
        %v4170 = vsel %vm1956, %v4168, %v4169
        %v4171 = vrot.slane %v3485, 1
        %v4172 = vsel %vm1956, %v4169, %v4171
        %v4173 = vrot.slane %v3491, 1
        %v4174 = vrot.slane %v3495, 1
        %v4175 = vsel %vm1956, %v4173, %v4174
        %v4176 = vrot.slane %v3500, 1
        %v4177 = vsel %vm1956, %v4174, %v4176
        %v4178 = vrot.slane %v3504, 1
        %v4179 = vrot.slane %v3510, 1
        %v4180 = vsel %vm1956, %v4178, %v4179
        %v4181 = vrot.slane %v3513, 1
        %v4182 = vsel %vm1956, %v4179, %v4181
        %v4183 = vrot.slane %v3519, 1
        %v4184 = vrot.slane %v3523, 1
        %v4185 = vsel %vm1956, %v4183, %v4184
        %v4186 = vrot.slane %v3528, 1
        %v4187 = vsel %vm1956, %v4184, %v4186
        %v4188 = vrot.slane %v3532, 1
        %v4189 = vrot.slane %v3538, 1
        %v4190 = vsel %vm1956, %v4188, %v4189
        %v4191 = vrot.slane %v3541, 1
        %v4192 = vsel %vm1956, %v4189, %v4191
        %v4193 = vrot.slane %v3547, 1
        %v4194 = vrot.slane %v3551, 1
        %v4195 = vsel %vm1956, %v4193, %v4194
        %v4196 = vrot.slane %v3556, 1
        %v4197 = vsel %vm1956, %v4194, %v4196
        %v4198 = vrot.slane %v3560, 1
        %v4199 = vrot.slane %v3566, 1
        %v4200 = vsel %vm1956, %v4198, %v4199
        %v4201 = vrot.slane %v3569, 1
        %v4202 = vsel %vm1956, %v4199, %v4201
        %v4203 = vrot.slane %v3575, 1
        %v4204 = vrot.slane %v3579, 1
        %v4205 = vsel %vm1956, %v4203, %v4204
        %v4206 = vrot.slane %v3584, 1
        %v4207 = vsel %vm1956, %v4204, %v4206
        %v4208 = vrot.slane %v3588, 1
        %v4209 = vrot.slane %v3594, 1
        %v4210 = vsel %vm1956, %v4208, %v4209
        %v4211 = vrot.slane %v3597, 1
        %v4212 = vsel %vm1956, %v4209, %v4211
        %v4213 = vrot.slane %v3603, 1
        %v4214 = vrot.slane %v3607, 1
        %v4215 = vsel %vm1956, %v4213, %v4214
        %v4216 = vrot.slane %v3612, 1
        %v4217 = vsel %vm1956, %v4214, %v4216
        %v4218 = vrot.slane %v3616, 1
        %v4219 = vrot.slane %v3622, 1
        %v4220 = vsel %vm1956, %v4218, %v4219
        %v4221 = vrot.slane %v3625, 1
        %v4222 = vsel %vm1956, %v4219, %v4221
        %v4223 = vrot.slane %v3631, 1
        %v4224 = vrot.slane %v3635, 1
        %v4225 = vsel %vm1956, %v4223, %v4224
        %v4226 = vrot.slane %v3640, 1
        %v4227 = vsel %vm1956, %v4224, %v4226
        %v4228 = vrot.slane %v3644, 1
        %v4229 = vrot.slane %v3650, 1
        %v4230 = vsel %vm1956, %v4228, %v4229
        %v4231 = vrot.slane %v3653, 1
        %v4232 = vsel %vm1956, %v4229, %v4231
        %v4265 = vadd.f32 %v3433, %v4155
        %v4266 = vadd.f32 %v3437, %v4157
        %v4267 = vadd.f32 %v3446, %v4160
        %v4268 = vadd.f32 %v3452, %v4162
        %v4269 = vadd.f32 %v3461, %v4165
        %v4270 = vadd.f32 %v3465, %v4167
        %v4271 = vadd.f32 %v3474, %v4170
        %v4272 = vadd.f32 %v3480, %v4172
        %v4273 = vadd.f32 %v3489, %v4175
        %v4274 = vadd.f32 %v3493, %v4177
        %v4275 = vadd.f32 %v3502, %v4180
        %v4276 = vadd.f32 %v3508, %v4182
        %v4277 = vadd.f32 %v3517, %v4185
        %v4278 = vadd.f32 %v3521, %v4187
        %v4279 = vadd.f32 %v3530, %v4190
        %v4280 = vadd.f32 %v3536, %v4192
        %v4281 = vadd.f32 %v3545, %v4195
        %v4282 = vadd.f32 %v3549, %v4197
        %v4283 = vadd.f32 %v3558, %v4200
        %v4284 = vadd.f32 %v3564, %v4202
        %v4285 = vadd.f32 %v3573, %v4205
        %v4286 = vadd.f32 %v3577, %v4207
        %v4287 = vadd.f32 %v3586, %v4210
        %v4288 = vadd.f32 %v3592, %v4212
        %v4289 = vadd.f32 %v3601, %v4215
        %v4290 = vadd.f32 %v3605, %v4217
        %v4291 = vadd.f32 %v3614, %v4220
        %v4292 = vadd.f32 %v3620, %v4222
        %v4293 = vadd.f32 %v3629, %v4225
        %v4294 = vadd.f32 %v3633, %v4227
        %v4295 = vadd.f32 %v3642, %v4230
        %v4296 = vadd.f32 %v3648, %v4232
        %v4345 = vrot.slane %v3915, 2
        %v4346 = vrot.slane %v3918, 2
        %v4347 = vsel %vm2198, %v4345, %v4346
        %v4348 = vrot.slane %v3923, 2
        %v4349 = vsel %vm2198, %v4346, %v4348
        %v4350 = vrot.slane %v3926, 2
        %v4351 = vrot.slane %v3931, 2
        %v4352 = vsel %vm2198, %v4350, %v4351
        %v4353 = vrot.slane %v3934, 2
        %v4354 = vsel %vm2198, %v4351, %v4353
        %v4355 = vrot.slane %v3939, 2
        %v4356 = vrot.slane %v3942, 2
        %v4357 = vsel %vm2198, %v4355, %v4356
        %v4358 = vrot.slane %v3947, 2
        %v4359 = vsel %vm2198, %v4356, %v4358
        %v4360 = vrot.slane %v3950, 2
        %v4361 = vrot.slane %v3955, 2
        %v4362 = vsel %vm2198, %v4360, %v4361
        %v4363 = vrot.slane %v3958, 2
        %v4364 = vsel %vm2198, %v4361, %v4363
        %v4365 = vrot.slane %v3963, 2
        %v4366 = vrot.slane %v3966, 2
        %v4367 = vsel %vm2198, %v4365, %v4366
        %v4368 = vrot.slane %v3971, 2
        %v4369 = vsel %vm2198, %v4366, %v4368
        %v4370 = vrot.slane %v3974, 2
        %v4371 = vrot.slane %v3979, 2
        %v4372 = vsel %vm2198, %v4370, %v4371
        %v4373 = vrot.slane %v3982, 2
        %v4374 = vsel %vm2198, %v4371, %v4373
        %v4375 = vrot.slane %v3987, 2
        %v4376 = vrot.slane %v3990, 2
        %v4377 = vsel %vm2198, %v4375, %v4376
        %v4378 = vrot.slane %v3995, 2
        %v4379 = vsel %vm2198, %v4376, %v4378
        %v4380 = vrot.slane %v3998, 2
        %v4381 = vrot.slane %v4003, 2
        %v4382 = vsel %vm2198, %v4380, %v4381
        %v4383 = vrot.slane %v4006, 2
        %v4384 = vsel %vm2198, %v4381, %v4383
        %v4385 = vrot.slane %v4011, 2
        %v4386 = vrot.slane %v4014, 2
        %v4387 = vsel %vm2198, %v4385, %v4386
        %v4388 = vrot.slane %v4019, 2
        %v4389 = vsel %vm2198, %v4386, %v4388
        %v4390 = vrot.slane %v4022, 2
        %v4391 = vrot.slane %v4027, 2
        %v4392 = vsel %vm2198, %v4390, %v4391
        %v4393 = vrot.slane %v4030, 2
        %v4394 = vsel %vm2198, %v4391, %v4393
        %v4395 = vrot.slane %v4035, 2
        %v4396 = vrot.slane %v4038, 2
        %v4397 = vsel %vm2198, %v4395, %v4396
        %v4398 = vrot.slane %v4043, 2
        %v4399 = vsel %vm2198, %v4396, %v4398
        %v4400 = vrot.slane %v4046, 2
        %v4401 = vrot.slane %v4051, 2
        %v4402 = vsel %vm2198, %v4400, %v4401
        %v4403 = vrot.slane %v4054, 2
        %v4404 = vsel %vm2198, %v4401, %v4403
        %v4405 = vrot.slane %v4059, 2
        %v4406 = vrot.slane %v4062, 2
        %v4407 = vsel %vm2198, %v4405, %v4406
        %v4408 = vrot.slane %v4067, 2
        %v4409 = vsel %vm2198, %v4406, %v4408
        %v4410 = vrot.slane %v4070, 2
        %v4411 = vrot.slane %v4075, 2
        %v4412 = vsel %vm2198, %v4410, %v4411
        %v4413 = vrot.slane %v4078, 2
        %v4414 = vsel %vm2198, %v4411, %v4413
        %v4415 = vrot.slane %v4083, 2
        %v4416 = vrot.slane %v4086, 2
        %v4417 = vsel %vm2198, %v4415, %v4416
        %v4418 = vrot.slane %v4091, 2
        %v4419 = vsel %vm2198, %v4416, %v4418
        %v4420 = vrot.slane %v4094, 2
        %v4421 = vrot.slane %v4099, 2
        %v4422 = vsel %vm2198, %v4420, %v4421
        %v4423 = vrot.slane %v4102, 2
        %v4424 = vsel %vm2198, %v4421, %v4423
        %v4457 = vadd.f32 %v4265, %v4347
        %v4458 = vadd.f32 %v4266, %v4349
        %v4459 = vadd.f32 %v4267, %v4352
        %v4460 = vadd.f32 %v4268, %v4354
        %v4461 = vadd.f32 %v4269, %v4357
        %v4462 = vadd.f32 %v4270, %v4359
        %v4463 = vadd.f32 %v4271, %v4362
        %v4464 = vadd.f32 %v4272, %v4364
        %v4465 = vadd.f32 %v4273, %v4367
        %v4466 = vadd.f32 %v4274, %v4369
        %v4467 = vadd.f32 %v4275, %v4372
        %v4468 = vadd.f32 %v4276, %v4374
        %v4469 = vadd.f32 %v4277, %v4377
        %v4470 = vadd.f32 %v4278, %v4379
        %v4471 = vadd.f32 %v4279, %v4382
        %v4472 = vadd.f32 %v4280, %v4384
        %v4473 = vadd.f32 %v4281, %v4387
        %v4474 = vadd.f32 %v4282, %v4389
        %v4475 = vadd.f32 %v4283, %v4392
        %v4476 = vadd.f32 %v4284, %v4394
        %v4477 = vadd.f32 %v4285, %v4397
        %v4478 = vadd.f32 %v4286, %v4399
        %v4479 = vadd.f32 %v4287, %v4402
        %v4480 = vadd.f32 %v4288, %v4404
        %v4481 = vadd.f32 %v4289, %v4407
        %v4482 = vadd.f32 %v4290, %v4409
        %v4483 = vadd.f32 %v4291, %v4412
        %v4484 = vadd.f32 %v4292, %v4414
        %v4485 = vadd.f32 %v4293, %v4417
        %v4486 = vadd.f32 %v4294, %v4419
        %v4487 = vadd.f32 %v4295, %v4422
        %v4488 = vadd.f32 %v4296, %v4424
        %v4489 = vld [vmem:[%s5] sm:$0x1]
        %v4491 = vlaneseq
        %v4492 = vshrl.u32 %v4491, 7
        %v4493 = vsub.s32 0, %v4492
        %v4494 = vrot.slane %v4489, %v4493
        %v4496 = vmul.f32 %v4457, %v4494
        %v4497 = vmul.f32 %v4458, %v4494
        %v4498 = vmul.f32 %v4459, %v4494
        %v4499 = vmul.f32 %v4460, %v4494
        %v4500 = vmul.f32 %v4461, %v4494
        %v4501 = vmul.f32 %v4462, %v4494
        %v4502 = vmul.f32 %v4463, %v4494
        %v4503 = vmul.f32 %v4464, %v4494
        %v4504 = vmul.f32 %v4465, %v4494
        %v4505 = vmul.f32 %v4466, %v4494
        %v4506 = vmul.f32 %v4467, %v4494
        %v4507 = vmul.f32 %v4468, %v4494
        %v4508 = vmul.f32 %v4469, %v4494
        %v4509 = vmul.f32 %v4470, %v4494
        %v4510 = vmul.f32 %v4471, %v4494
        %v4511 = vmul.f32 %v4472, %v4494
        %v4512 = vmul.f32 %v4473, %v4494
        %v4513 = vmul.f32 %v4474, %v4494
        %v4514 = vmul.f32 %v4475, %v4494
        %v4515 = vmul.f32 %v4476, %v4494
        %v4516 = vmul.f32 %v4477, %v4494
        %v4517 = vmul.f32 %v4478, %v4494
        %v4518 = vmul.f32 %v4479, %v4494
        %v4519 = vmul.f32 %v4480, %v4494
        %v4520 = vmul.f32 %v4481, %v4494
        %v4521 = vmul.f32 %v4482, %v4494
        %v4522 = vmul.f32 %v4483, %v4494
        %v4523 = vmul.f32 %v4484, %v4494
        %v4524 = vmul.f32 %v4485, %v4494
        %v4525 = vmul.f32 %v4486, %v4494
        %v4526 = vmul.f32 %v4487, %v4494
        %v4527 = vmul.f32 %v4488, %v4494
        %v4528 = vld [vmem:[%s6] sm:$0x1]
        %v4530 = vlaneseq
        %v4531 = vshrl.u32 %v4530, 7
        %v4532 = vsub.s32 0, %v4531
        %v4533 = vrot.slane %v4528, %v4532
        %v4535 = vadd.f32 %v4496, %v4533
        %v4536 = vadd.f32 %v4497, %v4533
        %v4537 = vadd.f32 %v4498, %v4533
        %v4538 = vadd.f32 %v4499, %v4533
        %v4539 = vadd.f32 %v4500, %v4533
        %v4540 = vadd.f32 %v4501, %v4533
        %v4541 = vadd.f32 %v4502, %v4533
        %v4542 = vadd.f32 %v4503, %v4533
        %v4543 = vadd.f32 %v4504, %v4533
        %v4544 = vadd.f32 %v4505, %v4533
        %v4545 = vadd.f32 %v4506, %v4533
        %v4546 = vadd.f32 %v4507, %v4533
        %v4547 = vadd.f32 %v4508, %v4533
        %v4548 = vadd.f32 %v4509, %v4533
        %v4549 = vadd.f32 %v4510, %v4533
        %v4550 = vadd.f32 %v4511, %v4533
        %v4551 = vadd.f32 %v4512, %v4533
        %v4552 = vadd.f32 %v4513, %v4533
        %v4553 = vadd.f32 %v4514, %v4533
        %v4554 = vadd.f32 %v4515, %v4533
        %v4555 = vadd.f32 %v4516, %v4533
        %v4556 = vadd.f32 %v4517, %v4533
        %v4557 = vadd.f32 %v4518, %v4533
        %v4558 = vadd.f32 %v4519, %v4533
        %v4559 = vadd.f32 %v4520, %v4533
        %v4560 = vadd.f32 %v4521, %v4533
        %v4561 = vadd.f32 %v4522, %v4533
        %v4562 = vadd.f32 %v4523, %v4533
        %v4563 = vadd.f32 %v4524, %v4533
        %v4564 = vadd.f32 %v4525, %v4533
        %v4565 = vadd.f32 %v4526, %v4533
        %v4566 = vadd.f32 %v4527, %v4533
        %v4615 = vrot.slane %v330, 2
        %v4616 = vrot.slane %v331, 2
        %v4617 = vsel %vm2198, %v4615, %v4616
        %v4618 = vrot.slane %v332, 2
        %v4619 = vsel %vm2198, %v4616, %v4618
        %v4620 = vrot.slane %v333, 2
        %v4621 = vrot.slane %v334, 2
        %v4622 = vsel %vm2198, %v4620, %v4621
        %v4623 = vrot.slane %v335, 2
        %v4624 = vsel %vm2198, %v4621, %v4623
        %v4625 = vrot.slane %v336, 2
        %v4626 = vrot.slane %v337, 2
        %v4627 = vsel %vm2198, %v4625, %v4626
        %v4628 = vrot.slane %v338, 2
        %v4629 = vsel %vm2198, %v4626, %v4628
        %v4630 = vrot.slane %v339, 2
        %v4631 = vrot.slane %v340, 2
        %v4632 = vsel %vm2198, %v4630, %v4631
        %v4633 = vrot.slane %v341, 2
        %v4634 = vsel %vm2198, %v4631, %v4633
        %v4635 = vrot.slane %v342, 2
        %v4636 = vrot.slane %v343, 2
        %v4637 = vsel %vm2198, %v4635, %v4636
        %v4638 = vrot.slane %v344, 2
        %v4639 = vsel %vm2198, %v4636, %v4638
        %v4640 = vrot.slane %v345, 2
        %v4641 = vrot.slane %v346, 2
        %v4642 = vsel %vm2198, %v4640, %v4641
        %v4643 = vrot.slane %v347, 2
        %v4644 = vsel %vm2198, %v4641, %v4643
        %v4645 = vrot.slane %v348, 2
        %v4646 = vrot.slane %v349, 2
        %v4647 = vsel %vm2198, %v4645, %v4646
        %v4648 = vrot.slane %v350, 2
        %v4649 = vsel %vm2198, %v4646, %v4648
        %v4650 = vrot.slane %v351, 2
        %v4651 = vrot.slane %v352, 2
        %v4652 = vsel %vm2198, %v4650, %v4651
        %v4653 = vrot.slane %v353, 2
        %v4654 = vsel %vm2198, %v4651, %v4653
        %v4655 = vrot.slane %v354, 2
        %v4656 = vrot.slane %v355, 2
        %v4657 = vsel %vm2198, %v4655, %v4656
        %v4658 = vrot.slane %v356, 2
        %v4659 = vsel %vm2198, %v4656, %v4658
        %v4660 = vrot.slane %v357, 2
        %v4661 = vrot.slane %v358, 2
        %v4662 = vsel %vm2198, %v4660, %v4661
        %v4663 = vrot.slane %v359, 2
        %v4664 = vsel %vm2198, %v4661, %v4663
        %v4665 = vrot.slane %v360, 2
        %v4666 = vrot.slane %v361, 2
        %v4667 = vsel %vm2198, %v4665, %v4666
        %v4668 = vrot.slane %v362, 2
        %v4669 = vsel %vm2198, %v4666, %v4668
        %v4670 = vrot.slane %v363, 2
        %v4671 = vrot.slane %v364, 2
        %v4672 = vsel %vm2198, %v4670, %v4671
        %v4673 = vrot.slane %v365, 2
        %v4674 = vsel %vm2198, %v4671, %v4673
        %v4675 = vrot.slane %v366, 2
        %v4676 = vrot.slane %v367, 2
        %v4677 = vsel %vm2198, %v4675, %v4676
        %v4678 = vrot.slane %v368, 2
        %v4679 = vsel %vm2198, %v4676, %v4678
        %v4680 = vrot.slane %v369, 2
        %v4681 = vrot.slane %v370, 2
        %v4682 = vsel %vm2198, %v4680, %v4681
        %v4683 = vrot.slane %v371, 2
        %v4684 = vsel %vm2198, %v4681, %v4683
        %v4685 = vrot.slane %v372, 2
        %v4686 = vrot.slane %v373, 2
        %v4687 = vsel %vm2198, %v4685, %v4686
        %v4688 = vrot.slane %v374, 2
        %v4689 = vsel %vm2198, %v4686, %v4688
        %v4690 = vrot.slane %v375, 2
        %v4691 = vrot.slane %v376, 2
        %v4692 = vsel %vm2198, %v4690, %v4691
        %v4693 = vrot.slane %v377, 2
        %v4694 = vsel %vm2198, %v4691, %v4693
        %v4727 = vadd.f32 %v4535, %v4617
        %v4728 = vadd.f32 %v4536, %v4619
        %v4729 = vadd.f32 %v4537, %v4622
        %v4730 = vadd.f32 %v4538, %v4624
        %v4731 = vadd.f32 %v4539, %v4627
        %v4732 = vadd.f32 %v4540, %v4629
        %v4733 = vadd.f32 %v4541, %v4632
        %v4734 = vadd.f32 %v4542, %v4634
        %v4735 = vadd.f32 %v4543, %v4637
        %v4736 = vadd.f32 %v4544, %v4639
        %v4737 = vadd.f32 %v4545, %v4642
        %v4738 = vadd.f32 %v4546, %v4644
        %v4739 = vadd.f32 %v4547, %v4647
        %v4740 = vadd.f32 %v4548, %v4649
        %v4741 = vadd.f32 %v4549, %v4652
        %v4742 = vadd.f32 %v4550, %v4654
        %v4743 = vadd.f32 %v4551, %v4657
        %v4744 = vadd.f32 %v4552, %v4659
        %v4745 = vadd.f32 %v4553, %v4662
        %v4746 = vadd.f32 %v4554, %v4664
        %v4747 = vadd.f32 %v4555, %v4667
        %v4748 = vadd.f32 %v4556, %v4669
        %v4749 = vadd.f32 %v4557, %v4672
        %v4750 = vadd.f32 %v4558, %v4674
        %v4751 = vadd.f32 %v4559, %v4677
        %v4752 = vadd.f32 %v4560, %v4679
        %v4753 = vadd.f32 %v4561, %v4682
        %v4754 = vadd.f32 %v4562, %v4684
        %v4755 = vadd.f32 %v4563, %v4687
        %v4756 = vadd.f32 %v4564, %v4689
        %v4757 = vadd.f32 %v4565, %v4692
        %v4758 = vadd.f32 %v4566, %v4694
        %v4759 = vmax.f32 %v4727, 0.0
        %v4760 = vmax.f32 %v4728, 0.0
        %v4761 = vmax.f32 %v4729, 0.0
        %v4762 = vmax.f32 %v4730, 0.0
        %v4763 = vmax.f32 %v4731, 0.0
        %v4764 = vmax.f32 %v4732, 0.0
        %v4765 = vmax.f32 %v4733, 0.0
        %v4766 = vmax.f32 %v4734, 0.0
        %v4767 = vmax.f32 %v4735, 0.0
        %v4768 = vmax.f32 %v4736, 0.0
        %v4769 = vmax.f32 %v4737, 0.0
        %v4770 = vmax.f32 %v4738, 0.0
        %v4771 = vmax.f32 %v4739, 0.0
        %v4772 = vmax.f32 %v4740, 0.0
        %v4773 = vmax.f32 %v4741, 0.0
        %v4774 = vmax.f32 %v4742, 0.0
        %v4775 = vmax.f32 %v4743, 0.0
        %v4776 = vmax.f32 %v4744, 0.0
        %v4777 = vmax.f32 %v4745, 0.0
        %v4778 = vmax.f32 %v4746, 0.0
        %v4779 = vmax.f32 %v4747, 0.0
        %v4780 = vmax.f32 %v4748, 0.0
        %v4781 = vmax.f32 %v4749, 0.0
        %v4782 = vmax.f32 %v4750, 0.0
        %v4783 = vmax.f32 %v4751, 0.0
        %v4784 = vmax.f32 %v4752, 0.0
        %v4785 = vmax.f32 %v4753, 0.0
        %v4786 = vmax.f32 %v4754, 0.0
        %v4787 = vmax.f32 %v4755, 0.0
        %v4788 = vmax.f32 %v4756, 0.0
        %v4789 = vmax.f32 %v4757, 0.0
        %v4790 = vmax.f32 %v4758, 0.0
        %4791 = vst [vmem:[%s325] sm:$0xff] %v4759
        %4792 = vst [vmem:[%s325 + $0x8] sm:$0xff] %v4760
        %4793 = vst [vmem:[%s325 + $0x10] sm:$0xff] %v4761
        %4794 = vst [vmem:[%s325 + $0x18] sm:$0xff] %v4762
        %4795 = vst [vmem:[%s325 + $0x20] sm:$0xff] %v4763
        %4796 = vst [vmem:[%s325 + $0x28] sm:$0xff] %v4764
        %4797 = vst [vmem:[%s325 + $0x30] sm:$0xff] %v4765
        %4798 = vst [vmem:[%s325 + $0x38] sm:$0xff] %v4766
        %4799 = vst [vmem:[%s325 + $0x40] sm:$0xff] %v4767
        %4800 = vst [vmem:[%s325 + $0x48] sm:$0xff] %v4768
        %4801 = vst [vmem:[%s325 + $0x50] sm:$0xff] %v4769
        %4802 = vst [vmem:[%s325 + $0x58] sm:$0xff] %v4770
        %4803 = vst [vmem:[%s325 + $0x60] sm:$0xff] %v4771
        %4804 = vst [vmem:[%s325 + $0x68] sm:$0xff] %v4772
        %4805 = vst [vmem:[%s325 + $0x70] sm:$0xff] %v4773
        %4806 = vst [vmem:[%s325 + $0x78] sm:$0xff] %v4774
        %4807 = vst [vmem:[%s325 + $0x80] sm:$0xff] %v4775
        %4808 = vst [vmem:[%s325 + $0x88] sm:$0xff] %v4776
        %4809 = vst [vmem:[%s325 + $0x90] sm:$0xff] %v4777
        %4810 = vst [vmem:[%s325 + $0x98] sm:$0xff] %v4778
        %4811 = vst [vmem:[%s325 + $0xa0] sm:$0xff] %v4779
        %4812 = vst [vmem:[%s325 + $0xa8] sm:$0xff] %v4780
        %4813 = vst [vmem:[%s325 + $0xb0] sm:$0xff] %v4781
        %4814 = vst [vmem:[%s325 + $0xb8] sm:$0xff] %v4782
        %4815 = vst [vmem:[%s325 + $0xc0] sm:$0xff] %v4783
        %4816 = vst [vmem:[%s325 + $0xc8] sm:$0xff] %v4784
        %4817 = vst [vmem:[%s325 + $0xd0] sm:$0xff] %v4785
        %4818 = vst [vmem:[%s325 + $0xd8] sm:$0xff] %v4786
        %4819 = vst [vmem:[%s325 + $0xe0] sm:$0xff] %v4787
        %4820 = vst [vmem:[%s325 + $0xe8] sm:$0xff] %v4788
        %4821 = vst [vmem:[%s325 + $0xf0] sm:$0xff] %v4789
        %4822 = vst [vmem:[%s325 + $0xf8] sm:$0xff] %v4790
        %s4823 = sand.u32 %s185, 1
        %s4824 = scalar_lea.sflag [#allocation4], %s4823
        %s4825 = sand.u32 %s185, 1
        %s4826 = smul.addr %s4825, 256
        %s4827 = scalar_lea.vmem [#allocation8], %s4826
        // Predicated region
        $region61: #{tpu_custom_call.1} parent=47 // pred_check
          %p4828 = pneg %p195
        $region62: #{tpu_custom_call.1} parent=47 // pred_check_branch
          %4830 = sbr.rel (%p4828) target = $region64
        $region63: #{tpu_custom_call.1} parent=47 // pred_region
          %s4832 = ssub.s32 4096, 4096
          %4833 = vsyncadd %s4824, %s4832
          %s4834 = smul.addr %s25, 32
          %s4835 = smul.addr %s4834, 128
          %s4836 = scalar_lea.hbm %s7, %s4835
          %s4837 = sshll.u32 %s4827, 4
          %s4838 = int_to_ptr.vmem [resolvable:$true] %s4837
          %4843 = dma.vmem_to_hbm [thread:$0]  %s4838, 4096, %s4836, %s4824, 128, 128, 8
        $region64: #{tpu_custom_call.1} parent=47 // pred_fallthru
          _
      $region48: #{tpu_custom_call.1} parent=5 // pred_fallthru
        _
      %p4844 = scmp.le.s32.totalorder 2, %s20
      // Predicated region
      $region65: #{tpu_custom_call.1} parent=5 // pred_check
        %p4845 = pneg %p4844
      $region66: #{tpu_custom_call.1} parent=5 // pred_check_branch
        %4847 = sbr.rel (%p4845) target = $region68
      $region67: #{tpu_custom_call.1} parent=5 // pred_region
        %s4848 = ssub.s32 %s20, 2
        // Predicated region
        $region69: #{tpu_custom_call.1} parent=67 // pred_check
          %p4849 = pneg %p201
        $region70: #{tpu_custom_call.1} parent=67 // pred_check_branch
          %4851 = sbr.rel (%p4849) target = $region72
        $region71: #{tpu_custom_call.1} parent=67 // pred_region
          %s4852 = sand.u32 %s186, 1
          %s4853 = scalar_lea.sflag [#allocation4], %s4852
          %s4854 = sand.u32 %s186, 1
          %s4855 = smul.addr %s4854, 256
          %s4856 = scalar_lea.vmem [#allocation8], %s4855
          %4857 = dma.done %s4853, 4096
        $region72: #{tpu_custom_call.1} parent=67 // pred_fallthru
          _
      $region68: #{tpu_custom_call.1} parent=5 // pred_fallthru
        _
    $region6: #{tpu_custom_call.1} parent=1 // loop_footer
      %s24 = sadd.s32 1, %s20
    $region7: #{tpu_custom_call.1} parent=1 // loop_footer_branch
      %19 = sbr.rel target = $region3
    $region8: #{tpu_custom_call.1} parent=1 // loop_exit
      _
    %4858 = vsyncpa [#allocation3], 1
    %s4859 = scalar_lea.sflag [#allocation3], 1
    %4860 = vsyncpa %s4859, 1
    %4861 = vsyncpa [#allocation6], 1
    %4862 = vsyncpa [#allocation4], 1
    %s4863 = scalar_lea.sflag [#allocation4], 1
    %4864 = vsyncpa %s4863, 1

</llo_original>
